<compile_context>
chip_gen: v7x
topology: tpu7x:2x2x1
jax: 0.10.0
libtpu: 0.0.40
codegen_flags: <defaults>
</compile_context>

<pallas_src>
import jax
import jax.numpy as jnp
from jax import lax
from jax.experimental import pallas as pl
from jax.experimental.pallas import tpu as pltpu

# ----------------------- small deterministic config --------------------------
B = 2            # batch (example)
S = 12           # max subword sequence length
L = 8            # max word sequence length
D = 32           # transformer embedder output dim
NUM_REAL = 7     # "real" labels (excluding PAD / START / STOP)
PAD_IDX = 0
START_IDX = NUM_REAL + 1     # 8
END_IDX = NUM_REAL + 2       # 9
K = NUM_REAL + 3             # label_size = 10
V = 50           # vocab size for the synthetic embedder

_INT_COLS = S + 2 * L + 2    # ids | orig | labels | seq_len | valid
_PACK_ROWS = D + 1 + 2 * K   # w | bias | trans | trans^T


def _mm_last(x3, w2):
    """(B, L, A) @ (A, C) -> (B, L, C) via one 2-D MXU dot (layout-preserving reshape)."""
    b, l, a = x3.shape
    y = jnp.dot(x3.reshape(b * l, a), w2, preferred_element_type=jnp.float32)
    return y.reshape(b, l, w2.shape[1])


# ------------------------------ fused kernel ---------------------------------
def fused_crf_kernel(int_ref,    # VMEM (Bp, S+2L+2) i32  ids|orig|labels|seqlen|valid
                     emb_ref,    # VMEM (V, D)       f32  embedding table
                     pack_ref,   # VMEM (D+1+2K, K)  f32  w|bias|trans|trans^T
                     out_ref):   # VMEM (1, 1)       f32  loss = unlabeled - labeled
    b_ = int_ref.shape[0]

    # ---- unpack integer slab (single DMA) ------------------------------------
    ints = int_ref[...]
    ids = ints[:, 0:S]                                     # (B, S) i32
    orig = ints[:, S:S + L]                                # (B, L) i32
    labels = ints[:, S + L:S + 2 * L]                      # (B, L) i32
    seq_col = ints[:, S + 2 * L:S + 2 * L + 1]             # (B, 1) i32
    valid = ints[:, S + 2 * L + 1:S + 2 * L + 2].astype(jnp.float32)   # (B, 1)

    # ---- unpack parameter slab (single DMA); start/end rows derived ----------
    pk = pack_ref[...]
    w = pk[0:D, :]                                         # (D, K)
    bias = pk[D:D + 1, :]                                  # (1, K)
    trans = pk[D + 1:D + 1 + K, :]                         # (K, K)
    trans_t = pk[D + 1 + K:D + 1 + 2 * K, :]               # (K, K) = trans^T
    start_row = pk[D + 1 + START_IDX:D + 2 + START_IDX, :]       # (1, K) trans[START, :]
    end_row = pk[D + 1 + K + END_IDX:D + 2 + K + END_IDX, :]     # (1, K) trans[:, END]

    # ---- embedder + LinearEncoder, fused --------------------------------------
    # TODO(synk): the pretrained HuggingFace transformer embedder has no clean
    # Pallas equivalent; it is replaced by a deterministic embedding lookup.
    proj = jnp.dot(emb_ref[...], w, preferred_element_type=jnp.float32)     # (V, K)

    # word-level subword-id gather: ids_at_word[b, l] = ids[b, orig[b, l]]
    iota_s = lax.broadcasted_iota(jnp.int32, (b_, L, S), 2)
    sel = orig[:, :, None] == iota_s                                        # (B, L, S)
    ids_f = ids.astype(jnp.float32)
    ids_word = jnp.sum(jnp.where(sel, ids_f[:, None, :], 0.0), axis=2)      # (B, L)

    # single one-hot matmul over the vocab: emissions
    iota_v = lax.broadcasted_iota(jnp.int32, (b_, L, V), 2).astype(jnp.float32)
    oh_word = (ids_word[:, :, None] == iota_v).astype(jnp.float32)          # (B, L, V)
    emis = _mm_last(oh_word, proj) + bias[None]                             # (B, L, K)

    # gold-label one-hot
    iota_k = lax.broadcasted_iota(jnp.int32, (b_, L, K), 2)
    onehot = (labels[:, :, None] == iota_k).astype(jnp.float32)             # (B, L, K)

    # ---- forward recurrence (partition), label axis stays on lanes ------------
    alpha = start_row + emis[:, 0, :]                                       # (B, K)
    for t in range(1, L):                      # statically unrolled (L small)
        step_valid = t < seq_col                                            # (B, 1)
        # alpha_t[j] = logsumexp_i(alpha[i] + trans[i, j]) + emis[t, j]
        scores = alpha[:, None, :] + trans_t[None, :, :]                    # (B, Kj, Ki)
        m = jnp.max(scores, axis=-1, keepdims=True)                         # (B, Kj, 1)
        lse = m + jnp.log(jnp.sum(jnp.exp(scores - m), axis=-1, keepdims=True))
        new_alpha = lse[:, :, 0] + emis[:, t, :]                            # (B, K)
        alpha = jnp.where(step_valid, new_alpha, alpha)    # freeze past seq_len-1

    last_alpha = alpha + end_row                                            # (B, K)
    m2 = jnp.max(last_alpha, axis=1, keepdims=True)                         # (B, 1)
    z = m2 + jnp.log(jnp.sum(jnp.exp(last_alpha - m2), axis=1, keepdims=True))

    # ---- gold (labeled) score, fully out of the recurrence ---------------------
    iota_l = lax.broadcasted_iota(jnp.int32, (b_, L), 1)
    mask_f = (iota_l < seq_col).astype(jnp.float32)                         # (B, L)
    sel_last = (iota_l == (seq_col - 1)).astype(jnp.float32)                # (B, L)

    emit_at_tag = jnp.sum(emis * onehot, axis=2)                            # (B, L)
    rows = _mm_last(onehot, trans)                                          # (B, L, K)
    middle_trans = jnp.sum(rows[:, :L - 1, :] * onehot[:, 1:, :], axis=2)   # (B, L-1)
    middle = jnp.sum(mask_f[:, 1:] * (middle_trans + emit_at_tag[:, 1:]),
                     axis=1, keepdims=True)                                 # (B, 1)

    begin = jnp.sum(onehot[:, 0, :] * (start_row + emis[:, 0, :]),
                    axis=1, keepdims=True)                                  # (B, 1)
    end_at_tag = jnp.sum(onehot * end_row[None], axis=2)                    # (B, L)
    end = jnp.sum(end_at_tag * sel_last, axis=1, keepdims=True)             # (B, 1)

    labeled = begin + middle + end                                          # (B, 1)
    loss_rows = (z - labeled) * valid                                       # (B, 1)
    out_ref[...] = jnp.sum(loss_rows, axis=0, keepdims=True)                # (1, 1)


# ------------------------------ parameters -----------------------------------
def init_params(key):
    k_emb, k_w, k_b, k_t = jax.random.split(key, 4)
    emb_table = jax.random.normal(k_emb, (V, D), jnp.float32) * 0.02
    w = jax.random.normal(k_w, (D, K), jnp.float32) / jnp.sqrt(D)
    bias = jax.random.normal(k_b, (1, K), jnp.float32) * 0.01
    trans = jax.random.normal(k_t, (K, K), jnp.float32)
    # same constraints as LinearCRF.__init__ (no IOBES constraint)
    trans = trans.at[:, START_IDX].set(-10000.0)
    trans = trans.at[END_IDX, :].set(-10000.0)
    trans = trans.at[:, PAD_IDX].set(-10000.0)
    trans = trans.at[PAD_IDX, :].set(-10000.0)
    return dict(emb_table=emb_table, w=w, bias=bias, transition=trans)


# ------------------------------- wrapper --------------------------------------
_VMEM = pl.BlockSpec(memory_space=pltpu.MemorySpace.VMEM)


@jax.jit
def transformers_crf_forward(params, subword_input_ids, word_seq_lens,
                             orig_to_tok_index, attention_mask, labels):
    del attention_mask   # only consumed by the real transformer embedder
    b = subword_input_ids.shape[0]
    b_pad = ((b + 7) // 8) * 8            # sublane-dense batch
    pad = b_pad - b

    def padb(x, fill):
        return jnp.pad(x, ((0, pad), (0, 0)), constant_values=fill)

    ids = padb(subword_input_ids.astype(jnp.int32), 0)
    orig = padb(orig_to_tok_index.astype(jnp.int32), 0)
    labs = padb(labels.astype(jnp.int32), 1)
    seql = padb(word_seq_lens.astype(jnp.int32).reshape(b, 1), 1)
    valid = padb(jnp.ones((b, 1), jnp.int32), 0)
    int_pack = jnp.concatenate([ids, orig, labs, seql, valid], axis=1)       # (Bp, S+2L+2)

    trans = params['transition'].astype(jnp.float32)
    param_pack = jnp.concatenate(
        [params['w'].astype(jnp.float32), params['bias'].astype(jnp.float32),
         trans, trans.T], axis=0)                                            # (D+1+2K, K)

    loss = pl.pallas_call(
        fused_crf_kernel,
        out_shape=jax.ShapeDtypeStruct((1, 1), jnp.float32),
        in_specs=[_VMEM, _VMEM, _VMEM],
        out_specs=_VMEM,
    )(int_pack, params['emb_table'].astype(jnp.float32), param_pack)
    return loss[0, 0]


# --------------------------- pure-JAX reference --------------------------------
def reference_forward(params, subword_input_ids, word_seq_lens,
                      orig_to_tok_index, attention_mask, labels):
    del attention_mask
    subword_rep = jnp.take(params['emb_table'], subword_input_ids, axis=0)
    idx = jnp.broadcast_to(orig_to_tok_index[:, :, None].astype(jnp.int32), (B, L, D))
    word_rep = jnp.take_along_axis(subword_rep, idx, axis=1)
    scores = word_rep @ params['w'] + params['bias']
    trans = params['transition']
    seq = word_seq_lens.reshape(B, 1)

    alpha = trans[START_IDX][None, :] + scores[:, 0, :]
    last_alpha = alpha
    for t in range(1, L):
        sc = alpha[:, :, None] + trans[None] + scores[:, t, :][:, None, :]
        alpha = jax.scipy.special.logsumexp(sc, axis=1)
        last_alpha = jnp.where((seq - 1) == t, alpha, last_alpha)
    last_alpha = last_alpha + trans[:, END_IDX][None, :]
    unlabeled = jnp.sum(jax.scipy.special.logsumexp(last_alpha, axis=1))

    oh = jax.nn.one_hot(labels, K, dtype=jnp.float32)
    emit_at_tag = jnp.sum(scores * oh, axis=2)
    rows = jnp.einsum('blk,kj->blj', oh, trans)
    middle_trans = jnp.sum(rows[:, :-1] * oh[:, 1:], axis=2)
    iota_l = jnp.arange(L)[None, :]
    mask = (iota_l < seq).astype(jnp.float32)
    middle = jnp.sum(mask[:, 1:] * (middle_trans + emit_at_tag[:, 1:]))
    begin = jnp.sum(oh[:, 0, :] * (trans[START_IDX][None, :] + scores[:, 0, :]))
    sel_last = (iota_l == (seq - 1)).astype(jnp.float32)
    oh_last = jnp.sum(oh * sel_last[:, :, None], axis=1)
    end = jnp.sum(oh_last * trans[:, END_IDX][None, :])
    labeled = begin + end + middle
    return unlabeled - labeled


# --------------------------------- main ----------------------------------------
if __name__ == "__main__":
    key = jax.random.PRNGKey(0)
    pkey, k_ids, k_orig, k_lab = jax.random.split(key, 4)
    params = init_params(pkey)

    subword_input_ids = jax.random.randint(k_ids, (B, S), 0, V, dtype=jnp.int32)
    orig_to_tok_index = jax.random.randint(k_orig, (B, L), 0, S, dtype=jnp.int32)
    attention_mask = jnp.ones((B, S), dtype=jnp.int32)
    word_seq_lens = jnp.array([L, 5], dtype=jnp.int32)
    labels = jax.random.randint(k_lab, (B, L), 1, NUM_REAL + 1, dtype=jnp.int32)

    loss = transformers_crf_forward(params, subword_input_ids, word_seq_lens,
                                    orig_to_tok_index, attention_mask, labels)
    loss = jax.block_until_ready(loss)

    ref = reference_forward(params, subword_input_ids, word_seq_lens,
                            orig_to_tok_index, attention_mask, labels)
    assert jnp.isfinite(loss), loss
    assert jnp.allclose(loss, ref, rtol=1e-3, atol=1e-2), (float(loss), float(ref))
    print("KERNEL_OK")
</pallas_src>

<mosaic_0001>
module attributes {stable_mosaic.version = 11 : i64} {
  func.func @fused_crf_kernel(%arg0: memref<8x30xi32, #tpu.memory_space<vmem>>, %arg1: memref<50x32xf32, #tpu.memory_space<vmem>>, %arg2: memref<53x10xf32, #tpu.memory_space<vmem>>, %arg3: memref<1x1xf32, #tpu.memory_space<vmem>>) attributes {dimension_semantics = [], scalar_prefetch = 0 : i64, scratch_operands = 0 : i64, tpu.core_type = #tpu.core_type<tc>} {
    %c0 = arith.constant 0 : index
    %c0_0 = arith.constant 0 : index
    %0 = vector.load %arg0[%c0, %c0_0] : memref<8x30xi32, #tpu.memory_space<vmem>>, vector<8x30xi32>
    %1 = vector.extract_strided_slice %0 {offsets = [0, 0], sizes = [8, 12], strides = [1, 1]} : vector<8x30xi32> to vector<8x12xi32>
    %2 = vector.extract_strided_slice %0 {offsets = [0, 12], sizes = [8, 8], strides = [1, 1]} : vector<8x30xi32> to vector<8x8xi32>
    %3 = vector.extract_strided_slice %0 {offsets = [0, 20], sizes = [8, 8], strides = [1, 1]} : vector<8x30xi32> to vector<8x8xi32>
    %4 = vector.extract_strided_slice %0 {offsets = [0, 28], sizes = [8, 1], strides = [1, 1]} : vector<8x30xi32> to vector<8x1xi32>
    %5 = vector.extract_strided_slice %0 {offsets = [0, 29], sizes = [8, 1], strides = [1, 1]} : vector<8x30xi32> to vector<8x1xi32>
    %6 = arith.sitofp %5 : vector<8x1xi32> to vector<8x1xf32>
    %c0_1 = arith.constant 0 : index
    %c0_2 = arith.constant 0 : index
    %7 = vector.load %arg2[%c0_1, %c0_2] : memref<53x10xf32, #tpu.memory_space<vmem>>, vector<53x10xf32>
    %8 = vector.extract_strided_slice %7 {offsets = [0, 0], sizes = [32, 10], strides = [1, 1]} : vector<53x10xf32> to vector<32x10xf32>
    %9 = vector.extract_strided_slice %7 {offsets = [32, 0], sizes = [1, 10], strides = [1, 1]} : vector<53x10xf32> to vector<1x10xf32>
    %10 = vector.extract_strided_slice %7 {offsets = [33, 0], sizes = [10, 10], strides = [1, 1]} : vector<53x10xf32> to vector<10x10xf32>
    %11 = vector.extract_strided_slice %7 {offsets = [43, 0], sizes = [10, 10], strides = [1, 1]} : vector<53x10xf32> to vector<10x10xf32>
    %12 = vector.extract_strided_slice %7 {offsets = [41, 0], sizes = [1, 10], strides = [1, 1]} : vector<53x10xf32> to vector<1x10xf32>
    %13 = vector.extract_strided_slice %7 {offsets = [52, 0], sizes = [1, 10], strides = [1, 1]} : vector<53x10xf32> to vector<1x10xf32>
    %c0_3 = arith.constant 0 : index
    %c0_4 = arith.constant 0 : index
    %14 = vector.load %arg1[%c0_3, %c0_4] : memref<50x32xf32, #tpu.memory_space<vmem>>, vector<50x32xf32>
    %cst = arith.constant dense<0.000000e+00> : vector<50x10xf32>
    %15 = tpu.matmul %14, %8, %cst {dimension_numbers = #tpu.dot_dimension_numbers<[1], [0], [0], [1], [0, 0, 1, 1], [], []>} : vector<50x32xf32>, vector<32x10xf32>, vector<50x10xf32> -> vector<50x10xf32>
    %16 = tpu.iota {dimensions = array<i32: 2>} : vector<8x8x12xi32>
    %17 = vector.shape_cast %2 : vector<8x8xi32> to vector<8x8x1xi32>
    %18 = vector.broadcast %17 : vector<8x8x1xi32> to vector<8x8x12xi32>
    %19 = arith.cmpi eq, %18, %16 : vector<8x8x12xi32>
    %20 = arith.sitofp %1 : vector<8x12xi32> to vector<8x12xf32>
    %21 = vector.shape_cast %20 : vector<8x12xf32> to vector<8x1x12xf32>
    %cst_5 = arith.constant 0.000000e+00 : f32
    %22 = vector.shape_cast %21 : vector<8x1x12xf32> to vector<8x1x12xf32>
    %23 = vector.broadcast %22 : vector<8x1x12xf32> to vector<8x8x12xf32>
    %24 = vector.broadcast %cst_5 : f32 to vector<8x8x12xf32>
    %25 = arith.select %19, %23, %24 : vector<8x8x12xi1>, vector<8x8x12xf32>
    %cst_6 = arith.constant dense<0.000000e+00> : vector<8x8xf32>
    %26 = vector.multi_reduction <add>, %25, %cst_6 [2] : vector<8x8x12xf32> to vector<8x8xf32>
    %27 = tpu.iota {dimensions = array<i32: 2>} : vector<8x8x50xi32>
    %28 = arith.sitofp %27 : vector<8x8x50xi32> to vector<8x8x50xf32>
    %29 = vector.shape_cast %26 : vector<8x8xf32> to vector<8x8x1xf32>
    %30 = vector.broadcast %29 : vector<8x8x1xf32> to vector<8x8x50xf32>
    %31 = arith.cmpf oeq, %30, %28 : vector<8x8x50xf32>
    %32 = arith.extui %31 : vector<8x8x50xi1> to vector<8x8x50xi32>
    %33 = arith.sitofp %32 : vector<8x8x50xi32> to vector<8x8x50xf32>
    %34 = vector.shape_cast %33 : vector<8x8x50xf32> to vector<64x50xf32>
    %cst_7 = arith.constant dense<0.000000e+00> : vector<64x10xf32>
    %35 = tpu.matmul %34, %15, %cst_7 {dimension_numbers = #tpu.dot_dimension_numbers<[1], [0], [0], [1], [0, 0, 1, 1], [], []>} : vector<64x50xf32>, vector<50x10xf32>, vector<64x10xf32> -> vector<64x10xf32>
    %36 = vector.shape_cast %35 : vector<64x10xf32> to vector<8x8x10xf32>
    %37 = vector.shape_cast %9 : vector<1x10xf32> to vector<1x1x10xf32>
    %38 = vector.broadcast %37 : vector<1x1x10xf32> to vector<8x8x10xf32>
    %39 = arith.addf %36, %38 : vector<8x8x10xf32>
    %40 = tpu.iota {dimensions = array<i32: 2>} : vector<8x8x10xi32>
    %41 = vector.shape_cast %3 : vector<8x8xi32> to vector<8x8x1xi32>
    %42 = vector.broadcast %41 : vector<8x8x1xi32> to vector<8x8x10xi32>
    %43 = arith.cmpi eq, %42, %40 : vector<8x8x10xi32>
    %44 = arith.extui %43 : vector<8x8x10xi1> to vector<8x8x10xi32>
    %45 = arith.sitofp %44 : vector<8x8x10xi32> to vector<8x8x10xf32>
    %46 = vector.extract_strided_slice %39 {offsets = [0, 0, 0], sizes = [8, 1, 10], strides = [1, 1, 1]} : vector<8x8x10xf32> to vector<8x1x10xf32>
    %47 = vector.shape_cast %46 : vector<8x1x10xf32> to vector<8x10xf32>
    %48 = vector.broadcast %12 : vector<1x10xf32> to vector<8x10xf32>
    %49 = arith.addf %48, %47 : vector<8x10xf32>
    %c1_i32 = arith.constant 1 : i32
    %50 = vector.broadcast %c1_i32 : i32 to vector<8x1xi32>
    %51 = arith.cmpi sgt, %4, %50 : vector<8x1xi32>
    %52 = vector.shape_cast %49 : vector<8x10xf32> to vector<8x1x10xf32>
    %53 = vector.shape_cast %11 : vector<10x10xf32> to vector<1x10x10xf32>
    %54 = vector.broadcast %52 : vector<8x1x10xf32> to vector<8x10x10xf32>
    %55 = vector.broadcast %53 : vector<1x10x10xf32> to vector<8x10x10xf32>
    %56 = arith.addf %54, %55 : vector<8x10x10xf32>
    %cst_8 = arith.constant dense<0xFF800000> : vector<8x10xf32>
    %57 = vector.multi_reduction <maximumf>, %56, %cst_8 [2] : vector<8x10x10xf32> to vector<8x10xf32>
    %58 = vector.shape_cast %57 : vector<8x10xf32> to vector<8x10x1xf32>
    %59 = vector.broadcast %58 : vector<8x10x1xf32> to vector<8x10x10xf32>
    %60 = arith.subf %56, %59 : vector<8x10x10xf32>
    %61 = math.exp %60 : vector<8x10x10xf32>
    %cst_9 = arith.constant dense<0.000000e+00> : vector<8x10xf32>
    %62 = vector.multi_reduction <add>, %61, %cst_9 [2] : vector<8x10x10xf32> to vector<8x10xf32>
    %63 = vector.shape_cast %62 : vector<8x10xf32> to vector<8x10x1xf32>
    %64 = math.log %63 : vector<8x10x1xf32>
    %65 = arith.addf %58, %64 : vector<8x10x1xf32>
    %66 = vector.shape_cast %65 : vector<8x10x1xf32> to vector<8x10xf32>
    %67 = vector.extract_strided_slice %39 {offsets = [0, 1, 0], sizes = [8, 1, 10], strides = [1, 1, 1]} : vector<8x8x10xf32> to vector<8x1x10xf32>
    %68 = vector.shape_cast %67 : vector<8x1x10xf32> to vector<8x10xf32>
    %69 = arith.addf %66, %68 : vector<8x10xf32>
    %70 = vector.shape_cast %51 : vector<8x1xi1> to vector<8x1xi1>
    %71 = vector.broadcast %70 : vector<8x1xi1> to vector<8x10xi1>
    %72 = arith.select %71, %69, %49 : vector<8x10xi1>, vector<8x10xf32>
    %c2_i32 = arith.constant 2 : i32
    %73 = vector.broadcast %c2_i32 : i32 to vector<8x1xi32>
    %74 = arith.cmpi sgt, %4, %73 : vector<8x1xi32>
    %75 = vector.shape_cast %72 : vector<8x10xf32> to vector<8x1x10xf32>
    %76 = vector.shape_cast %11 : vector<10x10xf32> to vector<1x10x10xf32>
    %77 = vector.broadcast %75 : vector<8x1x10xf32> to vector<8x10x10xf32>
    %78 = vector.broadcast %76 : vector<1x10x10xf32> to vector<8x10x10xf32>
    %79 = arith.addf %77, %78 : vector<8x10x10xf32>
    %cst_10 = arith.constant dense<0xFF800000> : vector<8x10xf32>
    %80 = vector.multi_reduction <maximumf>, %79, %cst_10 [2] : vector<8x10x10xf32> to vector<8x10xf32>
    %81 = vector.shape_cast %80 : vector<8x10xf32> to vector<8x10x1xf32>
    %82 = vector.broadcast %81 : vector<8x10x1xf32> to vector<8x10x10xf32>
    %83 = arith.subf %79, %82 : vector<8x10x10xf32>
    %84 = math.exp %83 : vector<8x10x10xf32>
    %cst_11 = arith.constant dense<0.000000e+00> : vector<8x10xf32>
    %85 = vector.multi_reduction <add>, %84, %cst_11 [2] : vector<8x10x10xf32> to vector<8x10xf32>
    %86 = vector.shape_cast %85 : vector<8x10xf32> to vector<8x10x1xf32>
    %87 = math.log %86 : vector<8x10x1xf32>
    %88 = arith.addf %81, %87 : vector<8x10x1xf32>
    %89 = vector.shape_cast %88 : vector<8x10x1xf32> to vector<8x10xf32>
    %90 = vector.extract_strided_slice %39 {offsets = [0, 2, 0], sizes = [8, 1, 10], strides = [1, 1, 1]} : vector<8x8x10xf32> to vector<8x1x10xf32>
    %91 = vector.shape_cast %90 : vector<8x1x10xf32> to vector<8x10xf32>
    %92 = arith.addf %89, %91 : vector<8x10xf32>
    %93 = vector.shape_cast %74 : vector<8x1xi1> to vector<8x1xi1>
    %94 = vector.broadcast %93 : vector<8x1xi1> to vector<8x10xi1>
    %95 = arith.select %94, %92, %72 : vector<8x10xi1>, vector<8x10xf32>
    %c3_i32 = arith.constant 3 : i32
    %96 = vector.broadcast %c3_i32 : i32 to vector<8x1xi32>
    %97 = arith.cmpi sgt, %4, %96 : vector<8x1xi32>
    %98 = vector.shape_cast %95 : vector<8x10xf32> to vector<8x1x10xf32>
    %99 = vector.shape_cast %11 : vector<10x10xf32> to vector<1x10x10xf32>
    %100 = vector.broadcast %98 : vector<8x1x10xf32> to vector<8x10x10xf32>
    %101 = vector.broadcast %99 : vector<1x10x10xf32> to vector<8x10x10xf32>
    %102 = arith.addf %100, %101 : vector<8x10x10xf32>
    %cst_12 = arith.constant dense<0xFF800000> : vector<8x10xf32>
    %103 = vector.multi_reduction <maximumf>, %102, %cst_12 [2] : vector<8x10x10xf32> to vector<8x10xf32>
    %104 = vector.shape_cast %103 : vector<8x10xf32> to vector<8x10x1xf32>
    %105 = vector.broadcast %104 : vector<8x10x1xf32> to vector<8x10x10xf32>
    %106 = arith.subf %102, %105 : vector<8x10x10xf32>
    %107 = math.exp %106 : vector<8x10x10xf32>
    %cst_13 = arith.constant dense<0.000000e+00> : vector<8x10xf32>
    %108 = vector.multi_reduction <add>, %107, %cst_13 [2] : vector<8x10x10xf32> to vector<8x10xf32>
    %109 = vector.shape_cast %108 : vector<8x10xf32> to vector<8x10x1xf32>
    %110 = math.log %109 : vector<8x10x1xf32>
    %111 = arith.addf %104, %110 : vector<8x10x1xf32>
    %112 = vector.shape_cast %111 : vector<8x10x1xf32> to vector<8x10xf32>
    %113 = vector.extract_strided_slice %39 {offsets = [0, 3, 0], sizes = [8, 1, 10], strides = [1, 1, 1]} : vector<8x8x10xf32> to vector<8x1x10xf32>
    %114 = vector.shape_cast %113 : vector<8x1x10xf32> to vector<8x10xf32>
    %115 = arith.addf %112, %114 : vector<8x10xf32>
    %116 = vector.shape_cast %97 : vector<8x1xi1> to vector<8x1xi1>
    %117 = vector.broadcast %116 : vector<8x1xi1> to vector<8x10xi1>
    %118 = arith.select %117, %115, %95 : vector<8x10xi1>, vector<8x10xf32>
    %c4_i32 = arith.constant 4 : i32
    %119 = vector.broadcast %c4_i32 : i32 to vector<8x1xi32>
    %120 = arith.cmpi sgt, %4, %119 : vector<8x1xi32>
    %121 = vector.shape_cast %118 : vector<8x10xf32> to vector<8x1x10xf32>
    %122 = vector.shape_cast %11 : vector<10x10xf32> to vector<1x10x10xf32>
    %123 = vector.broadcast %121 : vector<8x1x10xf32> to vector<8x10x10xf32>
    %124 = vector.broadcast %122 : vector<1x10x10xf32> to vector<8x10x10xf32>
    %125 = arith.addf %123, %124 : vector<8x10x10xf32>
    %cst_14 = arith.constant dense<0xFF800000> : vector<8x10xf32>
    %126 = vector.multi_reduction <maximumf>, %125, %cst_14 [2] : vector<8x10x10xf32> to vector<8x10xf32>
    %127 = vector.shape_cast %126 : vector<8x10xf32> to vector<8x10x1xf32>
    %128 = vector.broadcast %127 : vector<8x10x1xf32> to vector<8x10x10xf32>
    %129 = arith.subf %125, %128 : vector<8x10x10xf32>
    %130 = math.exp %129 : vector<8x10x10xf32>
    %cst_15 = arith.constant dense<0.000000e+00> : vector<8x10xf32>
    %131 = vector.multi_reduction <add>, %130, %cst_15 [2] : vector<8x10x10xf32> to vector<8x10xf32>
    %132 = vector.shape_cast %131 : vector<8x10xf32> to vector<8x10x1xf32>
    %133 = math.log %132 : vector<8x10x1xf32>
    %134 = arith.addf %127, %133 : vector<8x10x1xf32>
    %135 = vector.shape_cast %134 : vector<8x10x1xf32> to vector<8x10xf32>
    %136 = vector.extract_strided_slice %39 {offsets = [0, 4, 0], sizes = [8, 1, 10], strides = [1, 1, 1]} : vector<8x8x10xf32> to vector<8x1x10xf32>
    %137 = vector.shape_cast %136 : vector<8x1x10xf32> to vector<8x10xf32>
    %138 = arith.addf %135, %137 : vector<8x10xf32>
    %139 = vector.shape_cast %120 : vector<8x1xi1> to vector<8x1xi1>
    %140 = vector.broadcast %139 : vector<8x1xi1> to vector<8x10xi1>
    %141 = arith.select %140, %138, %118 : vector<8x10xi1>, vector<8x10xf32>
    %c5_i32 = arith.constant 5 : i32
    %142 = vector.broadcast %c5_i32 : i32 to vector<8x1xi32>
    %143 = arith.cmpi sgt, %4, %142 : vector<8x1xi32>
    %144 = vector.shape_cast %141 : vector<8x10xf32> to vector<8x1x10xf32>
    %145 = vector.shape_cast %11 : vector<10x10xf32> to vector<1x10x10xf32>
    %146 = vector.broadcast %144 : vector<8x1x10xf32> to vector<8x10x10xf32>
    %147 = vector.broadcast %145 : vector<1x10x10xf32> to vector<8x10x10xf32>
    %148 = arith.addf %146, %147 : vector<8x10x10xf32>
    %cst_16 = arith.constant dense<0xFF800000> : vector<8x10xf32>
    %149 = vector.multi_reduction <maximumf>, %148, %cst_16 [2] : vector<8x10x10xf32> to vector<8x10xf32>
    %150 = vector.shape_cast %149 : vector<8x10xf32> to vector<8x10x1xf32>
    %151 = vector.broadcast %150 : vector<8x10x1xf32> to vector<8x10x10xf32>
    %152 = arith.subf %148, %151 : vector<8x10x10xf32>
    %153 = math.exp %152 : vector<8x10x10xf32>
    %cst_17 = arith.constant dense<0.000000e+00> : vector<8x10xf32>
    %154 = vector.multi_reduction <add>, %153, %cst_17 [2] : vector<8x10x10xf32> to vector<8x10xf32>
    %155 = vector.shape_cast %154 : vector<8x10xf32> to vector<8x10x1xf32>
    %156 = math.log %155 : vector<8x10x1xf32>
    %157 = arith.addf %150, %156 : vector<8x10x1xf32>
    %158 = vector.shape_cast %157 : vector<8x10x1xf32> to vector<8x10xf32>
    %159 = vector.extract_strided_slice %39 {offsets = [0, 5, 0], sizes = [8, 1, 10], strides = [1, 1, 1]} : vector<8x8x10xf32> to vector<8x1x10xf32>
    %160 = vector.shape_cast %159 : vector<8x1x10xf32> to vector<8x10xf32>
    %161 = arith.addf %158, %160 : vector<8x10xf32>
    %162 = vector.shape_cast %143 : vector<8x1xi1> to vector<8x1xi1>
    %163 = vector.broadcast %162 : vector<8x1xi1> to vector<8x10xi1>
    %164 = arith.select %163, %161, %141 : vector<8x10xi1>, vector<8x10xf32>
    %c6_i32 = arith.constant 6 : i32
    %165 = vector.broadcast %c6_i32 : i32 to vector<8x1xi32>
    %166 = arith.cmpi sgt, %4, %165 : vector<8x1xi32>
    %167 = vector.shape_cast %164 : vector<8x10xf32> to vector<8x1x10xf32>
    %168 = vector.shape_cast %11 : vector<10x10xf32> to vector<1x10x10xf32>
    %169 = vector.broadcast %167 : vector<8x1x10xf32> to vector<8x10x10xf32>
    %170 = vector.broadcast %168 : vector<1x10x10xf32> to vector<8x10x10xf32>
    %171 = arith.addf %169, %170 : vector<8x10x10xf32>
    %cst_18 = arith.constant dense<0xFF800000> : vector<8x10xf32>
    %172 = vector.multi_reduction <maximumf>, %171, %cst_18 [2] : vector<8x10x10xf32> to vector<8x10xf32>
    %173 = vector.shape_cast %172 : vector<8x10xf32> to vector<8x10x1xf32>
    %174 = vector.broadcast %173 : vector<8x10x1xf32> to vector<8x10x10xf32>
    %175 = arith.subf %171, %174 : vector<8x10x10xf32>
    %176 = math.exp %175 : vector<8x10x10xf32>
    %cst_19 = arith.constant dense<0.000000e+00> : vector<8x10xf32>
    %177 = vector.multi_reduction <add>, %176, %cst_19 [2] : vector<8x10x10xf32> to vector<8x10xf32>
    %178 = vector.shape_cast %177 : vector<8x10xf32> to vector<8x10x1xf32>
    %179 = math.log %178 : vector<8x10x1xf32>
    %180 = arith.addf %173, %179 : vector<8x10x1xf32>
    %181 = vector.shape_cast %180 : vector<8x10x1xf32> to vector<8x10xf32>
    %182 = vector.extract_strided_slice %39 {offsets = [0, 6, 0], sizes = [8, 1, 10], strides = [1, 1, 1]} : vector<8x8x10xf32> to vector<8x1x10xf32>
    %183 = vector.shape_cast %182 : vector<8x1x10xf32> to vector<8x10xf32>
    %184 = arith.addf %181, %183 : vector<8x10xf32>
    %185 = vector.shape_cast %166 : vector<8x1xi1> to vector<8x1xi1>
    %186 = vector.broadcast %185 : vector<8x1xi1> to vector<8x10xi1>
    %187 = arith.select %186, %184, %164 : vector<8x10xi1>, vector<8x10xf32>
    %c7_i32 = arith.constant 7 : i32
    %188 = vector.broadcast %c7_i32 : i32 to vector<8x1xi32>
    %189 = arith.cmpi sgt, %4, %188 : vector<8x1xi32>
    %190 = vector.shape_cast %187 : vector<8x10xf32> to vector<8x1x10xf32>
    %191 = vector.shape_cast %11 : vector<10x10xf32> to vector<1x10x10xf32>
    %192 = vector.broadcast %190 : vector<8x1x10xf32> to vector<8x10x10xf32>
    %193 = vector.broadcast %191 : vector<1x10x10xf32> to vector<8x10x10xf32>
    %194 = arith.addf %192, %193 : vector<8x10x10xf32>
    %cst_20 = arith.constant dense<0xFF800000> : vector<8x10xf32>
    %195 = vector.multi_reduction <maximumf>, %194, %cst_20 [2] : vector<8x10x10xf32> to vector<8x10xf32>
    %196 = vector.shape_cast %195 : vector<8x10xf32> to vector<8x10x1xf32>
    %197 = vector.broadcast %196 : vector<8x10x1xf32> to vector<8x10x10xf32>
    %198 = arith.subf %194, %197 : vector<8x10x10xf32>
    %199 = math.exp %198 : vector<8x10x10xf32>
    %cst_21 = arith.constant dense<0.000000e+00> : vector<8x10xf32>
    %200 = vector.multi_reduction <add>, %199, %cst_21 [2] : vector<8x10x10xf32> to vector<8x10xf32>
    %201 = vector.shape_cast %200 : vector<8x10xf32> to vector<8x10x1xf32>
    %202 = math.log %201 : vector<8x10x1xf32>
    %203 = arith.addf %196, %202 : vector<8x10x1xf32>
    %204 = vector.shape_cast %203 : vector<8x10x1xf32> to vector<8x10xf32>
    %205 = vector.extract_strided_slice %39 {offsets = [0, 7, 0], sizes = [8, 1, 10], strides = [1, 1, 1]} : vector<8x8x10xf32> to vector<8x1x10xf32>
    %206 = vector.shape_cast %205 : vector<8x1x10xf32> to vector<8x10xf32>
    %207 = arith.addf %204, %206 : vector<8x10xf32>
    %208 = vector.shape_cast %189 : vector<8x1xi1> to vector<8x1xi1>
    %209 = vector.broadcast %208 : vector<8x1xi1> to vector<8x10xi1>
    %210 = arith.select %209, %207, %187 : vector<8x10xi1>, vector<8x10xf32>
    %211 = vector.broadcast %13 : vector<1x10xf32> to vector<8x10xf32>
    %212 = arith.addf %210, %211 : vector<8x10xf32>
    %cst_22 = arith.constant dense<0xFF800000> : vector<8xf32>
    %213 = vector.multi_reduction <maximumf>, %212, %cst_22 [1] : vector<8x10xf32> to vector<8xf32>
    %214 = vector.shape_cast %213 : vector<8xf32> to vector<8x1xf32>
    %215 = vector.broadcast %214 : vector<8x1xf32> to vector<8x10xf32>
    %216 = arith.subf %212, %215 : vector<8x10xf32>
    %217 = math.exp %216 : vector<8x10xf32>
    %cst_23 = arith.constant dense<0.000000e+00> : vector<8xf32>
    %218 = vector.multi_reduction <add>, %217, %cst_23 [1] : vector<8x10xf32> to vector<8xf32>
    %219 = vector.shape_cast %218 : vector<8xf32> to vector<8x1xf32>
    %220 = math.log %219 : vector<8x1xf32>
    %221 = arith.addf %214, %220 : vector<8x1xf32>
    %222 = tpu.iota {dimensions = array<i32: 1>} : vector<8x8xi32>
    %223 = vector.broadcast %4 : vector<8x1xi32> to vector<8x8xi32>
    %224 = arith.cmpi slt, %222, %223 : vector<8x8xi32>
    %225 = arith.extui %224 : vector<8x8xi1> to vector<8x8xi32>
    %226 = arith.sitofp %225 : vector<8x8xi32> to vector<8x8xf32>
    %c1_i32_24 = arith.constant 1 : i32
    %227 = vector.broadcast %c1_i32_24 : i32 to vector<8x1xi32>
    %228 = arith.subi %4, %227 : vector<8x1xi32>
    %229 = vector.broadcast %228 : vector<8x1xi32> to vector<8x8xi32>
    %230 = arith.cmpi eq, %222, %229 : vector<8x8xi32>
    %231 = arith.extui %230 : vector<8x8xi1> to vector<8x8xi32>
    %232 = arith.sitofp %231 : vector<8x8xi32> to vector<8x8xf32>
    %233 = arith.mulf %39, %45 : vector<8x8x10xf32>
    %cst_25 = arith.constant dense<0.000000e+00> : vector<8x8xf32>
    %234 = vector.multi_reduction <add>, %233, %cst_25 [2] : vector<8x8x10xf32> to vector<8x8xf32>
    %235 = vector.shape_cast %45 : vector<8x8x10xf32> to vector<64x10xf32>
    %cst_26 = arith.constant dense<0.000000e+00> : vector<64x10xf32>
    %236 = tpu.matmul %235, %10, %cst_26 {dimension_numbers = #tpu.dot_dimension_numbers<[1], [0], [0], [1], [0, 0, 1, 1], [], []>} : vector<64x10xf32>, vector<10x10xf32>, vector<64x10xf32> -> vector<64x10xf32>
    %237 = vector.shape_cast %236 : vector<64x10xf32> to vector<8x8x10xf32>
    %238 = vector.extract_strided_slice %237 {offsets = [0, 0, 0], sizes = [8, 7, 10], strides = [1, 1, 1]} : vector<8x8x10xf32> to vector<8x7x10xf32>
    %239 = vector.extract_strided_slice %45 {offsets = [0, 1, 0], sizes = [8, 7, 10], strides = [1, 1, 1]} : vector<8x8x10xf32> to vector<8x7x10xf32>
    %240 = arith.mulf %238, %239 : vector<8x7x10xf32>
    %cst_27 = arith.constant dense<0.000000e+00> : vector<8x7xf32>
    %241 = vector.multi_reduction <add>, %240, %cst_27 [2] : vector<8x7x10xf32> to vector<8x7xf32>
    %242 = vector.extract_strided_slice %226 {offsets = [0, 1], sizes = [8, 7], strides = [1, 1]} : vector<8x8xf32> to vector<8x7xf32>
    %243 = vector.extract_strided_slice %234 {offsets = [0, 1], sizes = [8, 7], strides = [1, 1]} : vector<8x8xf32> to vector<8x7xf32>
    %244 = arith.addf %241, %243 : vector<8x7xf32>
    %245 = arith.mulf %242, %244 : vector<8x7xf32>
    %cst_28 = arith.constant dense<0.000000e+00> : vector<8xf32>
    %246 = vector.multi_reduction <add>, %245, %cst_28 [1] : vector<8x7xf32> to vector<8xf32>
    %247 = vector.shape_cast %246 : vector<8xf32> to vector<8x1xf32>
    %248 = vector.extract_strided_slice %45 {offsets = [0, 0, 0], sizes = [8, 1, 10], strides = [1, 1, 1]} : vector<8x8x10xf32> to vector<8x1x10xf32>
    %249 = vector.shape_cast %248 : vector<8x1x10xf32> to vector<8x10xf32>
    %250 = vector.extract_strided_slice %39 {offsets = [0, 0, 0], sizes = [8, 1, 10], strides = [1, 1, 1]} : vector<8x8x10xf32> to vector<8x1x10xf32>
    %251 = vector.shape_cast %250 : vector<8x1x10xf32> to vector<8x10xf32>
    %252 = vector.broadcast %12 : vector<1x10xf32> to vector<8x10xf32>
    %253 = arith.addf %252, %251 : vector<8x10xf32>
    %254 = arith.mulf %249, %253 : vector<8x10xf32>
    %cst_29 = arith.constant dense<0.000000e+00> : vector<8xf32>
    %255 = vector.multi_reduction <add>, %254, %cst_29 [1] : vector<8x10xf32> to vector<8xf32>
    %256 = vector.shape_cast %255 : vector<8xf32> to vector<8x1xf32>
    %257 = vector.shape_cast %13 : vector<1x10xf32> to vector<1x1x10xf32>
    %258 = vector.broadcast %257 : vector<1x1x10xf32> to vector<8x8x10xf32>
    %259 = arith.mulf %45, %258 : vector<8x8x10xf32>
    %cst_30 = arith.constant dense<0.000000e+00> : vector<8x8xf32>
    %260 = vector.multi_reduction <add>, %259, %cst_30 [2] : vector<8x8x10xf32> to vector<8x8xf32>
    %261 = arith.mulf %260, %232 : vector<8x8xf32>
    %cst_31 = arith.constant dense<0.000000e+00> : vector<8xf32>
    %262 = vector.multi_reduction <add>, %261, %cst_31 [1] : vector<8x8xf32> to vector<8xf32>
    %263 = vector.shape_cast %262 : vector<8xf32> to vector<8x1xf32>
    %264 = arith.addf %256, %247 : vector<8x1xf32>
    %265 = arith.addf %264, %263 : vector<8x1xf32>
    %266 = arith.subf %221, %265 : vector<8x1xf32>
    %267 = arith.mulf %266, %6 : vector<8x1xf32>
    %cst_32 = arith.constant dense<0.000000e+00> : vector<1xf32>
    %268 = vector.multi_reduction <add>, %267, %cst_32 [0] : vector<8x1xf32> to vector<1xf32>
    %269 = vector.shape_cast %268 : vector<1xf32> to vector<1x1xf32>
    %c0_33 = arith.constant 0 : index
    %c0_34 = arith.constant 0 : index
    %270 = vector.load %arg3[%c0_33, %c0_34] : memref<1x1xf32, #tpu.memory_space<vmem>>, vector<1x1xf32>
    tpu.vector_store %arg3[%c0_33, %c0_34], %269 {strides = array<i32>} : memref<1x1xf32, #tpu.memory_space<vmem>>, vector<1x1xf32>,
    return
  }
}

</mosaic_0001>

<llo_original>
// kernel: transformers_crf_forward.1
$region0: #{transformers_crf_forward.1}
  #allocation0 [shape = 'u32[]', space=smem, size = 0x4, offset = 0x4, fixed_abs, tag = 'smem constant byte address 0x4 - core index']
  #allocation1 [shape = 'u32[144,128]{1,0:T(1,128)}', space=vmem, size = 0x12000, scoped, tag = 'internal scratch']
  %s0 = inlined_call_operand.vmem [shape: s32[8,30], index: 0, kind: input, shape index: {}]
  %s1 = inlined_call_operand.vmem [shape: f32[50,32], index: 1, kind: input, shape index: {}]
  %s2 = inlined_call_operand.vmem [shape: f32[53,10], index: 2, kind: input, shape index: {}]
  %s3 = inlined_call_operand.hbm [shape: f32[1,1], index: 3, kind: output, shape index: {}]
  %s4 = sld [smem:[#allocation0]]
  $region22: #{transformers_crf_forward.1} parent=0
    _
  %s6 = ssub.s32 1, %s4
  %s7 = scalar_select 0, %s6, %s4
  $region1: #{transformers_crf_forward.1} parent=0
    #allocation2 [shape = 'u8[512]{0}', space=vmem, size = 0x400, scoped, tag = 'output window, operand 0, single buffered']
    #allocation3 [shape = 's32[1]{0}', space=sflag, size = 0x4, scoped, tag = 'scoped memory for transformers_crf_forward.1']
    %8 = vsyncpa [#allocation3], 0
    // Predicated region
    $region2: #{transformers_crf_forward.1} parent=1 // pred_check
      _
    $region3: #{transformers_crf_forward.1} parent=1 // pred_check_branch
      %10 = sbr.rel (0) target = $region5
    $region4: #{transformers_crf_forward.1} parent=1 // pred_region
      _
    $region5: #{transformers_crf_forward.1} parent=1 // pred_fallthru
      _
    // Predicated region
    $region6: #{transformers_crf_forward.1} parent=1 // pred_check
      _
    $region7: #{transformers_crf_forward.1} parent=1 // pred_check_branch
      %12 = sbr.rel (0) target = $region9
    $region8: #{transformers_crf_forward.1} parent=1 // pred_region
      _
    $region9: #{transformers_crf_forward.1} parent=1 // pred_fallthru
      _
    // Predicated region
    $region10: #{transformers_crf_forward.1} parent=1 // pred_check
      _
    $region11: #{transformers_crf_forward.1} parent=1 // pred_check_branch
      %14 = sbr.rel (0) target = $region13
    $region12: #{transformers_crf_forward.1} parent=1 // pred_region
      _
    $region13: #{transformers_crf_forward.1} parent=1 // pred_fallthru
      _
    %v15 = vld [vmem:[%s0] sm:$0xff]
    %v16 = vcvt.s32.f32 %v15
    %v17 = vld [vmem:[%s2] sm:$0xff]
    %v18 = vld [vmem:[%s2 + $0x8] sm:$0xff]
    %v19 = vld [vmem:[%s2 + $0x10] sm:$0xff]
    %v20 = vld [vmem:[%s2 + $0x18] sm:$0xff]
    %v21 = vld [vmem:[%s2 + $0x20] sm:$0xff]
    %v22 = vld [vmem:[%s2 + $0x28] sm:$0xff]
    %v23 = vld [vmem:[%s2 + $0x30] sm:$0x1f]
    %v24 = vld [vmem:[%s1] sm:$0xff]
    %v25 = vld [vmem:[%s1 + $0x8] sm:$0xff]
    %v26 = vld [vmem:[%s1 + $0x10] sm:$0xff]
    %v27 = vld [vmem:[%s1 + $0x18] sm:$0xff]
    %v28 = vld [vmem:[%s1 + $0x20] sm:$0xff]
    %v29 = vld [vmem:[%s1 + $0x28] sm:$0xff]
    %v30 = vld [vmem:[%s1 + $0x30] sm:$0x3]
    %vm31 = vcmask 261120
    %v33 = vsel %vm31, %v24, 0
    %v36 = vsel %vm31, %v25, 0
    %v39 = vsel %vm31, %v26, 0
    %v42 = vsel %vm31, %v27, 0
    %v45 = vsel %vm31, %v28, 0
    %v48 = vsel %vm31, %v29, 0
    %v51 = vsel %vm31, %v30, 0
    %53 = vmatprep.subr.mxu0 0.0
    %54 = vmatpush1.msra.mxu0 %v17
    %55 = vmatprep.subr.mxu0 0.0
    %56 = vmatpush1.msra.mxu0 %v18
    %57 = vmatprep.subr.mxu0 0.0
    %58 = vmatpush1.msra.mxu0 %v19
    %59 = vmatprep.subr.mxu0 0.0
    %60 = vmatpush1.msra.mxu0 %v20
    %61 = vmatprep.subr.mxu0 0.0
    %62 = vmatpush1.msra.mxu0 0.0
    %63 = vmatprep.subr.mxu0 0.0
    %64 = vmatpush1.msra.mxu0 0.0
    %65 = vmatprep.subr.mxu0 0.0
    %66 = vmatpush1.msra.mxu0 0.0
    %67 = vmatprep.subr.mxu0 0.0
    %68 = vmatpush1.msra.mxu0 0.0
    %69 = vmatprep.subr.mxu0 0.0
    %70 = vmatpush1.msra.mxu0 0.0
    %71 = vmatprep.subr.mxu0 0.0
    %72 = vmatpush1.msra.mxu0 0.0
    %73 = vmatprep.subr.mxu0 0.0
    %74 = vmatpush1.msra.mxu0 0.0
    %75 = vmatprep.subr.mxu0 0.0
    %76 = vmatpush1.msra.mxu0 0.0
    %77 = vmatprep.subr.mxu0 0.0
    %78 = vmatpush1.msra.mxu0 0.0
    %79 = vmatprep.subr.mxu0 0.0
    %80 = vmatpush1.msra.mxu0 0.0
    %81 = vmatprep.subr.mxu0 0.0
    %82 = vmatpush1.msra.mxu0 0.0
    %83 = vmatprep.subr.mxu0 0.0
    %84 = vmatpush1.msra.mxu0 0.0
    %85 = vmatprep.subr.mxu0 0.0
    %86 = vmatpush1.msra.mxu0 0.0
    %87 = vmatprep.subr.mxu0 0.0
    %88 = vmatpush1.msra.mxu0 0.0
    %89 = vmatprep.subr.mxu0 0.0
    %90 = vmatpush1.msra.mxu0 0.0
    %91 = vmatprep.subr.mxu0 0.0
    %92 = vmatpush1.msra.mxu0 0.0
    %93 = vmatprep.subr.mxu0 0.0
    %94 = vmatpush1.msra.mxu0 0.0
    %95 = vmatprep.subr.mxu0 0.0
    %96 = vmatpush1.msra.mxu0 0.0
    %97 = vmatprep.subr.mxu0 0.0
    %98 = vmatpush1.msra.mxu0 0.0
    %99 = vmatprep.subr.mxu0 0.0
    %100 = vmatpush1.msra.mxu0 0.0
    %101 = vmatprep.subr.mxu0 0.0
    %102 = vmatpush1.msra.mxu0 0.0
    %103 = vmatprep.subr.mxu0 0.0
    %104 = vmatpush1.msra.mxu0 0.0
    %105 = vmatprep.subr.mxu0 0.0
    %106 = vmatpush1.msra.mxu0 0.0
    %107 = vmatprep.subr.mxu0 0.0
    %108 = vmatpush1.msra.mxu0 0.0
    %109 = vmatprep.subr.mxu0 0.0
    %110 = vmatpush1.msra.mxu0 0.0
    %111 = vmatprep.subr.mxu0 0.0
    %112 = vmatpush1.msra.mxu0 0.0
    %113 = vmatprep.subr.mxu0 0.0
    %114 = vmatpush1.msra.mxu0 0.0
    %115 = vmatprep.subr.mxu0 0.0
    %116 = vmatpush1.msra.mxu0 0.0
    %117 = vmatprep.mubr.f32.mxu0 0.0
    %118 = vmatmul.mubr.f32.gmra.mrb[0].mxu0 %v33
    %v119 = vpop.f32.mrb[0].mxu0
    %v120 = vadd.f32 0.0, %v119
    %v121 = vpop.f32.mrb[0].mxu0
    %122 = vmatprep.mubr.f32.mxu0 0.0
    %123 = vmatmul.mubr.f32.gmra.mrb[0].mxu0 %v36
    %v124 = vpop.f32.mrb[0].mxu0
    %v125 = vadd.f32 0.0, %v124
    %v126 = vpop.f32.mrb[0].mxu0
    %127 = vmatprep.mubr.f32.mxu0 0.0
    %128 = vmatmul.mubr.f32.gmra.mrb[0].mxu0 %v39
    %v129 = vpop.f32.mrb[0].mxu0
    %v130 = vadd.f32 0.0, %v129
    %v131 = vpop.f32.mrb[0].mxu0
    %132 = vmatprep.mubr.f32.mxu0 0.0
    %133 = vmatmul.mubr.f32.gmra.mrb[0].mxu0 %v42
    %v134 = vpop.f32.mrb[0].mxu0
    %v135 = vadd.f32 0.0, %v134
    %v136 = vpop.f32.mrb[0].mxu0
    %137 = vmatprep.mubr.f32.mxu0 0.0
    %138 = vmatmul.mubr.f32.gmra.mrb[0].mxu0 %v45
    %v139 = vpop.f32.mrb[0].mxu0
    %v140 = vadd.f32 0.0, %v139
    %v141 = vpop.f32.mrb[0].mxu0
    %142 = vmatprep.mubr.f32.mxu0 0.0
    %143 = vmatmul.mubr.f32.gmra.mrb[0].mxu0 %v48
    %v144 = vpop.f32.mrb[0].mxu0
    %v145 = vadd.f32 0.0, %v144
    %v146 = vpop.f32.mrb[0].mxu0
    %147 = vmatprep.mubr.f32.mxu0 0.0
    %148 = vmatmul.mubr.f32.gmra.mrb[0].mxu0 %v51
    %v149 = vpop.f32.mrb[0].mxu0
    %v150 = vadd.f32 0.0, %v149
    %v151 = vpop.f32.mrb[0].mxu0
    %152 = vdwg.mxu0
    %v153 = vlaneseq
    %v154 = vand.u32 %v153, 127
    %v155 = vlaneseq
    %v156 = vshrl.u32 %v155, 7
    %v157 = vsub.s32 0, %v156
    %v158 = vrot.slane %v15, %v157
    %s160 = sor.u32 256, 12
    %161 = vbcast.lane.b32.xlu0 %v158, %s160
    %v162 = vpop.permute.xlu0 %161
    %v163 = vlaneseq
    %v164 = vshrl.u32 %v163, 7
    %v165 = vsub.s32 1, %v164
    %v166 = vrot.slane %v15, %v165
    %s168 = sor.u32 256, 12
    %169 = vbcast.lane.b32.xlu0 %v166, %s168
    %v170 = vpop.permute.xlu0 %169
    %v171 = vlaneseq
    %v172 = vshrl.u32 %v171, 7
    %v173 = vsub.s32 2, %v172
    %v174 = vrot.slane %v15, %v173
    %s176 = sor.u32 256, 12
    %177 = vbcast.lane.b32.xlu0 %v174, %s176
    %v178 = vpop.permute.xlu0 %177
    %v179 = vlaneseq
    %v180 = vshrl.u32 %v179, 7
    %v181 = vsub.s32 3, %v180
    %v182 = vrot.slane %v15, %v181
    %s184 = sor.u32 256, 12
    %185 = vbcast.lane.b32.xlu0 %v182, %s184
    %v186 = vpop.permute.xlu0 %185
    %v187 = vlaneseq
    %v188 = vshrl.u32 %v187, 7
    %v189 = vsub.s32 4, %v188
    %v190 = vrot.slane %v15, %v189
    %s192 = sor.u32 256, 12
    %193 = vbcast.lane.b32.xlu0 %v190, %s192
    %v194 = vpop.permute.xlu0 %193
    %v195 = vlaneseq
    %v196 = vshrl.u32 %v195, 7
    %v197 = vsub.s32 5, %v196
    %v198 = vrot.slane %v15, %v197
    %s200 = sor.u32 256, 12
    %201 = vbcast.lane.b32.xlu0 %v198, %s200
    %v202 = vpop.permute.xlu0 %201
    %v203 = vlaneseq
    %v204 = vshrl.u32 %v203, 7
    %v205 = vsub.s32 6, %v204
    %v206 = vrot.slane %v15, %v205
    %s208 = sor.u32 256, 12
    %209 = vbcast.lane.b32.xlu0 %v206, %s208
    %v210 = vpop.permute.xlu0 %209
    %v211 = vlaneseq
    %v212 = vshrl.u32 %v211, 7
    %v213 = vsub.s32 7, %v212
    %v214 = vrot.slane %v15, %v213
    %s216 = sor.u32 256, 12
    %217 = vbcast.lane.b32.xlu0 %v214, %s216
    %v218 = vpop.permute.xlu0 %217
    %vm219 = vcmp.eq.s32.totalorder %v162, %v154
    %vm220 = vcmp.eq.s32.totalorder %v170, %v154
    %vm221 = vcmp.eq.s32.totalorder %v178, %v154
    %vm222 = vcmp.eq.s32.totalorder %v186, %v154
    %vm223 = vcmp.eq.s32.totalorder %v194, %v154
    %vm224 = vcmp.eq.s32.totalorder %v202, %v154
    %vm225 = vcmp.eq.s32.totalorder %v210, %v154
    %vm226 = vcmp.eq.s32.totalorder %v218, %v154
    %v228 = vcombine.high %v16, %v16
    %v230 = vunpack.c.l.s4 1966171168
    %v231 = vunpack.c.0.s8 %v230
    %v232 = vlaneseq
    %v233 = vshrl.u32 %v232, 7
    %v234 = vsub.s32 %v231, %v233
    %v235 = vrot.slane %v16, %v234
    %v237 = vunpack.c.l.s4 1966171168
    %v238 = vunpack.c.0.s8 %v237
    %v239 = vlaneseq
    %v240 = vshrl.u32 %v239, 7
    %v241 = vsub.s32 %v238, %v240
    %v242 = vrot.slane %v228, %v241
    %v243 = vcombine.high %v235, %v235
    %v244 = vcombine.high %v242, %v242
    %v246 = vunpack.c.l.s4 1966171168
    %v247 = vunpack.c.0.s8 %v246
    %v248 = vlaneseq
    %v249 = vshrl.u32 %v248, 7
    %v250 = vsub.s32 %v247, %v249
    %v251 = vrot.slane %v235, %v250
    %v253 = vunpack.c.l.s4 1966171168
    %v254 = vunpack.c.0.s8 %v253
    %v255 = vlaneseq
    %v256 = vshrl.u32 %v255, 7
    %v257 = vsub.s32 %v254, %v256
    %v258 = vrot.slane %v242, %v257
    %v260 = vunpack.c.l.s4 1966171168
    %v261 = vunpack.c.0.s8 %v260
    %v262 = vlaneseq
    %v263 = vshrl.u32 %v262, 7
    %v264 = vsub.s32 %v261, %v263
    %v265 = vrot.slane %v243, %v264
    %v267 = vunpack.c.l.s4 1966171168
    %v268 = vunpack.c.0.s8 %v267
    %v269 = vlaneseq
    %v270 = vshrl.u32 %v269, 7
    %v271 = vsub.s32 %v268, %v270
    %v272 = vrot.slane %v244, %v271
    %v273 = vcombine.high %v251, %v251
    %v274 = vcombine.high %v258, %v258
    %v275 = vcombine.high %v265, %v265
    %v276 = vcombine.high %v272, %v272
    %v277 = vlaneseq
    %v278 = vshrl.u32 %v277, 7
    %v279 = vsub.s32 0, %v278
    %v280 = vrot.slane %v251, %v279
    %v281 = vlaneseq
    %v282 = vshrl.u32 %v281, 7
    %v283 = vsub.s32 0, %v282
    %v284 = vrot.slane %v265, %v283
    %v285 = vlaneseq
    %v286 = vshrl.u32 %v285, 7
    %v287 = vsub.s32 0, %v286
    %v288 = vrot.slane %v273, %v287
    %v289 = vlaneseq
    %v290 = vshrl.u32 %v289, 7
    %v291 = vsub.s32 0, %v290
    %v292 = vrot.slane %v275, %v291
    %v293 = vlaneseq
    %v294 = vshrl.u32 %v293, 7
    %v295 = vsub.s32 0, %v294
    %v296 = vrot.slane %v258, %v295
    %v297 = vlaneseq
    %v298 = vshrl.u32 %v297, 7
    %v299 = vsub.s32 0, %v298
    %v300 = vrot.slane %v272, %v299
    %v301 = vlaneseq
    %v302 = vshrl.u32 %v301, 7
    %v303 = vsub.s32 0, %v302
    %v304 = vrot.slane %v274, %v303
    %v305 = vlaneseq
    %v306 = vshrl.u32 %v305, 7
    %v307 = vsub.s32 0, %v306
    %v308 = vrot.slane %v276, %v307
    %v317 = vsel %vm219, %v280, 0.0
    %v318 = vsel %vm220, %v284, 0.0
    %v319 = vsel %vm221, %v288, 0.0
    %v320 = vsel %vm222, %v292, 0.0
    %v321 = vsel %vm223, %v296, 0.0
    %v322 = vsel %vm224, %v300, 0.0
    %v323 = vsel %vm225, %v304, 0.0
    %v324 = vsel %vm226, %v308, 0.0
    %vm325 = vcmask 97280
    %v326 = vsel %vm325, %v317, 0.0
    %327 = vadd.xlane.f32.xlu0 %v326
    %v328 = vpop.xlane.xlu0 %327
    %v329 = vsel %vm325, %v318, 0.0
    %330 = vadd.xlane.f32.xlu0 %v329
    %v331 = vpop.xlane.xlu0 %330
    %v332 = vsel %vm325, %v319, 0.0
    %333 = vadd.xlane.f32.xlu0 %v332
    %v334 = vpop.xlane.xlu0 %333
    %v335 = vsel %vm325, %v320, 0.0
    %336 = vadd.xlane.f32.xlu0 %v335
    %v337 = vpop.xlane.xlu0 %336
    %v338 = vsel %vm325, %v321, 0.0
    %339 = vadd.xlane.f32.xlu0 %v338
    %v340 = vpop.xlane.xlu0 %339
    %v341 = vsel %vm325, %v322, 0.0
    %342 = vadd.xlane.f32.xlu0 %v341
    %v343 = vpop.xlane.xlu0 %342
    %v344 = vsel %vm325, %v323, 0.0
    %345 = vadd.xlane.f32.xlu0 %v344
    %v346 = vpop.xlane.xlu0 %345
    %v347 = vsel %vm325, %v324, 0.0
    %348 = vadd.xlane.f32.xlu0 %v347
    %v349 = vpop.xlane.xlu0 %348
    %v350 = vcvt.s32.f32 %v154
    %vm351 = vcmp.eq.f32.partialorder %v328, %v350
    %vm352 = vcmp.eq.f32.partialorder %v331, %v350
    %vm353 = vcmp.eq.f32.partialorder %v334, %v350
    %vm354 = vcmp.eq.f32.partialorder %v337, %v350
    %vm355 = vcmp.eq.f32.partialorder %v340, %v350
    %vm356 = vcmp.eq.f32.partialorder %v343, %v350
    %vm357 = vcmp.eq.f32.partialorder %v346, %v350
    %vm358 = vcmp.eq.f32.partialorder %v349, %v350
    %v359 = vsel %vm351, 1, 0
    %v360 = vsel %vm352, 1, 0
    %v361 = vsel %vm353, 1, 0
    %v362 = vsel %vm354, 1, 0
    %v363 = vsel %vm355, 1, 0
    %v364 = vsel %vm356, 1, 0
    %v365 = vsel %vm357, 1, 0
    %v366 = vsel %vm358, 1, 0
    %v367 = vcvt.s32.f32 %v359
    %v368 = vcvt.s32.f32 %v360
    %v369 = vcvt.s32.f32 %v361
    %v370 = vcvt.s32.f32 %v362
    %v371 = vcvt.s32.f32 %v363
    %v372 = vcvt.s32.f32 %v364
    %v373 = vcvt.s32.f32 %v365
    %v374 = vcvt.s32.f32 %v366
    %vm375 = vcmask 408576
    %v377 = vsel %vm375, %v367, 0
    %v380 = vsel %vm375, %v368, 0
    %v383 = vsel %vm375, %v369, 0
    %v386 = vsel %vm375, %v370, 0
    %v389 = vsel %vm375, %v371, 0
    %v392 = vsel %vm375, %v372, 0
    %v395 = vsel %vm375, %v373, 0
    %v398 = vsel %vm375, %v374, 0
    %vm400 = vcmask 1041408
    %v402 = vsel %vm400, %v150, 0
    %404 = vmatprep.subr.mxu0 0.0
    %405 = vmatpush1.msra.mxu0 %v120
    %406 = vmatprep.subr.mxu0 0.0
    %407 = vmatpush1.msra.mxu0 %v125
    %408 = vmatprep.subr.mxu0 0.0
    %409 = vmatpush1.msra.mxu0 %v130
    %410 = vmatprep.subr.mxu0 0.0
    %411 = vmatpush1.msra.mxu0 %v135
    %412 = vmatprep.subr.mxu0 0.0
    %413 = vmatpush1.msra.mxu0 %v140
    %414 = vmatprep.subr.mxu0 0.0
    %415 = vmatpush1.msra.mxu0 %v145
    %416 = vmatprep.subr.mxu0 0.0
    %417 = vmatpush1.msra.mxu0 %v402
    %418 = vmatprep.subr.mxu0 0.0
    %419 = vmatpush1.msra.mxu0 0.0
    %420 = vmatprep.subr.mxu0 0.0
    %421 = vmatpush1.msra.mxu0 0.0
    %422 = vmatprep.subr.mxu0 0.0
    %423 = vmatpush1.msra.mxu0 0.0
    %424 = vmatprep.subr.mxu0 0.0
    %425 = vmatpush1.msra.mxu0 0.0
    %426 = vmatprep.subr.mxu0 0.0
    %427 = vmatpush1.msra.mxu0 0.0
    %428 = vmatprep.subr.mxu0 0.0
    %429 = vmatpush1.msra.mxu0 0.0
    %430 = vmatprep.subr.mxu0 0.0
    %431 = vmatpush1.msra.mxu0 0.0
    %432 = vmatprep.subr.mxu0 0.0
    %433 = vmatpush1.msra.mxu0 0.0
    %434 = vmatprep.subr.mxu0 0.0
    %435 = vmatpush1.msra.mxu0 0.0
    %436 = vmatprep.subr.mxu0 0.0
    %437 = vmatpush1.msra.mxu0 0.0
    %438 = vmatprep.subr.mxu0 0.0
    %439 = vmatpush1.msra.mxu0 0.0
    %440 = vmatprep.subr.mxu0 0.0
    %441 = vmatpush1.msra.mxu0 0.0
    %442 = vmatprep.subr.mxu0 0.0
    %443 = vmatpush1.msra.mxu0 0.0
    %444 = vmatprep.subr.mxu0 0.0
    %445 = vmatpush1.msra.mxu0 0.0
    %446 = vmatprep.subr.mxu0 0.0
    %447 = vmatpush1.msra.mxu0 0.0
    %448 = vmatprep.subr.mxu0 0.0
    %449 = vmatpush1.msra.mxu0 0.0
    %450 = vmatprep.subr.mxu0 0.0
    %451 = vmatpush1.msra.mxu0 0.0
    %452 = vmatprep.subr.mxu0 0.0
    %453 = vmatpush1.msra.mxu0 0.0
    %454 = vmatprep.subr.mxu0 0.0
    %455 = vmatpush1.msra.mxu0 0.0
    %456 = vmatprep.subr.mxu0 0.0
    %457 = vmatpush1.msra.mxu0 0.0
    %458 = vmatprep.subr.mxu0 0.0
    %459 = vmatpush1.msra.mxu0 0.0
    %460 = vmatprep.subr.mxu0 0.0
    %461 = vmatpush1.msra.mxu0 0.0
    %462 = vmatprep.subr.mxu0 0.0
    %463 = vmatpush1.msra.mxu0 0.0
    %464 = vmatprep.subr.mxu0 0.0
    %465 = vmatpush1.msra.mxu0 0.0
    %466 = vmatprep.subr.mxu0 0.0
    %467 = vmatpush1.msra.mxu0 0.0
    %468 = vmatprep.mubr.f32.mxu0 0.0
    %469 = vmatmul.mubr.f32.gmra.mrb[0].mxu0 %v377
    %v470 = vpop.f32.mrb[0].mxu0
    %v471 = vadd.f32 0.0, %v470
    %v472 = vpop.f32.mrb[0].mxu0
    %473 = vmatprep.mubr.f32.mxu0 0.0
    %474 = vmatmul.mubr.f32.gmra.mrb[0].mxu0 %v380
    %v475 = vpop.f32.mrb[0].mxu0
    %v476 = vadd.f32 0.0, %v475
    %v477 = vpop.f32.mrb[0].mxu0
    %478 = vmatprep.mubr.f32.mxu0 0.0
    %479 = vmatmul.mubr.f32.gmra.mrb[0].mxu0 %v383
    %v480 = vpop.f32.mrb[0].mxu0
    %v481 = vadd.f32 0.0, %v480
    %v482 = vpop.f32.mrb[0].mxu0
    %483 = vmatprep.mubr.f32.mxu0 0.0
    %484 = vmatmul.mubr.f32.gmra.mrb[0].mxu0 %v386
    %v485 = vpop.f32.mrb[0].mxu0
    %v486 = vadd.f32 0.0, %v485
    %v487 = vpop.f32.mrb[0].mxu0
    %488 = vmatprep.mubr.f32.mxu0 0.0
    %489 = vmatmul.mubr.f32.gmra.mrb[0].mxu0 %v389
    %v490 = vpop.f32.mrb[0].mxu0
    %v491 = vadd.f32 0.0, %v490
    %v492 = vpop.f32.mrb[0].mxu0
    %493 = vmatprep.mubr.f32.mxu0 0.0
    %494 = vmatmul.mubr.f32.gmra.mrb[0].mxu0 %v392
    %v495 = vpop.f32.mrb[0].mxu0
    %v496 = vadd.f32 0.0, %v495
    %v497 = vpop.f32.mrb[0].mxu0
    %498 = vmatprep.mubr.f32.mxu0 0.0
    %499 = vmatmul.mubr.f32.gmra.mrb[0].mxu0 %v395
    %v500 = vpop.f32.mrb[0].mxu0
    %v501 = vadd.f32 0.0, %v500
    %v502 = vpop.f32.mrb[0].mxu0
    %503 = vmatprep.mubr.f32.mxu0 0.0
    %504 = vmatmul.mubr.f32.gmra.mrb[0].mxu0 %v398
    %v505 = vpop.f32.mrb[0].mxu0
    %v506 = vadd.f32 0.0, %v505
    %v507 = vpop.f32.mrb[0].mxu0
    %508 = vdwg.mxu0
    %v509 = vlaneseq
    %v510 = vshrl.u32 %v509, 7
    %v511 = vsub.s32 0, %v510
    %v512 = vrot.slane %v21, %v511
    %v513 = vadd.f32 %v471, %v512
    %v514 = vadd.f32 %v476, %v512
    %v515 = vadd.f32 %v481, %v512
    %v516 = vadd.f32 %v486, %v512
    %v517 = vadd.f32 %v491, %v512
    %v518 = vadd.f32 %v496, %v512
    %v519 = vadd.f32 %v501, %v512
    %v520 = vadd.f32 %v506, %v512
    %s522 = sor.u32 256, 20
    %523 = vbcast.lane.b32.xlu0 %v158, %s522
    %v524 = vpop.permute.xlu0 %523
    %s526 = sor.u32 256, 20
    %527 = vbcast.lane.b32.xlu0 %v166, %s526
    %v528 = vpop.permute.xlu0 %527
    %s530 = sor.u32 256, 20
    %531 = vbcast.lane.b32.xlu0 %v174, %s530
    %v532 = vpop.permute.xlu0 %531
    %s534 = sor.u32 256, 20
    %535 = vbcast.lane.b32.xlu0 %v182, %s534
    %v536 = vpop.permute.xlu0 %535
    %s538 = sor.u32 256, 20
    %539 = vbcast.lane.b32.xlu0 %v190, %s538
    %v540 = vpop.permute.xlu0 %539
    %s542 = sor.u32 256, 20
    %543 = vbcast.lane.b32.xlu0 %v198, %s542
    %v544 = vpop.permute.xlu0 %543
    %s546 = sor.u32 256, 20
    %547 = vbcast.lane.b32.xlu0 %v206, %s546
    %v548 = vpop.permute.xlu0 %547
    %s550 = sor.u32 256, 20
    %551 = vbcast.lane.b32.xlu0 %v214, %s550
    %v552 = vpop.permute.xlu0 %551
    %vm553 = vcmp.eq.s32.totalorder %v524, %v154
    %vm554 = vcmp.eq.s32.totalorder %v528, %v154
    %vm555 = vcmp.eq.s32.totalorder %v532, %v154
    %vm556 = vcmp.eq.s32.totalorder %v536, %v154
    %vm557 = vcmp.eq.s32.totalorder %v540, %v154
    %vm558 = vcmp.eq.s32.totalorder %v544, %v154
    %vm559 = vcmp.eq.s32.totalorder %v548, %v154
    %vm560 = vcmp.eq.s32.totalorder %v552, %v154
    %v561 = vsel %vm553, 1, 0
    %v562 = vsel %vm554, 1, 0
    %v563 = vsel %vm555, 1, 0
    %v564 = vsel %vm556, 1, 0
    %v565 = vsel %vm557, 1, 0
    %v566 = vsel %vm558, 1, 0
    %v567 = vsel %vm559, 1, 0
    %v568 = vsel %vm560, 1, 0
    %v569 = vcvt.s32.f32 %v561
    %v570 = vcvt.s32.f32 %v562
    %v571 = vcvt.s32.f32 %v563
    %v572 = vcvt.s32.f32 %v564
    %v573 = vcvt.s32.f32 %v565
    %v574 = vcvt.s32.f32 %v566
    %v575 = vcvt.s32.f32 %v567
    %v576 = vcvt.s32.f32 %v568
    %v577 = vlaneseq
    %v578 = vshrl.u32 %v577, 7
    %v579 = vsub.s32 1, %v578
    %v580 = vrot.slane %v22, %v579
    %v589 = vrot.slane %v514, 7
    %vm590 = vcmask 1041409
    %v591 = vsel %vm590, %v589, %v513
    %v592 = vrot.slane %v515, 6
    %vm593 = vcmask 1042434
    %v594 = vsel %vm593, %v592, %v591
    %v595 = vrot.slane %v516, 5
    %vm596 = vcmask 1043459
    %v597 = vsel %vm596, %v595, %v594
    %v598 = vrot.slane %v517, 4
    %vm599 = vcmask 1044484
    %v600 = vsel %vm599, %v598, %v597
    %v601 = vrot.slane %v518, 3
    %vm602 = vcmask 1045509
    %v603 = vsel %vm602, %v601, %v600
    %v604 = vrot.slane %v519, 2
    %vm605 = vcmask 1046534
    %v606 = vsel %vm605, %v604, %v603
    %v607 = vrot.slane %v520, 1
    %vm608 = vcmask 1047559
    %v609 = vsel %vm608, %v607, %v606
    %v611 = vadd.f32 %v580, %v609
    %vm612 = vcmp.gt.s32.totalorder %v15, 1
    %v614 = vcombine.high %v611, %v611
    %v616 = vunpack.c.l.s4 1966171168
    %v617 = vunpack.c.0.s8 %v616
    %v618 = vlaneseq
    %v619 = vshrl.u32 %v618, 7
    %v620 = vsub.s32 %v617, %v619
    %v621 = vrot.slane %v611, %v620
    %v623 = vunpack.c.l.s4 1966171168
    %v624 = vunpack.c.0.s8 %v623
    %v625 = vlaneseq
    %v626 = vshrl.u32 %v625, 7
    %v627 = vsub.s32 %v624, %v626
    %v628 = vrot.slane %v614, %v627
    %v629 = vcombine.high %v621, %v621
    %v630 = vcombine.high %v628, %v628
    %v632 = vunpack.c.l.s4 1966171168
    %v633 = vunpack.c.0.s8 %v632
    %v634 = vlaneseq
    %v635 = vshrl.u32 %v634, 7
    %v636 = vsub.s32 %v633, %v635
    %v637 = vrot.slane %v621, %v636
    %v639 = vunpack.c.l.s4 1966171168
    %v640 = vunpack.c.0.s8 %v639
    %v641 = vlaneseq
    %v642 = vshrl.u32 %v641, 7
    %v643 = vsub.s32 %v640, %v642
    %v644 = vrot.slane %v628, %v643
    %v646 = vunpack.c.l.s4 1966171168
    %v647 = vunpack.c.0.s8 %v646
    %v648 = vlaneseq
    %v649 = vshrl.u32 %v648, 7
    %v650 = vsub.s32 %v647, %v649
    %v651 = vrot.slane %v629, %v650
    %v653 = vunpack.c.l.s4 1966171168
    %v654 = vunpack.c.0.s8 %v653
    %v655 = vlaneseq
    %v656 = vshrl.u32 %v655, 7
    %v657 = vsub.s32 %v654, %v656
    %v658 = vrot.slane %v630, %v657
    %v659 = vcombine.high %v637, %v637
    %v660 = vcombine.high %v644, %v644
    %v661 = vcombine.high %v651, %v651
    %v662 = vcombine.high %v658, %v658
    %v663 = vlaneseq
    %v664 = vshrl.u32 %v663, 7
    %v665 = vsub.s32 0, %v664
    %v666 = vrot.slane %v637, %v665
    %v667 = vlaneseq
    %v668 = vshrl.u32 %v667, 7
    %v669 = vsub.s32 0, %v668
    %v670 = vrot.slane %v651, %v669
    %v671 = vlaneseq
    %v672 = vshrl.u32 %v671, 7
    %v673 = vsub.s32 0, %v672
    %v674 = vrot.slane %v659, %v673
    %v675 = vlaneseq
    %v676 = vshrl.u32 %v675, 7
    %v677 = vsub.s32 0, %v676
    %v678 = vrot.slane %v661, %v677
    %v679 = vlaneseq
    %v680 = vshrl.u32 %v679, 7
    %v681 = vsub.s32 0, %v680
    %v682 = vrot.slane %v644, %v681
    %v683 = vlaneseq
    %v684 = vshrl.u32 %v683, 7
    %v685 = vsub.s32 0, %v684
    %v686 = vrot.slane %v658, %v685
    %v687 = vlaneseq
    %v688 = vshrl.u32 %v687, 7
    %v689 = vsub.s32 0, %v688
    %v690 = vrot.slane %v660, %v689
    %v691 = vlaneseq
    %v692 = vshrl.u32 %v691, 7
    %v693 = vsub.s32 0, %v692
    %v694 = vrot.slane %v662, %v693
    %v703 = vadd.f32 %v666, %v22
    %v704 = vadd.f32 %v666, %v23
    %v705 = vadd.f32 %v670, %v22
    %v706 = vadd.f32 %v670, %v23
    %v707 = vadd.f32 %v674, %v22
    %v708 = vadd.f32 %v674, %v23
    %v709 = vadd.f32 %v678, %v22
    %v710 = vadd.f32 %v678, %v23
    %v711 = vadd.f32 %v682, %v22
    %v712 = vadd.f32 %v682, %v23
    %v713 = vadd.f32 %v686, %v22
    %v714 = vadd.f32 %v686, %v23
    %v715 = vadd.f32 %v690, %v22
    %v716 = vadd.f32 %v690, %v23
    %v717 = vadd.f32 %v694, %v22
    %v718 = vadd.f32 %v694, %v23
    %vm719 = vcmask 80899
    %v720 = vsel %vm719, %v703, -inf
    %721 = vmax.xlane.f32.xlu0 %v720
    %v722 = vpop.xlane.xlu0 %721
    %vm723 = vcmask 77824
    %v724 = vsel %vm723, %v704, -inf
    %725 = vmax.xlane.f32.xlu0 %v724
    %v726 = vpop.xlane.xlu0 %725
    %v727 = vsel %vm719, %v705, -inf
    %728 = vmax.xlane.f32.xlu0 %v727
    %v729 = vpop.xlane.xlu0 %728
    %v730 = vsel %vm723, %v706, -inf
    %731 = vmax.xlane.f32.xlu0 %v730
    %v732 = vpop.xlane.xlu0 %731
    %v733 = vsel %vm719, %v707, -inf
    %734 = vmax.xlane.f32.xlu0 %v733
    %v735 = vpop.xlane.xlu0 %734
    %v736 = vsel %vm723, %v708, -inf
    %737 = vmax.xlane.f32.xlu0 %v736
    %v738 = vpop.xlane.xlu0 %737
    %v739 = vsel %vm719, %v709, -inf
    %740 = vmax.xlane.f32.xlu0 %v739
    %v741 = vpop.xlane.xlu0 %740
    %v742 = vsel %vm723, %v710, -inf
    %743 = vmax.xlane.f32.xlu0 %v742
    %v744 = vpop.xlane.xlu0 %743
    %v745 = vsel %vm719, %v711, -inf
    %746 = vmax.xlane.f32.xlu0 %v745
    %v747 = vpop.xlane.xlu0 %746
    %v748 = vsel %vm723, %v712, -inf
    %749 = vmax.xlane.f32.xlu0 %v748
    %v750 = vpop.xlane.xlu0 %749
    %v751 = vsel %vm719, %v713, -inf
    %752 = vmax.xlane.f32.xlu0 %v751
    %v753 = vpop.xlane.xlu0 %752
    %v754 = vsel %vm723, %v714, -inf
    %755 = vmax.xlane.f32.xlu0 %v754
    %v756 = vpop.xlane.xlu0 %755
    %v757 = vsel %vm719, %v715, -inf
    %758 = vmax.xlane.f32.xlu0 %v757
    %v759 = vpop.xlane.xlu0 %758
    %v760 = vsel %vm723, %v716, -inf
    %761 = vmax.xlane.f32.xlu0 %v760
    %v762 = vpop.xlane.xlu0 %761
    %v763 = vsel %vm719, %v717, -inf
    %764 = vmax.xlane.f32.xlu0 %v763
    %v765 = vpop.xlane.xlu0 %764
    %v766 = vsel %vm723, %v718, -inf
    %767 = vmax.xlane.f32.xlu0 %v766
    %v768 = vpop.xlane.xlu0 %767
    %v769 = vsub.f32 %v703, %v722
    %v770 = vsub.f32 %v704, %v726
    %v771 = vsub.f32 %v705, %v729
    %v772 = vsub.f32 %v706, %v732
    %v773 = vsub.f32 %v707, %v735
    %v774 = vsub.f32 %v708, %v738
    %v775 = vsub.f32 %v709, %v741
    %v776 = vsub.f32 %v710, %v744
    %v777 = vsub.f32 %v711, %v747
    %v778 = vsub.f32 %v712, %v750
    %v779 = vsub.f32 %v713, %v753
    %v780 = vsub.f32 %v714, %v756
    %v781 = vsub.f32 %v715, %v759
    %v782 = vsub.f32 %v716, %v762
    %v783 = vsub.f32 %v717, %v765
    %v784 = vsub.f32 %v718, %v768
    %v785 = vmul.f32 %v769, 1.442695
    %v786 = vpow.pop %v785
    %v787 = vmul.f32 %v770, 1.442695
    %v788 = vpow.pop %v787
    %v789 = vmul.f32 %v771, 1.442695
    %v790 = vpow.pop %v789
    %v791 = vmul.f32 %v772, 1.442695
    %v792 = vpow.pop %v791
    %v793 = vmul.f32 %v773, 1.442695
    %v794 = vpow.pop %v793
    %v795 = vmul.f32 %v774, 1.442695
    %v796 = vpow.pop %v795
    %v797 = vmul.f32 %v775, 1.442695
    %v798 = vpow.pop %v797
    %v799 = vmul.f32 %v776, 1.442695
    %v800 = vpow.pop %v799
    %v801 = vmul.f32 %v777, 1.442695
    %v802 = vpow.pop %v801
    %v803 = vmul.f32 %v778, 1.442695
    %v804 = vpow.pop %v803
    %v805 = vmul.f32 %v779, 1.442695
    %v806 = vpow.pop %v805
    %v807 = vmul.f32 %v780, 1.442695
    %v808 = vpow.pop %v807
    %v809 = vmul.f32 %v781, 1.442695
    %v810 = vpow.pop %v809
    %v811 = vmul.f32 %v782, 1.442695
    %v812 = vpow.pop %v811
    %v813 = vmul.f32 %v783, 1.442695
    %v814 = vpow.pop %v813
    %v815 = vmul.f32 %v784, 1.442695
    %v816 = vpow.pop %v815
    %v817 = vsel %vm719, %v786, 0.0
    %818 = vadd.xlane.f32.xlu0 %v817
    %v819 = vpop.xlane.xlu0 %818
    %v820 = vsel %vm723, %v788, 0.0
    %821 = vadd.xlane.f32.xlu0 %v820
    %v822 = vpop.xlane.xlu0 %821
    %v823 = vsel %vm719, %v790, 0.0
    %824 = vadd.xlane.f32.xlu0 %v823
    %v825 = vpop.xlane.xlu0 %824
    %v826 = vsel %vm723, %v792, 0.0
    %827 = vadd.xlane.f32.xlu0 %v826
    %v828 = vpop.xlane.xlu0 %827
    %v829 = vsel %vm719, %v794, 0.0
    %830 = vadd.xlane.f32.xlu0 %v829
    %v831 = vpop.xlane.xlu0 %830
    %v832 = vsel %vm723, %v796, 0.0
    %833 = vadd.xlane.f32.xlu0 %v832
    %v834 = vpop.xlane.xlu0 %833
    %v835 = vsel %vm719, %v798, 0.0
    %836 = vadd.xlane.f32.xlu0 %v835
    %v837 = vpop.xlane.xlu0 %836
    %v838 = vsel %vm723, %v800, 0.0
    %839 = vadd.xlane.f32.xlu0 %v838
    %v840 = vpop.xlane.xlu0 %839
    %v841 = vsel %vm719, %v802, 0.0
    %842 = vadd.xlane.f32.xlu0 %v841
    %v843 = vpop.xlane.xlu0 %842
    %v844 = vsel %vm723, %v804, 0.0
    %845 = vadd.xlane.f32.xlu0 %v844
    %v846 = vpop.xlane.xlu0 %845
    %v847 = vsel %vm719, %v806, 0.0
    %848 = vadd.xlane.f32.xlu0 %v847
    %v849 = vpop.xlane.xlu0 %848
    %v850 = vsel %vm723, %v808, 0.0
    %851 = vadd.xlane.f32.xlu0 %v850
    %v852 = vpop.xlane.xlu0 %851
    %v853 = vsel %vm719, %v810, 0.0
    %854 = vadd.xlane.f32.xlu0 %v853
    %v855 = vpop.xlane.xlu0 %854
    %v856 = vsel %vm723, %v812, 0.0
    %857 = vadd.xlane.f32.xlu0 %v856
    %v858 = vpop.xlane.xlu0 %857
    %v859 = vsel %vm719, %v814, 0.0
    %860 = vadd.xlane.f32.xlu0 %v859
    %v861 = vpop.xlane.xlu0 %860
    %v862 = vsel %vm723, %v816, 0.0
    %863 = vadd.xlane.f32.xlu0 %v862
    %v864 = vpop.xlane.xlu0 %863
    %v865 = vlog2.pop %v819
    %v866 = vmul.f32 %v865, 0.6931472
    %v867 = vlog2.pop %v822
    %v868 = vmul.f32 %v867, 0.6931472
    %v869 = vlog2.pop %v825
    %v870 = vmul.f32 %v869, 0.6931472
    %v871 = vlog2.pop %v828
    %v872 = vmul.f32 %v871, 0.6931472
    %v873 = vlog2.pop %v831
    %v874 = vmul.f32 %v873, 0.6931472
    %v875 = vlog2.pop %v834
    %v876 = vmul.f32 %v875, 0.6931472
    %v877 = vlog2.pop %v837
    %v878 = vmul.f32 %v877, 0.6931472
    %v879 = vlog2.pop %v840
    %v880 = vmul.f32 %v879, 0.6931472
    %v881 = vlog2.pop %v843
    %v882 = vmul.f32 %v881, 0.6931472
    %v883 = vlog2.pop %v846
    %v884 = vmul.f32 %v883, 0.6931472
    %v885 = vlog2.pop %v849
    %v886 = vmul.f32 %v885, 0.6931472
    %v887 = vlog2.pop %v852
    %v888 = vmul.f32 %v887, 0.6931472
    %v889 = vlog2.pop %v855
    %v890 = vmul.f32 %v889, 0.6931472
    %v891 = vlog2.pop %v858
    %v892 = vmul.f32 %v891, 0.6931472
    %v893 = vlog2.pop %v861
    %v894 = vmul.f32 %v893, 0.6931472
    %v895 = vlog2.pop %v864
    %v896 = vmul.f32 %v895, 0.6931472
    %v897 = vadd.f32 %v722, %v866
    %v898 = vadd.f32 %v726, %v868
    %v899 = vadd.f32 %v729, %v870
    %v900 = vadd.f32 %v732, %v872
    %v901 = vadd.f32 %v735, %v874
    %v902 = vadd.f32 %v738, %v876
    %v903 = vadd.f32 %v741, %v878
    %v904 = vadd.f32 %v744, %v880
    %v905 = vadd.f32 %v747, %v882
    %v906 = vadd.f32 %v750, %v884
    %v907 = vadd.f32 %v753, %v886
    %v908 = vadd.f32 %v756, %v888
    %v909 = vadd.f32 %v759, %v890
    %v910 = vadd.f32 %v762, %v892
    %v911 = vadd.f32 %v765, %v894
    %v912 = vadd.f32 %v768, %v896
    %v913 = vlaneseq
    %v914 = vshrl.u32 %v913, 7
    %v915 = vsub.s32 1, %v914
    %v916 = vrot.slane %v513, %v915
    %s918 = sor.u32 256, 253
    %919 = vbcast.lane.b32.xlu0 %v916, %s918
    %v920 = vpop.permute.xlu0 %919
    %s922 = sor.u32 256, 5
    %923 = vbcast.lane.b32.xlu0 %v916, %s922
    %v924 = vpop.permute.xlu0 %923
    %v925 = vlaneseq
    %v926 = vshrl.u32 %v925, 7
    %v927 = vsub.s32 1, %v926
    %v928 = vrot.slane %v514, %v927
    %s930 = sor.u32 256, 253
    %931 = vbcast.lane.b32.xlu0 %v928, %s930
    %v932 = vpop.permute.xlu0 %931
    %s934 = sor.u32 256, 5
    %935 = vbcast.lane.b32.xlu0 %v928, %s934
    %v936 = vpop.permute.xlu0 %935
    %v937 = vlaneseq
    %v938 = vshrl.u32 %v937, 7
    %v939 = vsub.s32 1, %v938
    %v940 = vrot.slane %v515, %v939
    %s942 = sor.u32 256, 253
    %943 = vbcast.lane.b32.xlu0 %v940, %s942
    %v944 = vpop.permute.xlu0 %943
    %s946 = sor.u32 256, 5
    %947 = vbcast.lane.b32.xlu0 %v940, %s946
    %v948 = vpop.permute.xlu0 %947
    %v949 = vlaneseq
    %v950 = vshrl.u32 %v949, 7
    %v951 = vsub.s32 1, %v950
    %v952 = vrot.slane %v516, %v951
    %s954 = sor.u32 256, 253
    %955 = vbcast.lane.b32.xlu0 %v952, %s954
    %v956 = vpop.permute.xlu0 %955
    %s958 = sor.u32 256, 5
    %959 = vbcast.lane.b32.xlu0 %v952, %s958
    %v960 = vpop.permute.xlu0 %959
    %v961 = vlaneseq
    %v962 = vshrl.u32 %v961, 7
    %v963 = vsub.s32 1, %v962
    %v964 = vrot.slane %v517, %v963
    %s966 = sor.u32 256, 253
    %967 = vbcast.lane.b32.xlu0 %v964, %s966
    %v968 = vpop.permute.xlu0 %967
    %s970 = sor.u32 256, 5
    %971 = vbcast.lane.b32.xlu0 %v964, %s970
    %v972 = vpop.permute.xlu0 %971
    %v973 = vlaneseq
    %v974 = vshrl.u32 %v973, 7
    %v975 = vsub.s32 1, %v974
    %v976 = vrot.slane %v518, %v975
    %s978 = sor.u32 256, 253
    %979 = vbcast.lane.b32.xlu0 %v976, %s978
    %v980 = vpop.permute.xlu0 %979
    %s982 = sor.u32 256, 5
    %983 = vbcast.lane.b32.xlu0 %v976, %s982
    %v984 = vpop.permute.xlu0 %983
    %v985 = vlaneseq
    %v986 = vshrl.u32 %v985, 7
    %v987 = vsub.s32 1, %v986
    %v988 = vrot.slane %v519, %v987
    %s990 = sor.u32 256, 253
    %991 = vbcast.lane.b32.xlu0 %v988, %s990
    %v992 = vpop.permute.xlu0 %991
    %s994 = sor.u32 256, 5
    %995 = vbcast.lane.b32.xlu0 %v988, %s994
    %v996 = vpop.permute.xlu0 %995
    %v997 = vlaneseq
    %v998 = vshrl.u32 %v997, 7
    %v999 = vsub.s32 1, %v998
    %v1000 = vrot.slane %v520, %v999
    %s1002 = sor.u32 256, 253
    %1003 = vbcast.lane.b32.xlu0 %v1000, %s1002
    %v1004 = vpop.permute.xlu0 %1003
    %s1006 = sor.u32 256, 5
    %1007 = vbcast.lane.b32.xlu0 %v1000, %s1006
    %v1008 = vpop.permute.xlu0 %1007
    %v1025 = vadd.f32 %v897, %v920
    %v1026 = vadd.f32 %v898, %v924
    %v1027 = vadd.f32 %v899, %v932
    %v1028 = vadd.f32 %v900, %v936
    %v1029 = vadd.f32 %v901, %v944
    %v1030 = vadd.f32 %v902, %v948
    %v1031 = vadd.f32 %v903, %v956
    %v1032 = vadd.f32 %v904, %v960
    %v1033 = vadd.f32 %v905, %v968
    %v1034 = vadd.f32 %v906, %v972
    %v1035 = vadd.f32 %v907, %v980
    %v1036 = vadd.f32 %v908, %v984
    %v1037 = vadd.f32 %v909, %v992
    %v1038 = vadd.f32 %v910, %v996
    %v1039 = vadd.f32 %v911, %v1004
    %v1040 = vadd.f32 %v912, %v1008
    %v1041 = vsel %vm612, 1, 0
    %1042 = vset.pattern.permute.xlu0 28
    %1043 = vperm.xlu0 %1042, %v1041
    %v1044 = vpop.permute.xlu0 %1043
    %vm1045 = vcmp.eq.s32.totalorder %v1044, 1
    %1062 = vset.pattern.permute.xlu0 0
    %1063 = vperm.xlu0 %1062, %v1025
    %v1064 = vpop.permute.xlu0 %1063
    %1065 = vset.pattern.permute.xlu0 0
    %1066 = vperm.xlu0 %1065, %v1026
    %v1067 = vpop.permute.xlu0 %1066
    %1068 = vset.pattern.permute.xlu0 0
    %1069 = vperm.xlu0 %1068, %v1027
    %v1070 = vpop.permute.xlu0 %1069
    %1071 = vset.pattern.permute.xlu0 0
    %1072 = vperm.xlu0 %1071, %v1028
    %v1073 = vpop.permute.xlu0 %1072
    %1074 = vset.pattern.permute.xlu0 0
    %1075 = vperm.xlu0 %1074, %v1029
    %v1076 = vpop.permute.xlu0 %1075
    %1077 = vset.pattern.permute.xlu0 0
    %1078 = vperm.xlu0 %1077, %v1030
    %v1079 = vpop.permute.xlu0 %1078
    %1080 = vset.pattern.permute.xlu0 0
    %1081 = vperm.xlu0 %1080, %v1031
    %v1082 = vpop.permute.xlu0 %1081
    %1083 = vset.pattern.permute.xlu0 0
    %1084 = vperm.xlu0 %1083, %v1032
    %v1085 = vpop.permute.xlu0 %1084
    %1086 = vset.pattern.permute.xlu0 0
    %1087 = vperm.xlu0 %1086, %v1033
    %v1088 = vpop.permute.xlu0 %1087
    %1089 = vset.pattern.permute.xlu0 0
    %1090 = vperm.xlu0 %1089, %v1034
    %v1091 = vpop.permute.xlu0 %1090
    %1092 = vset.pattern.permute.xlu0 0
    %1093 = vperm.xlu0 %1092, %v1035
    %v1094 = vpop.permute.xlu0 %1093
    %1095 = vset.pattern.permute.xlu0 0
    %1096 = vperm.xlu0 %1095, %v1036
    %v1097 = vpop.permute.xlu0 %1096
    %1098 = vset.pattern.permute.xlu0 0
    %1099 = vperm.xlu0 %1098, %v1037
    %v1100 = vpop.permute.xlu0 %1099
    %1101 = vset.pattern.permute.xlu0 0
    %1102 = vperm.xlu0 %1101, %v1038
    %v1103 = vpop.permute.xlu0 %1102
    %1104 = vset.pattern.permute.xlu0 0
    %1105 = vperm.xlu0 %1104, %v1039
    %v1106 = vpop.permute.xlu0 %1105
    %1107 = vset.pattern.permute.xlu0 0
    %1108 = vperm.xlu0 %1107, %v1040
    %v1109 = vpop.permute.xlu0 %1108
    %v1110 = vadd.s32 %v154, 3
    %v1111 = vlaneseq
    %v1112 = vshrl.u32 %v1111, 7
    %v1113 = vsub.s32 %v1110, %v1112
    %v1114 = vrot.slane %v1064, %v1113
    %v1115 = vadd.s32 %v154, 4294967291
    %v1116 = vlaneseq
    %v1117 = vshrl.u32 %v1116, 7
    %v1118 = vsub.s32 %v1115, %v1117
    %v1119 = vrot.slane %v1067, %v1118
    %vm1120 = vcmask 105512
    %v1121 = vsel %vm1120, %v1119, %v1114
    %v1122 = vlaneseq
    %v1123 = vshrl.u32 %v1122, 7
    %v1124 = vsub.s32 %v1110, %v1123
    %v1125 = vrot.slane %v1070, %v1124
    %v1126 = vlaneseq
    %v1127 = vshrl.u32 %v1126, 7
    %v1128 = vsub.s32 %v1115, %v1127
    %v1129 = vrot.slane %v1073, %v1128
    %v1130 = vsel %vm1120, %v1129, %v1125
    %v1131 = vlaneseq
    %v1132 = vshrl.u32 %v1131, 7
    %v1133 = vsub.s32 %v1110, %v1132
    %v1134 = vrot.slane %v1076, %v1133
    %v1135 = vlaneseq
    %v1136 = vshrl.u32 %v1135, 7
    %v1137 = vsub.s32 %v1115, %v1136
    %v1138 = vrot.slane %v1079, %v1137
    %v1139 = vsel %vm1120, %v1138, %v1134
    %v1140 = vlaneseq
    %v1141 = vshrl.u32 %v1140, 7
    %v1142 = vsub.s32 %v1110, %v1141
    %v1143 = vrot.slane %v1082, %v1142
    %v1144 = vlaneseq
    %v1145 = vshrl.u32 %v1144, 7
    %v1146 = vsub.s32 %v1115, %v1145
    %v1147 = vrot.slane %v1085, %v1146
    %v1148 = vsel %vm1120, %v1147, %v1143
    %v1149 = vlaneseq
    %v1150 = vshrl.u32 %v1149, 7
    %v1151 = vsub.s32 %v1110, %v1150
    %v1152 = vrot.slane %v1088, %v1151
    %v1153 = vlaneseq
    %v1154 = vshrl.u32 %v1153, 7
    %v1155 = vsub.s32 %v1115, %v1154
    %v1156 = vrot.slane %v1091, %v1155
    %v1157 = vsel %vm1120, %v1156, %v1152
    %v1158 = vlaneseq
    %v1159 = vshrl.u32 %v1158, 7
    %v1160 = vsub.s32 %v1110, %v1159
    %v1161 = vrot.slane %v1094, %v1160
    %v1162 = vlaneseq
    %v1163 = vshrl.u32 %v1162, 7
    %v1164 = vsub.s32 %v1115, %v1163
    %v1165 = vrot.slane %v1097, %v1164
    %v1166 = vsel %vm1120, %v1165, %v1161
    %v1167 = vlaneseq
    %v1168 = vshrl.u32 %v1167, 7
    %v1169 = vsub.s32 %v1110, %v1168
    %v1170 = vrot.slane %v1100, %v1169
    %v1171 = vlaneseq
    %v1172 = vshrl.u32 %v1171, 7
    %v1173 = vsub.s32 %v1115, %v1172
    %v1174 = vrot.slane %v1103, %v1173
    %v1175 = vsel %vm1120, %v1174, %v1170
    %v1176 = vlaneseq
    %v1177 = vshrl.u32 %v1176, 7
    %v1178 = vsub.s32 %v1110, %v1177
    %v1179 = vrot.slane %v1106, %v1178
    %v1180 = vlaneseq
    %v1181 = vshrl.u32 %v1180, 7
    %v1182 = vsub.s32 %v1115, %v1181
    %v1183 = vrot.slane %v1109, %v1182
    %v1184 = vsel %vm1120, %v1183, %v1179
    %v1185 = vsel %vm590, %v1130, %v1121
    %v1186 = vsel %vm593, %v1139, %v1185
    %v1187 = vsel %vm596, %v1148, %v1186
    %v1188 = vsel %vm599, %v1157, %v1187
    %v1189 = vsel %vm602, %v1166, %v1188
    %v1190 = vsel %vm605, %v1175, %v1189
    %v1191 = vsel %vm608, %v1184, %v1190
    %v1193 = vsel %vm1045, %v1191, %v611
    %vm1194 = vcmp.gt.s32.totalorder %v15, 2
    %v1196 = vcombine.high %v1193, %v1193
    %v1198 = vunpack.c.l.s4 1966171168
    %v1199 = vunpack.c.0.s8 %v1198
    %v1200 = vlaneseq
    %v1201 = vshrl.u32 %v1200, 7
    %v1202 = vsub.s32 %v1199, %v1201
    %v1203 = vrot.slane %v1193, %v1202
    %v1205 = vunpack.c.l.s4 1966171168
    %v1206 = vunpack.c.0.s8 %v1205
    %v1207 = vlaneseq
    %v1208 = vshrl.u32 %v1207, 7
    %v1209 = vsub.s32 %v1206, %v1208
    %v1210 = vrot.slane %v1196, %v1209
    %v1211 = vcombine.high %v1203, %v1203
    %v1212 = vcombine.high %v1210, %v1210
    %v1214 = vunpack.c.l.s4 1966171168
    %v1215 = vunpack.c.0.s8 %v1214
    %v1216 = vlaneseq
    %v1217 = vshrl.u32 %v1216, 7
    %v1218 = vsub.s32 %v1215, %v1217
    %v1219 = vrot.slane %v1203, %v1218
    %v1221 = vunpack.c.l.s4 1966171168
    %v1222 = vunpack.c.0.s8 %v1221
    %v1223 = vlaneseq
    %v1224 = vshrl.u32 %v1223, 7
    %v1225 = vsub.s32 %v1222, %v1224
    %v1226 = vrot.slane %v1210, %v1225
    %v1228 = vunpack.c.l.s4 1966171168
    %v1229 = vunpack.c.0.s8 %v1228
    %v1230 = vlaneseq
    %v1231 = vshrl.u32 %v1230, 7
    %v1232 = vsub.s32 %v1229, %v1231
    %v1233 = vrot.slane %v1211, %v1232
    %v1235 = vunpack.c.l.s4 1966171168
    %v1236 = vunpack.c.0.s8 %v1235
    %v1237 = vlaneseq
    %v1238 = vshrl.u32 %v1237, 7
    %v1239 = vsub.s32 %v1236, %v1238
    %v1240 = vrot.slane %v1212, %v1239
    %v1241 = vcombine.high %v1219, %v1219
    %v1242 = vcombine.high %v1226, %v1226
    %v1243 = vcombine.high %v1233, %v1233
    %v1244 = vcombine.high %v1240, %v1240
    %v1245 = vlaneseq
    %v1246 = vshrl.u32 %v1245, 7
    %v1247 = vsub.s32 0, %v1246
    %v1248 = vrot.slane %v1219, %v1247
    %v1249 = vlaneseq
    %v1250 = vshrl.u32 %v1249, 7
    %v1251 = vsub.s32 0, %v1250
    %v1252 = vrot.slane %v1233, %v1251
    %v1253 = vlaneseq
    %v1254 = vshrl.u32 %v1253, 7
    %v1255 = vsub.s32 0, %v1254
    %v1256 = vrot.slane %v1241, %v1255
    %v1257 = vlaneseq
    %v1258 = vshrl.u32 %v1257, 7
    %v1259 = vsub.s32 0, %v1258
    %v1260 = vrot.slane %v1243, %v1259
    %v1261 = vlaneseq
    %v1262 = vshrl.u32 %v1261, 7
    %v1263 = vsub.s32 0, %v1262
    %v1264 = vrot.slane %v1226, %v1263
    %v1265 = vlaneseq
    %v1266 = vshrl.u32 %v1265, 7
    %v1267 = vsub.s32 0, %v1266
    %v1268 = vrot.slane %v1240, %v1267
    %v1269 = vlaneseq
    %v1270 = vshrl.u32 %v1269, 7
    %v1271 = vsub.s32 0, %v1270
    %v1272 = vrot.slane %v1242, %v1271
    %v1273 = vlaneseq
    %v1274 = vshrl.u32 %v1273, 7
    %v1275 = vsub.s32 0, %v1274
    %v1276 = vrot.slane %v1244, %v1275
    %v1285 = vadd.f32 %v1248, %v22
    %v1286 = vadd.f32 %v1248, %v23
    %v1287 = vadd.f32 %v1252, %v22
    %v1288 = vadd.f32 %v1252, %v23
    %v1289 = vadd.f32 %v1256, %v22
    %v1290 = vadd.f32 %v1256, %v23
    %v1291 = vadd.f32 %v1260, %v22
    %v1292 = vadd.f32 %v1260, %v23
    %v1293 = vadd.f32 %v1264, %v22
    %v1294 = vadd.f32 %v1264, %v23
    %v1295 = vadd.f32 %v1268, %v22
    %v1296 = vadd.f32 %v1268, %v23
    %v1297 = vadd.f32 %v1272, %v22
    %v1298 = vadd.f32 %v1272, %v23
    %v1299 = vadd.f32 %v1276, %v22
    %v1300 = vadd.f32 %v1276, %v23
    %v1301 = vsel %vm719, %v1285, -inf
    %1302 = vmax.xlane.f32.xlu0 %v1301
    %v1303 = vpop.xlane.xlu0 %1302
    %v1304 = vsel %vm723, %v1286, -inf
    %1305 = vmax.xlane.f32.xlu0 %v1304
    %v1306 = vpop.xlane.xlu0 %1305
    %v1307 = vsel %vm719, %v1287, -inf
    %1308 = vmax.xlane.f32.xlu0 %v1307
    %v1309 = vpop.xlane.xlu0 %1308
    %v1310 = vsel %vm723, %v1288, -inf
    %1311 = vmax.xlane.f32.xlu0 %v1310
    %v1312 = vpop.xlane.xlu0 %1311
    %v1313 = vsel %vm719, %v1289, -inf
    %1314 = vmax.xlane.f32.xlu0 %v1313
    %v1315 = vpop.xlane.xlu0 %1314
    %v1316 = vsel %vm723, %v1290, -inf
    %1317 = vmax.xlane.f32.xlu0 %v1316
    %v1318 = vpop.xlane.xlu0 %1317
    %v1319 = vsel %vm719, %v1291, -inf
    %1320 = vmax.xlane.f32.xlu0 %v1319
    %v1321 = vpop.xlane.xlu0 %1320
    %v1322 = vsel %vm723, %v1292, -inf
    %1323 = vmax.xlane.f32.xlu0 %v1322
    %v1324 = vpop.xlane.xlu0 %1323
    %v1325 = vsel %vm719, %v1293, -inf
    %1326 = vmax.xlane.f32.xlu0 %v1325
    %v1327 = vpop.xlane.xlu0 %1326
    %v1328 = vsel %vm723, %v1294, -inf
    %1329 = vmax.xlane.f32.xlu0 %v1328
    %v1330 = vpop.xlane.xlu0 %1329
    %v1331 = vsel %vm719, %v1295, -inf
    %1332 = vmax.xlane.f32.xlu0 %v1331
    %v1333 = vpop.xlane.xlu0 %1332
    %v1334 = vsel %vm723, %v1296, -inf
    %1335 = vmax.xlane.f32.xlu0 %v1334
    %v1336 = vpop.xlane.xlu0 %1335
    %v1337 = vsel %vm719, %v1297, -inf
    %1338 = vmax.xlane.f32.xlu0 %v1337
    %v1339 = vpop.xlane.xlu0 %1338
    %v1340 = vsel %vm723, %v1298, -inf
    %1341 = vmax.xlane.f32.xlu0 %v1340
    %v1342 = vpop.xlane.xlu0 %1341
    %v1343 = vsel %vm719, %v1299, -inf
    %1344 = vmax.xlane.f32.xlu0 %v1343
    %v1345 = vpop.xlane.xlu0 %1344
    %v1346 = vsel %vm723, %v1300, -inf
    %1347 = vmax.xlane.f32.xlu0 %v1346
    %v1348 = vpop.xlane.xlu0 %1347
    %v1349 = vsub.f32 %v1285, %v1303
    %v1350 = vsub.f32 %v1286, %v1306
    %v1351 = vsub.f32 %v1287, %v1309
    %v1352 = vsub.f32 %v1288, %v1312
    %v1353 = vsub.f32 %v1289, %v1315
    %v1354 = vsub.f32 %v1290, %v1318
    %v1355 = vsub.f32 %v1291, %v1321
    %v1356 = vsub.f32 %v1292, %v1324
    %v1357 = vsub.f32 %v1293, %v1327
    %v1358 = vsub.f32 %v1294, %v1330
    %v1359 = vsub.f32 %v1295, %v1333
    %v1360 = vsub.f32 %v1296, %v1336
    %v1361 = vsub.f32 %v1297, %v1339
    %v1362 = vsub.f32 %v1298, %v1342
    %v1363 = vsub.f32 %v1299, %v1345
    %v1364 = vsub.f32 %v1300, %v1348
    %v1365 = vmul.f32 %v1349, 1.442695
    %v1366 = vpow.pop %v1365
    %v1367 = vmul.f32 %v1350, 1.442695
    %v1368 = vpow.pop %v1367
    %v1369 = vmul.f32 %v1351, 1.442695
    %v1370 = vpow.pop %v1369
    %v1371 = vmul.f32 %v1352, 1.442695
    %v1372 = vpow.pop %v1371
    %v1373 = vmul.f32 %v1353, 1.442695
    %v1374 = vpow.pop %v1373
    %v1375 = vmul.f32 %v1354, 1.442695
    %v1376 = vpow.pop %v1375
    %v1377 = vmul.f32 %v1355, 1.442695
    %v1378 = vpow.pop %v1377
    %v1379 = vmul.f32 %v1356, 1.442695
    %v1380 = vpow.pop %v1379
    %v1381 = vmul.f32 %v1357, 1.442695
    %v1382 = vpow.pop %v1381
    %v1383 = vmul.f32 %v1358, 1.442695
    %v1384 = vpow.pop %v1383
    %v1385 = vmul.f32 %v1359, 1.442695
    %v1386 = vpow.pop %v1385
    %v1387 = vmul.f32 %v1360, 1.442695
    %v1388 = vpow.pop %v1387
    %v1389 = vmul.f32 %v1361, 1.442695
    %v1390 = vpow.pop %v1389
    %v1391 = vmul.f32 %v1362, 1.442695
    %v1392 = vpow.pop %v1391
    %v1393 = vmul.f32 %v1363, 1.442695
    %v1394 = vpow.pop %v1393
    %v1395 = vmul.f32 %v1364, 1.442695
    %v1396 = vpow.pop %v1395
    %v1397 = vsel %vm719, %v1366, 0.0
    %1398 = vadd.xlane.f32.xlu0 %v1397
    %v1399 = vpop.xlane.xlu0 %1398
    %v1400 = vsel %vm723, %v1368, 0.0
    %1401 = vadd.xlane.f32.xlu0 %v1400
    %v1402 = vpop.xlane.xlu0 %1401
    %v1403 = vsel %vm719, %v1370, 0.0
    %1404 = vadd.xlane.f32.xlu0 %v1403
    %v1405 = vpop.xlane.xlu0 %1404
    %v1406 = vsel %vm723, %v1372, 0.0
    %1407 = vadd.xlane.f32.xlu0 %v1406
    %v1408 = vpop.xlane.xlu0 %1407
    %v1409 = vsel %vm719, %v1374, 0.0
    %1410 = vadd.xlane.f32.xlu0 %v1409
    %v1411 = vpop.xlane.xlu0 %1410
    %v1412 = vsel %vm723, %v1376, 0.0
    %1413 = vadd.xlane.f32.xlu0 %v1412
    %v1414 = vpop.xlane.xlu0 %1413
    %v1415 = vsel %vm719, %v1378, 0.0
    %1416 = vadd.xlane.f32.xlu0 %v1415
    %v1417 = vpop.xlane.xlu0 %1416
    %v1418 = vsel %vm723, %v1380, 0.0
    %1419 = vadd.xlane.f32.xlu0 %v1418
    %v1420 = vpop.xlane.xlu0 %1419
    %v1421 = vsel %vm719, %v1382, 0.0
    %1422 = vadd.xlane.f32.xlu0 %v1421
    %v1423 = vpop.xlane.xlu0 %1422
    %v1424 = vsel %vm723, %v1384, 0.0
    %1425 = vadd.xlane.f32.xlu0 %v1424
    %v1426 = vpop.xlane.xlu0 %1425
    %v1427 = vsel %vm719, %v1386, 0.0
    %1428 = vadd.xlane.f32.xlu0 %v1427
    %v1429 = vpop.xlane.xlu0 %1428
    %v1430 = vsel %vm723, %v1388, 0.0
    %1431 = vadd.xlane.f32.xlu0 %v1430
    %v1432 = vpop.xlane.xlu0 %1431
    %v1433 = vsel %vm719, %v1390, 0.0
    %1434 = vadd.xlane.f32.xlu0 %v1433
    %v1435 = vpop.xlane.xlu0 %1434
    %v1436 = vsel %vm723, %v1392, 0.0
    %1437 = vadd.xlane.f32.xlu0 %v1436
    %v1438 = vpop.xlane.xlu0 %1437
    %v1439 = vsel %vm719, %v1394, 0.0
    %1440 = vadd.xlane.f32.xlu0 %v1439
    %v1441 = vpop.xlane.xlu0 %1440
    %v1442 = vsel %vm723, %v1396, 0.0
    %1443 = vadd.xlane.f32.xlu0 %v1442
    %v1444 = vpop.xlane.xlu0 %1443
    %v1445 = vlog2.pop %v1399
    %v1446 = vmul.f32 %v1445, 0.6931472
    %v1447 = vlog2.pop %v1402
    %v1448 = vmul.f32 %v1447, 0.6931472
    %v1449 = vlog2.pop %v1405
    %v1450 = vmul.f32 %v1449, 0.6931472
    %v1451 = vlog2.pop %v1408
    %v1452 = vmul.f32 %v1451, 0.6931472
    %v1453 = vlog2.pop %v1411
    %v1454 = vmul.f32 %v1453, 0.6931472
    %v1455 = vlog2.pop %v1414
    %v1456 = vmul.f32 %v1455, 0.6931472
    %v1457 = vlog2.pop %v1417
    %v1458 = vmul.f32 %v1457, 0.6931472
    %v1459 = vlog2.pop %v1420
    %v1460 = vmul.f32 %v1459, 0.6931472
    %v1461 = vlog2.pop %v1423
    %v1462 = vmul.f32 %v1461, 0.6931472
    %v1463 = vlog2.pop %v1426
    %v1464 = vmul.f32 %v1463, 0.6931472
    %v1465 = vlog2.pop %v1429
    %v1466 = vmul.f32 %v1465, 0.6931472
    %v1467 = vlog2.pop %v1432
    %v1468 = vmul.f32 %v1467, 0.6931472
    %v1469 = vlog2.pop %v1435
    %v1470 = vmul.f32 %v1469, 0.6931472
    %v1471 = vlog2.pop %v1438
    %v1472 = vmul.f32 %v1471, 0.6931472
    %v1473 = vlog2.pop %v1441
    %v1474 = vmul.f32 %v1473, 0.6931472
    %v1475 = vlog2.pop %v1444
    %v1476 = vmul.f32 %v1475, 0.6931472
    %v1477 = vadd.f32 %v1303, %v1446
    %v1478 = vadd.f32 %v1306, %v1448
    %v1479 = vadd.f32 %v1309, %v1450
    %v1480 = vadd.f32 %v1312, %v1452
    %v1481 = vadd.f32 %v1315, %v1454
    %v1482 = vadd.f32 %v1318, %v1456
    %v1483 = vadd.f32 %v1321, %v1458
    %v1484 = vadd.f32 %v1324, %v1460
    %v1485 = vadd.f32 %v1327, %v1462
    %v1486 = vadd.f32 %v1330, %v1464
    %v1487 = vadd.f32 %v1333, %v1466
    %v1488 = vadd.f32 %v1336, %v1468
    %v1489 = vadd.f32 %v1339, %v1470
    %v1490 = vadd.f32 %v1342, %v1472
    %v1491 = vadd.f32 %v1345, %v1474
    %v1492 = vadd.f32 %v1348, %v1476
    %v1493 = vlaneseq
    %v1494 = vshrl.u32 %v1493, 7
    %v1495 = vsub.s32 2, %v1494
    %v1496 = vrot.slane %v513, %v1495
    %s1498 = sor.u32 256, 253
    %1499 = vbcast.lane.b32.xlu0 %v1496, %s1498
    %v1500 = vpop.permute.xlu0 %1499
    %s1502 = sor.u32 256, 5
    %1503 = vbcast.lane.b32.xlu0 %v1496, %s1502
    %v1504 = vpop.permute.xlu0 %1503
    %v1505 = vlaneseq
    %v1506 = vshrl.u32 %v1505, 7
    %v1507 = vsub.s32 2, %v1506
    %v1508 = vrot.slane %v514, %v1507
    %s1510 = sor.u32 256, 253
    %1511 = vbcast.lane.b32.xlu0 %v1508, %s1510
    %v1512 = vpop.permute.xlu0 %1511
    %s1514 = sor.u32 256, 5
    %1515 = vbcast.lane.b32.xlu0 %v1508, %s1514
    %v1516 = vpop.permute.xlu0 %1515
    %v1517 = vlaneseq
    %v1518 = vshrl.u32 %v1517, 7
    %v1519 = vsub.s32 2, %v1518
    %v1520 = vrot.slane %v515, %v1519
    %s1522 = sor.u32 256, 253
    %1523 = vbcast.lane.b32.xlu0 %v1520, %s1522
    %v1524 = vpop.permute.xlu0 %1523
    %s1526 = sor.u32 256, 5
    %1527 = vbcast.lane.b32.xlu0 %v1520, %s1526
    %v1528 = vpop.permute.xlu0 %1527
    %v1529 = vlaneseq
    %v1530 = vshrl.u32 %v1529, 7
    %v1531 = vsub.s32 2, %v1530
    %v1532 = vrot.slane %v516, %v1531
    %s1534 = sor.u32 256, 253
    %1535 = vbcast.lane.b32.xlu0 %v1532, %s1534
    %v1536 = vpop.permute.xlu0 %1535
    %s1538 = sor.u32 256, 5
    %1539 = vbcast.lane.b32.xlu0 %v1532, %s1538
    %v1540 = vpop.permute.xlu0 %1539
    %v1541 = vlaneseq
    %v1542 = vshrl.u32 %v1541, 7
    %v1543 = vsub.s32 2, %v1542
    %v1544 = vrot.slane %v517, %v1543
    %s1546 = sor.u32 256, 253
    %1547 = vbcast.lane.b32.xlu0 %v1544, %s1546
    %v1548 = vpop.permute.xlu0 %1547
    %s1550 = sor.u32 256, 5
    %1551 = vbcast.lane.b32.xlu0 %v1544, %s1550
    %v1552 = vpop.permute.xlu0 %1551
    %v1553 = vlaneseq
    %v1554 = vshrl.u32 %v1553, 7
    %v1555 = vsub.s32 2, %v1554
    %v1556 = vrot.slane %v518, %v1555
    %s1558 = sor.u32 256, 253
    %1559 = vbcast.lane.b32.xlu0 %v1556, %s1558
    %v1560 = vpop.permute.xlu0 %1559
    %s1562 = sor.u32 256, 5
    %1563 = vbcast.lane.b32.xlu0 %v1556, %s1562
    %v1564 = vpop.permute.xlu0 %1563
    %v1565 = vlaneseq
    %v1566 = vshrl.u32 %v1565, 7
    %v1567 = vsub.s32 2, %v1566
    %v1568 = vrot.slane %v519, %v1567
    %s1570 = sor.u32 256, 253
    %1571 = vbcast.lane.b32.xlu0 %v1568, %s1570
    %v1572 = vpop.permute.xlu0 %1571
    %s1574 = sor.u32 256, 5
    %1575 = vbcast.lane.b32.xlu0 %v1568, %s1574
    %v1576 = vpop.permute.xlu0 %1575
    %v1577 = vlaneseq
    %v1578 = vshrl.u32 %v1577, 7
    %v1579 = vsub.s32 2, %v1578
    %v1580 = vrot.slane %v520, %v1579
    %s1582 = sor.u32 256, 253
    %1583 = vbcast.lane.b32.xlu0 %v1580, %s1582
    %v1584 = vpop.permute.xlu0 %1583
    %s1586 = sor.u32 256, 5
    %1587 = vbcast.lane.b32.xlu0 %v1580, %s1586
    %v1588 = vpop.permute.xlu0 %1587
    %v1605 = vadd.f32 %v1477, %v1500
    %v1606 = vadd.f32 %v1478, %v1504
    %v1607 = vadd.f32 %v1479, %v1512
    %v1608 = vadd.f32 %v1480, %v1516
    %v1609 = vadd.f32 %v1481, %v1524
    %v1610 = vadd.f32 %v1482, %v1528
    %v1611 = vadd.f32 %v1483, %v1536
    %v1612 = vadd.f32 %v1484, %v1540
    %v1613 = vadd.f32 %v1485, %v1548
    %v1614 = vadd.f32 %v1486, %v1552
    %v1615 = vadd.f32 %v1487, %v1560
    %v1616 = vadd.f32 %v1488, %v1564
    %v1617 = vadd.f32 %v1489, %v1572
    %v1618 = vadd.f32 %v1490, %v1576
    %v1619 = vadd.f32 %v1491, %v1584
    %v1620 = vadd.f32 %v1492, %v1588
    %v1621 = vsel %vm1194, 1, 0
    %1622 = vset.pattern.permute.xlu0 28
    %1623 = vperm.xlu0 %1622, %v1621
    %v1624 = vpop.permute.xlu0 %1623
    %vm1625 = vcmp.eq.s32.totalorder %v1624, 1
    %1642 = vset.pattern.permute.xlu0 0
    %1643 = vperm.xlu0 %1642, %v1605
    %v1644 = vpop.permute.xlu0 %1643
    %1645 = vset.pattern.permute.xlu0 0
    %1646 = vperm.xlu0 %1645, %v1606
    %v1647 = vpop.permute.xlu0 %1646
    %1648 = vset.pattern.permute.xlu0 0
    %1649 = vperm.xlu0 %1648, %v1607
    %v1650 = vpop.permute.xlu0 %1649
    %1651 = vset.pattern.permute.xlu0 0
    %1652 = vperm.xlu0 %1651, %v1608
    %v1653 = vpop.permute.xlu0 %1652
    %1654 = vset.pattern.permute.xlu0 0
    %1655 = vperm.xlu0 %1654, %v1609
    %v1656 = vpop.permute.xlu0 %1655
    %1657 = vset.pattern.permute.xlu0 0
    %1658 = vperm.xlu0 %1657, %v1610
    %v1659 = vpop.permute.xlu0 %1658
    %1660 = vset.pattern.permute.xlu0 0
    %1661 = vperm.xlu0 %1660, %v1611
    %v1662 = vpop.permute.xlu0 %1661
    %1663 = vset.pattern.permute.xlu0 0
    %1664 = vperm.xlu0 %1663, %v1612
    %v1665 = vpop.permute.xlu0 %1664
    %1666 = vset.pattern.permute.xlu0 0
    %1667 = vperm.xlu0 %1666, %v1613
    %v1668 = vpop.permute.xlu0 %1667
    %1669 = vset.pattern.permute.xlu0 0
    %1670 = vperm.xlu0 %1669, %v1614
    %v1671 = vpop.permute.xlu0 %1670
    %1672 = vset.pattern.permute.xlu0 0
    %1673 = vperm.xlu0 %1672, %v1615
    %v1674 = vpop.permute.xlu0 %1673
    %1675 = vset.pattern.permute.xlu0 0
    %1676 = vperm.xlu0 %1675, %v1616
    %v1677 = vpop.permute.xlu0 %1676
    %1678 = vset.pattern.permute.xlu0 0
    %1679 = vperm.xlu0 %1678, %v1617
    %v1680 = vpop.permute.xlu0 %1679
    %1681 = vset.pattern.permute.xlu0 0
    %1682 = vperm.xlu0 %1681, %v1618
    %v1683 = vpop.permute.xlu0 %1682
    %1684 = vset.pattern.permute.xlu0 0
    %1685 = vperm.xlu0 %1684, %v1619
    %v1686 = vpop.permute.xlu0 %1685
    %1687 = vset.pattern.permute.xlu0 0
    %1688 = vperm.xlu0 %1687, %v1620
    %v1689 = vpop.permute.xlu0 %1688
    %v1690 = vlaneseq
    %v1691 = vshrl.u32 %v1690, 7
    %v1692 = vsub.s32 %v1110, %v1691
    %v1693 = vrot.slane %v1644, %v1692
    %v1694 = vlaneseq
    %v1695 = vshrl.u32 %v1694, 7
    %v1696 = vsub.s32 %v1115, %v1695
    %v1697 = vrot.slane %v1647, %v1696
    %v1698 = vsel %vm1120, %v1697, %v1693
    %v1699 = vlaneseq
    %v1700 = vshrl.u32 %v1699, 7
    %v1701 = vsub.s32 %v1110, %v1700
    %v1702 = vrot.slane %v1650, %v1701
    %v1703 = vlaneseq
    %v1704 = vshrl.u32 %v1703, 7
    %v1705 = vsub.s32 %v1115, %v1704
    %v1706 = vrot.slane %v1653, %v1705
    %v1707 = vsel %vm1120, %v1706, %v1702
    %v1708 = vlaneseq
    %v1709 = vshrl.u32 %v1708, 7
    %v1710 = vsub.s32 %v1110, %v1709
    %v1711 = vrot.slane %v1656, %v1710
    %v1712 = vlaneseq
    %v1713 = vshrl.u32 %v1712, 7
    %v1714 = vsub.s32 %v1115, %v1713
    %v1715 = vrot.slane %v1659, %v1714
    %v1716 = vsel %vm1120, %v1715, %v1711
    %v1717 = vlaneseq
    %v1718 = vshrl.u32 %v1717, 7
    %v1719 = vsub.s32 %v1110, %v1718
    %v1720 = vrot.slane %v1662, %v1719
    %v1721 = vlaneseq
    %v1722 = vshrl.u32 %v1721, 7
    %v1723 = vsub.s32 %v1115, %v1722
    %v1724 = vrot.slane %v1665, %v1723
    %v1725 = vsel %vm1120, %v1724, %v1720
    %v1726 = vlaneseq
    %v1727 = vshrl.u32 %v1726, 7
    %v1728 = vsub.s32 %v1110, %v1727
    %v1729 = vrot.slane %v1668, %v1728
    %v1730 = vlaneseq
    %v1731 = vshrl.u32 %v1730, 7
    %v1732 = vsub.s32 %v1115, %v1731
    %v1733 = vrot.slane %v1671, %v1732
    %v1734 = vsel %vm1120, %v1733, %v1729
    %v1735 = vlaneseq
    %v1736 = vshrl.u32 %v1735, 7
    %v1737 = vsub.s32 %v1110, %v1736
    %v1738 = vrot.slane %v1674, %v1737
    %v1739 = vlaneseq
    %v1740 = vshrl.u32 %v1739, 7
    %v1741 = vsub.s32 %v1115, %v1740
    %v1742 = vrot.slane %v1677, %v1741
    %v1743 = vsel %vm1120, %v1742, %v1738
    %v1744 = vlaneseq
    %v1745 = vshrl.u32 %v1744, 7
    %v1746 = vsub.s32 %v1110, %v1745
    %v1747 = vrot.slane %v1680, %v1746
    %v1748 = vlaneseq
    %v1749 = vshrl.u32 %v1748, 7
    %v1750 = vsub.s32 %v1115, %v1749
    %v1751 = vrot.slane %v1683, %v1750
    %v1752 = vsel %vm1120, %v1751, %v1747
    %v1753 = vlaneseq
    %v1754 = vshrl.u32 %v1753, 7
    %v1755 = vsub.s32 %v1110, %v1754
    %v1756 = vrot.slane %v1686, %v1755
    %v1757 = vlaneseq
    %v1758 = vshrl.u32 %v1757, 7
    %v1759 = vsub.s32 %v1115, %v1758
    %v1760 = vrot.slane %v1689, %v1759
    %v1761 = vsel %vm1120, %v1760, %v1756
    %v1762 = vsel %vm590, %v1707, %v1698
    %v1763 = vsel %vm593, %v1716, %v1762
    %v1764 = vsel %vm596, %v1725, %v1763
    %v1765 = vsel %vm599, %v1734, %v1764
    %v1766 = vsel %vm602, %v1743, %v1765
    %v1767 = vsel %vm605, %v1752, %v1766
    %v1768 = vsel %vm608, %v1761, %v1767
    %v1770 = vsel %vm1625, %v1768, %v1193
    %vm1771 = vcmp.gt.s32.totalorder %v15, 3
    %v1773 = vcombine.high %v1770, %v1770
    %v1775 = vunpack.c.l.s4 1966171168
    %v1776 = vunpack.c.0.s8 %v1775
    %v1777 = vlaneseq
    %v1778 = vshrl.u32 %v1777, 7
    %v1779 = vsub.s32 %v1776, %v1778
    %v1780 = vrot.slane %v1770, %v1779
    %v1782 = vunpack.c.l.s4 1966171168
    %v1783 = vunpack.c.0.s8 %v1782
    %v1784 = vlaneseq
    %v1785 = vshrl.u32 %v1784, 7
    %v1786 = vsub.s32 %v1783, %v1785
    %v1787 = vrot.slane %v1773, %v1786
    %v1788 = vcombine.high %v1780, %v1780
    %v1789 = vcombine.high %v1787, %v1787
    %v1791 = vunpack.c.l.s4 1966171168
    %v1792 = vunpack.c.0.s8 %v1791
    %v1793 = vlaneseq
    %v1794 = vshrl.u32 %v1793, 7
    %v1795 = vsub.s32 %v1792, %v1794
    %v1796 = vrot.slane %v1780, %v1795
    %v1798 = vunpack.c.l.s4 1966171168
    %v1799 = vunpack.c.0.s8 %v1798
    %v1800 = vlaneseq
    %v1801 = vshrl.u32 %v1800, 7
    %v1802 = vsub.s32 %v1799, %v1801
    %v1803 = vrot.slane %v1787, %v1802
    %v1805 = vunpack.c.l.s4 1966171168
    %v1806 = vunpack.c.0.s8 %v1805
    %v1807 = vlaneseq
    %v1808 = vshrl.u32 %v1807, 7
    %v1809 = vsub.s32 %v1806, %v1808
    %v1810 = vrot.slane %v1788, %v1809
    %v1812 = vunpack.c.l.s4 1966171168
    %v1813 = vunpack.c.0.s8 %v1812
    %v1814 = vlaneseq
    %v1815 = vshrl.u32 %v1814, 7
    %v1816 = vsub.s32 %v1813, %v1815
    %v1817 = vrot.slane %v1789, %v1816
    %v1818 = vcombine.high %v1796, %v1796
    %v1819 = vcombine.high %v1803, %v1803
    %v1820 = vcombine.high %v1810, %v1810
    %v1821 = vcombine.high %v1817, %v1817
    %v1822 = vlaneseq
    %v1823 = vshrl.u32 %v1822, 7
    %v1824 = vsub.s32 0, %v1823
    %v1825 = vrot.slane %v1796, %v1824
    %v1826 = vlaneseq
    %v1827 = vshrl.u32 %v1826, 7
    %v1828 = vsub.s32 0, %v1827
    %v1829 = vrot.slane %v1810, %v1828
    %v1830 = vlaneseq
    %v1831 = vshrl.u32 %v1830, 7
    %v1832 = vsub.s32 0, %v1831
    %v1833 = vrot.slane %v1818, %v1832
    %v1834 = vlaneseq
    %v1835 = vshrl.u32 %v1834, 7
    %v1836 = vsub.s32 0, %v1835
    %v1837 = vrot.slane %v1820, %v1836
    %v1838 = vlaneseq
    %v1839 = vshrl.u32 %v1838, 7
    %v1840 = vsub.s32 0, %v1839
    %v1841 = vrot.slane %v1803, %v1840
    %v1842 = vlaneseq
    %v1843 = vshrl.u32 %v1842, 7
    %v1844 = vsub.s32 0, %v1843
    %v1845 = vrot.slane %v1817, %v1844
    %v1846 = vlaneseq
    %v1847 = vshrl.u32 %v1846, 7
    %v1848 = vsub.s32 0, %v1847
    %v1849 = vrot.slane %v1819, %v1848
    %v1850 = vlaneseq
    %v1851 = vshrl.u32 %v1850, 7
    %v1852 = vsub.s32 0, %v1851
    %v1853 = vrot.slane %v1821, %v1852
    %v1862 = vadd.f32 %v1825, %v22
    %v1863 = vadd.f32 %v1825, %v23
    %v1864 = vadd.f32 %v1829, %v22
    %v1865 = vadd.f32 %v1829, %v23
    %v1866 = vadd.f32 %v1833, %v22
    %v1867 = vadd.f32 %v1833, %v23
    %v1868 = vadd.f32 %v1837, %v22
    %v1869 = vadd.f32 %v1837, %v23
    %v1870 = vadd.f32 %v1841, %v22
    %v1871 = vadd.f32 %v1841, %v23
    %v1872 = vadd.f32 %v1845, %v22
    %v1873 = vadd.f32 %v1845, %v23
    %v1874 = vadd.f32 %v1849, %v22
    %v1875 = vadd.f32 %v1849, %v23
    %v1876 = vadd.f32 %v1853, %v22
    %v1877 = vadd.f32 %v1853, %v23
    %v1878 = vsel %vm719, %v1862, -inf
    %1879 = vmax.xlane.f32.xlu0 %v1878
    %v1880 = vpop.xlane.xlu0 %1879
    %v1881 = vsel %vm723, %v1863, -inf
    %1882 = vmax.xlane.f32.xlu0 %v1881
    %v1883 = vpop.xlane.xlu0 %1882
    %v1884 = vsel %vm719, %v1864, -inf
    %1885 = vmax.xlane.f32.xlu0 %v1884
    %v1886 = vpop.xlane.xlu0 %1885
    %v1887 = vsel %vm723, %v1865, -inf
    %1888 = vmax.xlane.f32.xlu0 %v1887
    %v1889 = vpop.xlane.xlu0 %1888
    %v1890 = vsel %vm719, %v1866, -inf
    %1891 = vmax.xlane.f32.xlu0 %v1890
    %v1892 = vpop.xlane.xlu0 %1891
    %v1893 = vsel %vm723, %v1867, -inf
    %1894 = vmax.xlane.f32.xlu0 %v1893
    %v1895 = vpop.xlane.xlu0 %1894
    %v1896 = vsel %vm719, %v1868, -inf
    %1897 = vmax.xlane.f32.xlu0 %v1896
    %v1898 = vpop.xlane.xlu0 %1897
    %v1899 = vsel %vm723, %v1869, -inf
    %1900 = vmax.xlane.f32.xlu0 %v1899
    %v1901 = vpop.xlane.xlu0 %1900
    %v1902 = vsel %vm719, %v1870, -inf
    %1903 = vmax.xlane.f32.xlu0 %v1902
    %v1904 = vpop.xlane.xlu0 %1903
    %v1905 = vsel %vm723, %v1871, -inf
    %1906 = vmax.xlane.f32.xlu0 %v1905
    %v1907 = vpop.xlane.xlu0 %1906
    %v1908 = vsel %vm719, %v1872, -inf
    %1909 = vmax.xlane.f32.xlu0 %v1908
    %v1910 = vpop.xlane.xlu0 %1909
    %v1911 = vsel %vm723, %v1873, -inf
    %1912 = vmax.xlane.f32.xlu0 %v1911
    %v1913 = vpop.xlane.xlu0 %1912
    %v1914 = vsel %vm719, %v1874, -inf
    %1915 = vmax.xlane.f32.xlu0 %v1914
    %v1916 = vpop.xlane.xlu0 %1915
    %v1917 = vsel %vm723, %v1875, -inf
    %1918 = vmax.xlane.f32.xlu0 %v1917
    %v1919 = vpop.xlane.xlu0 %1918
    %v1920 = vsel %vm719, %v1876, -inf
    %1921 = vmax.xlane.f32.xlu0 %v1920
    %v1922 = vpop.xlane.xlu0 %1921
    %v1923 = vsel %vm723, %v1877, -inf
    %1924 = vmax.xlane.f32.xlu0 %v1923
    %v1925 = vpop.xlane.xlu0 %1924
    %v1926 = vsub.f32 %v1862, %v1880
    %v1927 = vsub.f32 %v1863, %v1883
    %v1928 = vsub.f32 %v1864, %v1886
    %v1929 = vsub.f32 %v1865, %v1889
    %v1930 = vsub.f32 %v1866, %v1892
    %v1931 = vsub.f32 %v1867, %v1895
    %v1932 = vsub.f32 %v1868, %v1898
    %v1933 = vsub.f32 %v1869, %v1901
    %v1934 = vsub.f32 %v1870, %v1904
    %v1935 = vsub.f32 %v1871, %v1907
    %v1936 = vsub.f32 %v1872, %v1910
    %v1937 = vsub.f32 %v1873, %v1913
    %v1938 = vsub.f32 %v1874, %v1916
    %v1939 = vsub.f32 %v1875, %v1919
    %v1940 = vsub.f32 %v1876, %v1922
    %v1941 = vsub.f32 %v1877, %v1925
    %v1942 = vmul.f32 %v1926, 1.442695
    %v1943 = vpow.pop %v1942
    %v1944 = vmul.f32 %v1927, 1.442695
    %v1945 = vpow.pop %v1944
    %v1946 = vmul.f32 %v1928, 1.442695
    %v1947 = vpow.pop %v1946
    %v1948 = vmul.f32 %v1929, 1.442695
    %v1949 = vpow.pop %v1948
    %v1950 = vmul.f32 %v1930, 1.442695
    %v1951 = vpow.pop %v1950
    %v1952 = vmul.f32 %v1931, 1.442695
    %v1953 = vpow.pop %v1952
    %v1954 = vmul.f32 %v1932, 1.442695
    %v1955 = vpow.pop %v1954
    %v1956 = vmul.f32 %v1933, 1.442695
    %v1957 = vpow.pop %v1956
    %v1958 = vmul.f32 %v1934, 1.442695
    %v1959 = vpow.pop %v1958
    %v1960 = vmul.f32 %v1935, 1.442695
    %v1961 = vpow.pop %v1960
    %v1962 = vmul.f32 %v1936, 1.442695
    %v1963 = vpow.pop %v1962
    %v1964 = vmul.f32 %v1937, 1.442695
    %v1965 = vpow.pop %v1964
    %v1966 = vmul.f32 %v1938, 1.442695
    %v1967 = vpow.pop %v1966
    %v1968 = vmul.f32 %v1939, 1.442695
    %v1969 = vpow.pop %v1968
    %v1970 = vmul.f32 %v1940, 1.442695
    %v1971 = vpow.pop %v1970
    %v1972 = vmul.f32 %v1941, 1.442695
    %v1973 = vpow.pop %v1972
    %v1974 = vsel %vm719, %v1943, 0.0
    %1975 = vadd.xlane.f32.xlu0 %v1974
    %v1976 = vpop.xlane.xlu0 %1975
    %v1977 = vsel %vm723, %v1945, 0.0
    %1978 = vadd.xlane.f32.xlu0 %v1977
    %v1979 = vpop.xlane.xlu0 %1978
    %v1980 = vsel %vm719, %v1947, 0.0
    %1981 = vadd.xlane.f32.xlu0 %v1980
    %v1982 = vpop.xlane.xlu0 %1981
    %v1983 = vsel %vm723, %v1949, 0.0
    %1984 = vadd.xlane.f32.xlu0 %v1983
    %v1985 = vpop.xlane.xlu0 %1984
    %v1986 = vsel %vm719, %v1951, 0.0
    %1987 = vadd.xlane.f32.xlu0 %v1986
    %v1988 = vpop.xlane.xlu0 %1987
    %v1989 = vsel %vm723, %v1953, 0.0
    %1990 = vadd.xlane.f32.xlu0 %v1989
    %v1991 = vpop.xlane.xlu0 %1990
    %v1992 = vsel %vm719, %v1955, 0.0
    %1993 = vadd.xlane.f32.xlu0 %v1992
    %v1994 = vpop.xlane.xlu0 %1993
    %v1995 = vsel %vm723, %v1957, 0.0
    %1996 = vadd.xlane.f32.xlu0 %v1995
    %v1997 = vpop.xlane.xlu0 %1996
    %v1998 = vsel %vm719, %v1959, 0.0
    %1999 = vadd.xlane.f32.xlu0 %v1998
    %v2000 = vpop.xlane.xlu0 %1999
    %v2001 = vsel %vm723, %v1961, 0.0
    %2002 = vadd.xlane.f32.xlu0 %v2001
    %v2003 = vpop.xlane.xlu0 %2002
    %v2004 = vsel %vm719, %v1963, 0.0
    %2005 = vadd.xlane.f32.xlu0 %v2004
    %v2006 = vpop.xlane.xlu0 %2005
    %v2007 = vsel %vm723, %v1965, 0.0
    %2008 = vadd.xlane.f32.xlu0 %v2007
    %v2009 = vpop.xlane.xlu0 %2008
    %v2010 = vsel %vm719, %v1967, 0.0
    %2011 = vadd.xlane.f32.xlu0 %v2010
    %v2012 = vpop.xlane.xlu0 %2011
    %v2013 = vsel %vm723, %v1969, 0.0
    %2014 = vadd.xlane.f32.xlu0 %v2013
    %v2015 = vpop.xlane.xlu0 %2014
    %v2016 = vsel %vm719, %v1971, 0.0
    %2017 = vadd.xlane.f32.xlu0 %v2016
    %v2018 = vpop.xlane.xlu0 %2017
    %v2019 = vsel %vm723, %v1973, 0.0
    %2020 = vadd.xlane.f32.xlu0 %v2019
    %v2021 = vpop.xlane.xlu0 %2020
    %v2022 = vlog2.pop %v1976
    %v2023 = vmul.f32 %v2022, 0.6931472
    %v2024 = vlog2.pop %v1979
    %v2025 = vmul.f32 %v2024, 0.6931472
    %v2026 = vlog2.pop %v1982
    %v2027 = vmul.f32 %v2026, 0.6931472
    %v2028 = vlog2.pop %v1985
    %v2029 = vmul.f32 %v2028, 0.6931472
    %v2030 = vlog2.pop %v1988
    %v2031 = vmul.f32 %v2030, 0.6931472
    %v2032 = vlog2.pop %v1991
    %v2033 = vmul.f32 %v2032, 0.6931472
    %v2034 = vlog2.pop %v1994
    %v2035 = vmul.f32 %v2034, 0.6931472
    %v2036 = vlog2.pop %v1997
    %v2037 = vmul.f32 %v2036, 0.6931472
    %v2038 = vlog2.pop %v2000
    %v2039 = vmul.f32 %v2038, 0.6931472
    %v2040 = vlog2.pop %v2003
    %v2041 = vmul.f32 %v2040, 0.6931472
    %v2042 = vlog2.pop %v2006
    %v2043 = vmul.f32 %v2042, 0.6931472
    %v2044 = vlog2.pop %v2009
    %v2045 = vmul.f32 %v2044, 0.6931472
    %v2046 = vlog2.pop %v2012
    %v2047 = vmul.f32 %v2046, 0.6931472
    %v2048 = vlog2.pop %v2015
    %v2049 = vmul.f32 %v2048, 0.6931472
    %v2050 = vlog2.pop %v2018
    %v2051 = vmul.f32 %v2050, 0.6931472
    %v2052 = vlog2.pop %v2021
    %v2053 = vmul.f32 %v2052, 0.6931472
    %v2054 = vadd.f32 %v1880, %v2023
    %v2055 = vadd.f32 %v1883, %v2025
    %v2056 = vadd.f32 %v1886, %v2027
    %v2057 = vadd.f32 %v1889, %v2029
    %v2058 = vadd.f32 %v1892, %v2031
    %v2059 = vadd.f32 %v1895, %v2033
    %v2060 = vadd.f32 %v1898, %v2035
    %v2061 = vadd.f32 %v1901, %v2037
    %v2062 = vadd.f32 %v1904, %v2039
    %v2063 = vadd.f32 %v1907, %v2041
    %v2064 = vadd.f32 %v1910, %v2043
    %v2065 = vadd.f32 %v1913, %v2045
    %v2066 = vadd.f32 %v1916, %v2047
    %v2067 = vadd.f32 %v1919, %v2049
    %v2068 = vadd.f32 %v1922, %v2051
    %v2069 = vadd.f32 %v1925, %v2053
    %v2070 = vlaneseq
    %v2071 = vshrl.u32 %v2070, 7
    %v2072 = vsub.s32 3, %v2071
    %v2073 = vrot.slane %v513, %v2072
    %s2075 = sor.u32 256, 253
    %2076 = vbcast.lane.b32.xlu0 %v2073, %s2075
    %v2077 = vpop.permute.xlu0 %2076
    %s2079 = sor.u32 256, 5
    %2080 = vbcast.lane.b32.xlu0 %v2073, %s2079
    %v2081 = vpop.permute.xlu0 %2080
    %v2082 = vlaneseq
    %v2083 = vshrl.u32 %v2082, 7
    %v2084 = vsub.s32 3, %v2083
    %v2085 = vrot.slane %v514, %v2084
    %s2087 = sor.u32 256, 253
    %2088 = vbcast.lane.b32.xlu0 %v2085, %s2087
    %v2089 = vpop.permute.xlu0 %2088
    %s2091 = sor.u32 256, 5
    %2092 = vbcast.lane.b32.xlu0 %v2085, %s2091
    %v2093 = vpop.permute.xlu0 %2092
    %v2094 = vlaneseq
    %v2095 = vshrl.u32 %v2094, 7
    %v2096 = vsub.s32 3, %v2095
    %v2097 = vrot.slane %v515, %v2096
    %s2099 = sor.u32 256, 253
    %2100 = vbcast.lane.b32.xlu0 %v2097, %s2099
    %v2101 = vpop.permute.xlu0 %2100
    %s2103 = sor.u32 256, 5
    %2104 = vbcast.lane.b32.xlu0 %v2097, %s2103
    %v2105 = vpop.permute.xlu0 %2104
    %v2106 = vlaneseq
    %v2107 = vshrl.u32 %v2106, 7
    %v2108 = vsub.s32 3, %v2107
    %v2109 = vrot.slane %v516, %v2108
    %s2111 = sor.u32 256, 253
    %2112 = vbcast.lane.b32.xlu0 %v2109, %s2111
    %v2113 = vpop.permute.xlu0 %2112
    %s2115 = sor.u32 256, 5
    %2116 = vbcast.lane.b32.xlu0 %v2109, %s2115
    %v2117 = vpop.permute.xlu0 %2116
    %v2118 = vlaneseq
    %v2119 = vshrl.u32 %v2118, 7
    %v2120 = vsub.s32 3, %v2119
    %v2121 = vrot.slane %v517, %v2120
    %s2123 = sor.u32 256, 253
    %2124 = vbcast.lane.b32.xlu0 %v2121, %s2123
    %v2125 = vpop.permute.xlu0 %2124
    %s2127 = sor.u32 256, 5
    %2128 = vbcast.lane.b32.xlu0 %v2121, %s2127
    %v2129 = vpop.permute.xlu0 %2128
    %v2130 = vlaneseq
    %v2131 = vshrl.u32 %v2130, 7
    %v2132 = vsub.s32 3, %v2131
    %v2133 = vrot.slane %v518, %v2132
    %s2135 = sor.u32 256, 253
    %2136 = vbcast.lane.b32.xlu0 %v2133, %s2135
    %v2137 = vpop.permute.xlu0 %2136
    %s2139 = sor.u32 256, 5
    %2140 = vbcast.lane.b32.xlu0 %v2133, %s2139
    %v2141 = vpop.permute.xlu0 %2140
    %v2142 = vlaneseq
    %v2143 = vshrl.u32 %v2142, 7
    %v2144 = vsub.s32 3, %v2143
    %v2145 = vrot.slane %v519, %v2144
    %s2147 = sor.u32 256, 253
    %2148 = vbcast.lane.b32.xlu0 %v2145, %s2147
    %v2149 = vpop.permute.xlu0 %2148
    %s2151 = sor.u32 256, 5
    %2152 = vbcast.lane.b32.xlu0 %v2145, %s2151
    %v2153 = vpop.permute.xlu0 %2152
    %v2154 = vlaneseq
    %v2155 = vshrl.u32 %v2154, 7
    %v2156 = vsub.s32 3, %v2155
    %v2157 = vrot.slane %v520, %v2156
    %s2159 = sor.u32 256, 253
    %2160 = vbcast.lane.b32.xlu0 %v2157, %s2159
    %v2161 = vpop.permute.xlu0 %2160
    %s2163 = sor.u32 256, 5
    %2164 = vbcast.lane.b32.xlu0 %v2157, %s2163
    %v2165 = vpop.permute.xlu0 %2164
    %v2182 = vadd.f32 %v2054, %v2077
    %v2183 = vadd.f32 %v2055, %v2081
    %v2184 = vadd.f32 %v2056, %v2089
    %v2185 = vadd.f32 %v2057, %v2093
    %v2186 = vadd.f32 %v2058, %v2101
    %v2187 = vadd.f32 %v2059, %v2105
    %v2188 = vadd.f32 %v2060, %v2113
    %v2189 = vadd.f32 %v2061, %v2117
    %v2190 = vadd.f32 %v2062, %v2125
    %v2191 = vadd.f32 %v2063, %v2129
    %v2192 = vadd.f32 %v2064, %v2137
    %v2193 = vadd.f32 %v2065, %v2141
    %v2194 = vadd.f32 %v2066, %v2149
    %v2195 = vadd.f32 %v2067, %v2153
    %v2196 = vadd.f32 %v2068, %v2161
    %v2197 = vadd.f32 %v2069, %v2165
    %v2198 = vsel %vm1771, 1, 0
    %2199 = vset.pattern.permute.xlu0 28
    %2200 = vperm.xlu0 %2199, %v2198
    %v2201 = vpop.permute.xlu0 %2200
    %vm2202 = vcmp.eq.s32.totalorder %v2201, 1
    %2219 = vset.pattern.permute.xlu0 0
    %2220 = vperm.xlu0 %2219, %v2182
    %v2221 = vpop.permute.xlu0 %2220
    %2222 = vset.pattern.permute.xlu0 0
    %2223 = vperm.xlu0 %2222, %v2183
    %v2224 = vpop.permute.xlu0 %2223
    %2225 = vset.pattern.permute.xlu0 0
    %2226 = vperm.xlu0 %2225, %v2184
    %v2227 = vpop.permute.xlu0 %2226
    %2228 = vset.pattern.permute.xlu0 0
    %2229 = vperm.xlu0 %2228, %v2185
    %v2230 = vpop.permute.xlu0 %2229
    %2231 = vset.pattern.permute.xlu0 0
    %2232 = vperm.xlu0 %2231, %v2186
    %v2233 = vpop.permute.xlu0 %2232
    %2234 = vset.pattern.permute.xlu0 0
    %2235 = vperm.xlu0 %2234, %v2187
    %v2236 = vpop.permute.xlu0 %2235
    %2237 = vset.pattern.permute.xlu0 0
    %2238 = vperm.xlu0 %2237, %v2188
    %v2239 = vpop.permute.xlu0 %2238
    %2240 = vset.pattern.permute.xlu0 0
    %2241 = vperm.xlu0 %2240, %v2189
    %v2242 = vpop.permute.xlu0 %2241
    %2243 = vset.pattern.permute.xlu0 0
    %2244 = vperm.xlu0 %2243, %v2190
    %v2245 = vpop.permute.xlu0 %2244
    %2246 = vset.pattern.permute.xlu0 0
    %2247 = vperm.xlu0 %2246, %v2191
    %v2248 = vpop.permute.xlu0 %2247
    %2249 = vset.pattern.permute.xlu0 0
    %2250 = vperm.xlu0 %2249, %v2192
    %v2251 = vpop.permute.xlu0 %2250
    %2252 = vset.pattern.permute.xlu0 0
    %2253 = vperm.xlu0 %2252, %v2193
    %v2254 = vpop.permute.xlu0 %2253
    %2255 = vset.pattern.permute.xlu0 0
    %2256 = vperm.xlu0 %2255, %v2194
    %v2257 = vpop.permute.xlu0 %2256
    %2258 = vset.pattern.permute.xlu0 0
    %2259 = vperm.xlu0 %2258, %v2195
    %v2260 = vpop.permute.xlu0 %2259
    %2261 = vset.pattern.permute.xlu0 0
    %2262 = vperm.xlu0 %2261, %v2196
    %v2263 = vpop.permute.xlu0 %2262
    %2264 = vset.pattern.permute.xlu0 0
    %2265 = vperm.xlu0 %2264, %v2197
    %v2266 = vpop.permute.xlu0 %2265
    %v2267 = vlaneseq
    %v2268 = vshrl.u32 %v2267, 7
    %v2269 = vsub.s32 %v1110, %v2268
    %v2270 = vrot.slane %v2221, %v2269
    %v2271 = vlaneseq
    %v2272 = vshrl.u32 %v2271, 7
    %v2273 = vsub.s32 %v1115, %v2272
    %v2274 = vrot.slane %v2224, %v2273
    %v2275 = vsel %vm1120, %v2274, %v2270
    %v2276 = vlaneseq
    %v2277 = vshrl.u32 %v2276, 7
    %v2278 = vsub.s32 %v1110, %v2277
    %v2279 = vrot.slane %v2227, %v2278
    %v2280 = vlaneseq
    %v2281 = vshrl.u32 %v2280, 7
    %v2282 = vsub.s32 %v1115, %v2281
    %v2283 = vrot.slane %v2230, %v2282
    %v2284 = vsel %vm1120, %v2283, %v2279
    %v2285 = vlaneseq
    %v2286 = vshrl.u32 %v2285, 7
    %v2287 = vsub.s32 %v1110, %v2286
    %v2288 = vrot.slane %v2233, %v2287
    %v2289 = vlaneseq
    %v2290 = vshrl.u32 %v2289, 7
    %v2291 = vsub.s32 %v1115, %v2290
    %v2292 = vrot.slane %v2236, %v2291
    %v2293 = vsel %vm1120, %v2292, %v2288
    %v2294 = vlaneseq
    %v2295 = vshrl.u32 %v2294, 7
    %v2296 = vsub.s32 %v1110, %v2295
    %v2297 = vrot.slane %v2239, %v2296
    %v2298 = vlaneseq
    %v2299 = vshrl.u32 %v2298, 7
    %v2300 = vsub.s32 %v1115, %v2299
    %v2301 = vrot.slane %v2242, %v2300
    %v2302 = vsel %vm1120, %v2301, %v2297
    %v2303 = vlaneseq
    %v2304 = vshrl.u32 %v2303, 7
    %v2305 = vsub.s32 %v1110, %v2304
    %v2306 = vrot.slane %v2245, %v2305
    %v2307 = vlaneseq
    %v2308 = vshrl.u32 %v2307, 7
    %v2309 = vsub.s32 %v1115, %v2308
    %v2310 = vrot.slane %v2248, %v2309
    %v2311 = vsel %vm1120, %v2310, %v2306
    %v2312 = vlaneseq
    %v2313 = vshrl.u32 %v2312, 7
    %v2314 = vsub.s32 %v1110, %v2313
    %v2315 = vrot.slane %v2251, %v2314
    %v2316 = vlaneseq
    %v2317 = vshrl.u32 %v2316, 7
    %v2318 = vsub.s32 %v1115, %v2317
    %v2319 = vrot.slane %v2254, %v2318
    %v2320 = vsel %vm1120, %v2319, %v2315
    %v2321 = vlaneseq
    %v2322 = vshrl.u32 %v2321, 7
    %v2323 = vsub.s32 %v1110, %v2322
    %v2324 = vrot.slane %v2257, %v2323
    %v2325 = vlaneseq
    %v2326 = vshrl.u32 %v2325, 7
    %v2327 = vsub.s32 %v1115, %v2326
    %v2328 = vrot.slane %v2260, %v2327
    %v2329 = vsel %vm1120, %v2328, %v2324
    %v2330 = vlaneseq
    %v2331 = vshrl.u32 %v2330, 7
    %v2332 = vsub.s32 %v1110, %v2331
    %v2333 = vrot.slane %v2263, %v2332
    %v2334 = vlaneseq
    %v2335 = vshrl.u32 %v2334, 7
    %v2336 = vsub.s32 %v1115, %v2335
    %v2337 = vrot.slane %v2266, %v2336
    %v2338 = vsel %vm1120, %v2337, %v2333
    %v2339 = vsel %vm590, %v2284, %v2275
    %v2340 = vsel %vm593, %v2293, %v2339
    %v2341 = vsel %vm596, %v2302, %v2340
    %v2342 = vsel %vm599, %v2311, %v2341
    %v2343 = vsel %vm602, %v2320, %v2342
    %v2344 = vsel %vm605, %v2329, %v2343
    %v2345 = vsel %vm608, %v2338, %v2344
    %v2347 = vsel %vm2202, %v2345, %v1770
    %vm2348 = vcmp.gt.s32.totalorder %v15, 4
    %v2350 = vcombine.high %v2347, %v2347
    %v2352 = vunpack.c.l.s4 1966171168
    %v2353 = vunpack.c.0.s8 %v2352
    %v2354 = vlaneseq
    %v2355 = vshrl.u32 %v2354, 7
    %v2356 = vsub.s32 %v2353, %v2355
    %v2357 = vrot.slane %v2347, %v2356
    %v2359 = vunpack.c.l.s4 1966171168
    %v2360 = vunpack.c.0.s8 %v2359
    %v2361 = vlaneseq
    %v2362 = vshrl.u32 %v2361, 7
    %v2363 = vsub.s32 %v2360, %v2362
    %v2364 = vrot.slane %v2350, %v2363
    %v2365 = vcombine.high %v2357, %v2357
    %v2366 = vcombine.high %v2364, %v2364
    %v2368 = vunpack.c.l.s4 1966171168
    %v2369 = vunpack.c.0.s8 %v2368
    %v2370 = vlaneseq
    %v2371 = vshrl.u32 %v2370, 7
    %v2372 = vsub.s32 %v2369, %v2371
    %v2373 = vrot.slane %v2357, %v2372
    %v2375 = vunpack.c.l.s4 1966171168
    %v2376 = vunpack.c.0.s8 %v2375
    %v2377 = vlaneseq
    %v2378 = vshrl.u32 %v2377, 7
    %v2379 = vsub.s32 %v2376, %v2378
    %v2380 = vrot.slane %v2364, %v2379
    %v2382 = vunpack.c.l.s4 1966171168
    %v2383 = vunpack.c.0.s8 %v2382
    %v2384 = vlaneseq
    %v2385 = vshrl.u32 %v2384, 7
    %v2386 = vsub.s32 %v2383, %v2385
    %v2387 = vrot.slane %v2365, %v2386
    %v2389 = vunpack.c.l.s4 1966171168
    %v2390 = vunpack.c.0.s8 %v2389
    %v2391 = vlaneseq
    %v2392 = vshrl.u32 %v2391, 7
    %v2393 = vsub.s32 %v2390, %v2392
    %v2394 = vrot.slane %v2366, %v2393
    %v2395 = vcombine.high %v2373, %v2373
    %v2396 = vcombine.high %v2380, %v2380
    %v2397 = vcombine.high %v2387, %v2387
    %v2398 = vcombine.high %v2394, %v2394
    %v2399 = vlaneseq
    %v2400 = vshrl.u32 %v2399, 7
    %v2401 = vsub.s32 0, %v2400
    %v2402 = vrot.slane %v2373, %v2401
    %v2403 = vlaneseq
    %v2404 = vshrl.u32 %v2403, 7
    %v2405 = vsub.s32 0, %v2404
    %v2406 = vrot.slane %v2387, %v2405
    %v2407 = vlaneseq
    %v2408 = vshrl.u32 %v2407, 7
    %v2409 = vsub.s32 0, %v2408
    %v2410 = vrot.slane %v2395, %v2409
    %v2411 = vlaneseq
    %v2412 = vshrl.u32 %v2411, 7
    %v2413 = vsub.s32 0, %v2412
    %v2414 = vrot.slane %v2397, %v2413
    %v2415 = vlaneseq
    %v2416 = vshrl.u32 %v2415, 7
    %v2417 = vsub.s32 0, %v2416
    %v2418 = vrot.slane %v2380, %v2417
    %v2419 = vlaneseq
    %v2420 = vshrl.u32 %v2419, 7
    %v2421 = vsub.s32 0, %v2420
    %v2422 = vrot.slane %v2394, %v2421
    %v2423 = vlaneseq
    %v2424 = vshrl.u32 %v2423, 7
    %v2425 = vsub.s32 0, %v2424
    %v2426 = vrot.slane %v2396, %v2425
    %v2427 = vlaneseq
    %v2428 = vshrl.u32 %v2427, 7
    %v2429 = vsub.s32 0, %v2428
    %v2430 = vrot.slane %v2398, %v2429
    %v2439 = vadd.f32 %v2402, %v22
    %v2440 = vadd.f32 %v2402, %v23
    %v2441 = vadd.f32 %v2406, %v22
    %v2442 = vadd.f32 %v2406, %v23
    %v2443 = vadd.f32 %v2410, %v22
    %v2444 = vadd.f32 %v2410, %v23
    %v2445 = vadd.f32 %v2414, %v22
    %v2446 = vadd.f32 %v2414, %v23
    %v2447 = vadd.f32 %v2418, %v22
    %v2448 = vadd.f32 %v2418, %v23
    %v2449 = vadd.f32 %v2422, %v22
    %v2450 = vadd.f32 %v2422, %v23
    %v2451 = vadd.f32 %v2426, %v22
    %v2452 = vadd.f32 %v2426, %v23
    %v2453 = vadd.f32 %v2430, %v22
    %v2454 = vadd.f32 %v2430, %v23
    %v2455 = vsel %vm719, %v2439, -inf
    %2456 = vmax.xlane.f32.xlu0 %v2455
    %v2457 = vpop.xlane.xlu0 %2456
    %v2458 = vsel %vm723, %v2440, -inf
    %2459 = vmax.xlane.f32.xlu0 %v2458
    %v2460 = vpop.xlane.xlu0 %2459
    %v2461 = vsel %vm719, %v2441, -inf
    %2462 = vmax.xlane.f32.xlu0 %v2461
    %v2463 = vpop.xlane.xlu0 %2462
    %v2464 = vsel %vm723, %v2442, -inf
    %2465 = vmax.xlane.f32.xlu0 %v2464
    %v2466 = vpop.xlane.xlu0 %2465
    %v2467 = vsel %vm719, %v2443, -inf
    %2468 = vmax.xlane.f32.xlu0 %v2467
    %v2469 = vpop.xlane.xlu0 %2468
    %v2470 = vsel %vm723, %v2444, -inf
    %2471 = vmax.xlane.f32.xlu0 %v2470
    %v2472 = vpop.xlane.xlu0 %2471
    %v2473 = vsel %vm719, %v2445, -inf
    %2474 = vmax.xlane.f32.xlu0 %v2473
    %v2475 = vpop.xlane.xlu0 %2474
    %v2476 = vsel %vm723, %v2446, -inf
    %2477 = vmax.xlane.f32.xlu0 %v2476
    %v2478 = vpop.xlane.xlu0 %2477
    %v2479 = vsel %vm719, %v2447, -inf
    %2480 = vmax.xlane.f32.xlu0 %v2479
    %v2481 = vpop.xlane.xlu0 %2480
    %v2482 = vsel %vm723, %v2448, -inf
    %2483 = vmax.xlane.f32.xlu0 %v2482
    %v2484 = vpop.xlane.xlu0 %2483
    %v2485 = vsel %vm719, %v2449, -inf
    %2486 = vmax.xlane.f32.xlu0 %v2485
    %v2487 = vpop.xlane.xlu0 %2486
    %v2488 = vsel %vm723, %v2450, -inf
    %2489 = vmax.xlane.f32.xlu0 %v2488
    %v2490 = vpop.xlane.xlu0 %2489
    %v2491 = vsel %vm719, %v2451, -inf
    %2492 = vmax.xlane.f32.xlu0 %v2491
    %v2493 = vpop.xlane.xlu0 %2492
    %v2494 = vsel %vm723, %v2452, -inf
    %2495 = vmax.xlane.f32.xlu0 %v2494
    %v2496 = vpop.xlane.xlu0 %2495
    %v2497 = vsel %vm719, %v2453, -inf
    %2498 = vmax.xlane.f32.xlu0 %v2497
    %v2499 = vpop.xlane.xlu0 %2498
    %v2500 = vsel %vm723, %v2454, -inf
    %2501 = vmax.xlane.f32.xlu0 %v2500
    %v2502 = vpop.xlane.xlu0 %2501
    %v2503 = vsub.f32 %v2439, %v2457
    %v2504 = vsub.f32 %v2440, %v2460
    %v2505 = vsub.f32 %v2441, %v2463
    %v2506 = vsub.f32 %v2442, %v2466
    %v2507 = vsub.f32 %v2443, %v2469
    %v2508 = vsub.f32 %v2444, %v2472
    %v2509 = vsub.f32 %v2445, %v2475
    %v2510 = vsub.f32 %v2446, %v2478
    %v2511 = vsub.f32 %v2447, %v2481
    %v2512 = vsub.f32 %v2448, %v2484
    %v2513 = vsub.f32 %v2449, %v2487
    %v2514 = vsub.f32 %v2450, %v2490
    %v2515 = vsub.f32 %v2451, %v2493
    %v2516 = vsub.f32 %v2452, %v2496
    %v2517 = vsub.f32 %v2453, %v2499
    %v2518 = vsub.f32 %v2454, %v2502
    %v2519 = vmul.f32 %v2503, 1.442695
    %v2520 = vpow.pop %v2519
    %v2521 = vmul.f32 %v2504, 1.442695
    %v2522 = vpow.pop %v2521
    %v2523 = vmul.f32 %v2505, 1.442695
    %v2524 = vpow.pop %v2523
    %v2525 = vmul.f32 %v2506, 1.442695
    %v2526 = vpow.pop %v2525
    %v2527 = vmul.f32 %v2507, 1.442695
    %v2528 = vpow.pop %v2527
    %v2529 = vmul.f32 %v2508, 1.442695
    %v2530 = vpow.pop %v2529
    %v2531 = vmul.f32 %v2509, 1.442695
    %v2532 = vpow.pop %v2531
    %v2533 = vmul.f32 %v2510, 1.442695
    %v2534 = vpow.pop %v2533
    %v2535 = vmul.f32 %v2511, 1.442695
    %v2536 = vpow.pop %v2535
    %v2537 = vmul.f32 %v2512, 1.442695
    %v2538 = vpow.pop %v2537
    %v2539 = vmul.f32 %v2513, 1.442695
    %v2540 = vpow.pop %v2539
    %v2541 = vmul.f32 %v2514, 1.442695
    %v2542 = vpow.pop %v2541
    %v2543 = vmul.f32 %v2515, 1.442695
    %v2544 = vpow.pop %v2543
    %v2545 = vmul.f32 %v2516, 1.442695
    %v2546 = vpow.pop %v2545
    %v2547 = vmul.f32 %v2517, 1.442695
    %v2548 = vpow.pop %v2547
    %v2549 = vmul.f32 %v2518, 1.442695
    %v2550 = vpow.pop %v2549
    %v2551 = vsel %vm719, %v2520, 0.0
    %2552 = vadd.xlane.f32.xlu0 %v2551
    %v2553 = vpop.xlane.xlu0 %2552
    %v2554 = vsel %vm723, %v2522, 0.0
    %2555 = vadd.xlane.f32.xlu0 %v2554
    %v2556 = vpop.xlane.xlu0 %2555
    %v2557 = vsel %vm719, %v2524, 0.0
    %2558 = vadd.xlane.f32.xlu0 %v2557
    %v2559 = vpop.xlane.xlu0 %2558
    %v2560 = vsel %vm723, %v2526, 0.0
    %2561 = vadd.xlane.f32.xlu0 %v2560
    %v2562 = vpop.xlane.xlu0 %2561
    %v2563 = vsel %vm719, %v2528, 0.0
    %2564 = vadd.xlane.f32.xlu0 %v2563
    %v2565 = vpop.xlane.xlu0 %2564
    %v2566 = vsel %vm723, %v2530, 0.0
    %2567 = vadd.xlane.f32.xlu0 %v2566
    %v2568 = vpop.xlane.xlu0 %2567
    %v2569 = vsel %vm719, %v2532, 0.0
    %2570 = vadd.xlane.f32.xlu0 %v2569
    %v2571 = vpop.xlane.xlu0 %2570
    %v2572 = vsel %vm723, %v2534, 0.0
    %2573 = vadd.xlane.f32.xlu0 %v2572
    %v2574 = vpop.xlane.xlu0 %2573
    %v2575 = vsel %vm719, %v2536, 0.0
    %2576 = vadd.xlane.f32.xlu0 %v2575
    %v2577 = vpop.xlane.xlu0 %2576
    %v2578 = vsel %vm723, %v2538, 0.0
    %2579 = vadd.xlane.f32.xlu0 %v2578
    %v2580 = vpop.xlane.xlu0 %2579
    %v2581 = vsel %vm719, %v2540, 0.0
    %2582 = vadd.xlane.f32.xlu0 %v2581
    %v2583 = vpop.xlane.xlu0 %2582
    %v2584 = vsel %vm723, %v2542, 0.0
    %2585 = vadd.xlane.f32.xlu0 %v2584
    %v2586 = vpop.xlane.xlu0 %2585
    %v2587 = vsel %vm719, %v2544, 0.0
    %2588 = vadd.xlane.f32.xlu0 %v2587
    %v2589 = vpop.xlane.xlu0 %2588
    %v2590 = vsel %vm723, %v2546, 0.0
    %2591 = vadd.xlane.f32.xlu0 %v2590
    %v2592 = vpop.xlane.xlu0 %2591
    %v2593 = vsel %vm719, %v2548, 0.0
    %2594 = vadd.xlane.f32.xlu0 %v2593
    %v2595 = vpop.xlane.xlu0 %2594
    %v2596 = vsel %vm723, %v2550, 0.0
    %2597 = vadd.xlane.f32.xlu0 %v2596
    %v2598 = vpop.xlane.xlu0 %2597
    %v2599 = vlog2.pop %v2553
    %v2600 = vmul.f32 %v2599, 0.6931472
    %v2601 = vlog2.pop %v2556
    %v2602 = vmul.f32 %v2601, 0.6931472
    %v2603 = vlog2.pop %v2559
    %v2604 = vmul.f32 %v2603, 0.6931472
    %v2605 = vlog2.pop %v2562
    %v2606 = vmul.f32 %v2605, 0.6931472
    %v2607 = vlog2.pop %v2565
    %v2608 = vmul.f32 %v2607, 0.6931472
    %v2609 = vlog2.pop %v2568
    %v2610 = vmul.f32 %v2609, 0.6931472
    %v2611 = vlog2.pop %v2571
    %v2612 = vmul.f32 %v2611, 0.6931472
    %v2613 = vlog2.pop %v2574
    %v2614 = vmul.f32 %v2613, 0.6931472
    %v2615 = vlog2.pop %v2577
    %v2616 = vmul.f32 %v2615, 0.6931472
    %v2617 = vlog2.pop %v2580
    %v2618 = vmul.f32 %v2617, 0.6931472
    %v2619 = vlog2.pop %v2583
    %v2620 = vmul.f32 %v2619, 0.6931472
    %v2621 = vlog2.pop %v2586
    %v2622 = vmul.f32 %v2621, 0.6931472
    %v2623 = vlog2.pop %v2589
    %v2624 = vmul.f32 %v2623, 0.6931472
    %v2625 = vlog2.pop %v2592
    %v2626 = vmul.f32 %v2625, 0.6931472
    %v2627 = vlog2.pop %v2595
    %v2628 = vmul.f32 %v2627, 0.6931472
    %v2629 = vlog2.pop %v2598
    %v2630 = vmul.f32 %v2629, 0.6931472
    %v2631 = vadd.f32 %v2457, %v2600
    %v2632 = vadd.f32 %v2460, %v2602
    %v2633 = vadd.f32 %v2463, %v2604
    %v2634 = vadd.f32 %v2466, %v2606
    %v2635 = vadd.f32 %v2469, %v2608
    %v2636 = vadd.f32 %v2472, %v2610
    %v2637 = vadd.f32 %v2475, %v2612
    %v2638 = vadd.f32 %v2478, %v2614
    %v2639 = vadd.f32 %v2481, %v2616
    %v2640 = vadd.f32 %v2484, %v2618
    %v2641 = vadd.f32 %v2487, %v2620
    %v2642 = vadd.f32 %v2490, %v2622
    %v2643 = vadd.f32 %v2493, %v2624
    %v2644 = vadd.f32 %v2496, %v2626
    %v2645 = vadd.f32 %v2499, %v2628
    %v2646 = vadd.f32 %v2502, %v2630
    %v2647 = vlaneseq
    %v2648 = vshrl.u32 %v2647, 7
    %v2649 = vsub.s32 4, %v2648
    %v2650 = vrot.slane %v513, %v2649
    %s2652 = sor.u32 256, 253
    %2653 = vbcast.lane.b32.xlu0 %v2650, %s2652
    %v2654 = vpop.permute.xlu0 %2653
    %s2656 = sor.u32 256, 5
    %2657 = vbcast.lane.b32.xlu0 %v2650, %s2656
    %v2658 = vpop.permute.xlu0 %2657
    %v2659 = vlaneseq
    %v2660 = vshrl.u32 %v2659, 7
    %v2661 = vsub.s32 4, %v2660
    %v2662 = vrot.slane %v514, %v2661
    %s2664 = sor.u32 256, 253
    %2665 = vbcast.lane.b32.xlu0 %v2662, %s2664
    %v2666 = vpop.permute.xlu0 %2665
    %s2668 = sor.u32 256, 5
    %2669 = vbcast.lane.b32.xlu0 %v2662, %s2668
    %v2670 = vpop.permute.xlu0 %2669
    %v2671 = vlaneseq
    %v2672 = vshrl.u32 %v2671, 7
    %v2673 = vsub.s32 4, %v2672
    %v2674 = vrot.slane %v515, %v2673
    %s2676 = sor.u32 256, 253
    %2677 = vbcast.lane.b32.xlu0 %v2674, %s2676
    %v2678 = vpop.permute.xlu0 %2677
    %s2680 = sor.u32 256, 5
    %2681 = vbcast.lane.b32.xlu0 %v2674, %s2680
    %v2682 = vpop.permute.xlu0 %2681
    %v2683 = vlaneseq
    %v2684 = vshrl.u32 %v2683, 7
    %v2685 = vsub.s32 4, %v2684
    %v2686 = vrot.slane %v516, %v2685
    %s2688 = sor.u32 256, 253
    %2689 = vbcast.lane.b32.xlu0 %v2686, %s2688
    %v2690 = vpop.permute.xlu0 %2689
    %s2692 = sor.u32 256, 5
    %2693 = vbcast.lane.b32.xlu0 %v2686, %s2692
    %v2694 = vpop.permute.xlu0 %2693
    %v2695 = vlaneseq
    %v2696 = vshrl.u32 %v2695, 7
    %v2697 = vsub.s32 4, %v2696
    %v2698 = vrot.slane %v517, %v2697
    %s2700 = sor.u32 256, 253
    %2701 = vbcast.lane.b32.xlu0 %v2698, %s2700
    %v2702 = vpop.permute.xlu0 %2701
    %s2704 = sor.u32 256, 5
    %2705 = vbcast.lane.b32.xlu0 %v2698, %s2704
    %v2706 = vpop.permute.xlu0 %2705
    %v2707 = vlaneseq
    %v2708 = vshrl.u32 %v2707, 7
    %v2709 = vsub.s32 4, %v2708
    %v2710 = vrot.slane %v518, %v2709
    %s2712 = sor.u32 256, 253
    %2713 = vbcast.lane.b32.xlu0 %v2710, %s2712
    %v2714 = vpop.permute.xlu0 %2713
    %s2716 = sor.u32 256, 5
    %2717 = vbcast.lane.b32.xlu0 %v2710, %s2716
    %v2718 = vpop.permute.xlu0 %2717
    %v2719 = vlaneseq
    %v2720 = vshrl.u32 %v2719, 7
    %v2721 = vsub.s32 4, %v2720
    %v2722 = vrot.slane %v519, %v2721
    %s2724 = sor.u32 256, 253
    %2725 = vbcast.lane.b32.xlu0 %v2722, %s2724
    %v2726 = vpop.permute.xlu0 %2725
    %s2728 = sor.u32 256, 5
    %2729 = vbcast.lane.b32.xlu0 %v2722, %s2728
    %v2730 = vpop.permute.xlu0 %2729
    %v2731 = vlaneseq
    %v2732 = vshrl.u32 %v2731, 7
    %v2733 = vsub.s32 4, %v2732
    %v2734 = vrot.slane %v520, %v2733
    %s2736 = sor.u32 256, 253
    %2737 = vbcast.lane.b32.xlu0 %v2734, %s2736
    %v2738 = vpop.permute.xlu0 %2737
    %s2740 = sor.u32 256, 5
    %2741 = vbcast.lane.b32.xlu0 %v2734, %s2740
    %v2742 = vpop.permute.xlu0 %2741
    %v2759 = vadd.f32 %v2631, %v2654
    %v2760 = vadd.f32 %v2632, %v2658
    %v2761 = vadd.f32 %v2633, %v2666
    %v2762 = vadd.f32 %v2634, %v2670
    %v2763 = vadd.f32 %v2635, %v2678
    %v2764 = vadd.f32 %v2636, %v2682
    %v2765 = vadd.f32 %v2637, %v2690
    %v2766 = vadd.f32 %v2638, %v2694
    %v2767 = vadd.f32 %v2639, %v2702
    %v2768 = vadd.f32 %v2640, %v2706
    %v2769 = vadd.f32 %v2641, %v2714
    %v2770 = vadd.f32 %v2642, %v2718
    %v2771 = vadd.f32 %v2643, %v2726
    %v2772 = vadd.f32 %v2644, %v2730
    %v2773 = vadd.f32 %v2645, %v2738
    %v2774 = vadd.f32 %v2646, %v2742
    %v2775 = vsel %vm2348, 1, 0
    %2776 = vset.pattern.permute.xlu0 28
    %2777 = vperm.xlu0 %2776, %v2775
    %v2778 = vpop.permute.xlu0 %2777
    %vm2779 = vcmp.eq.s32.totalorder %v2778, 1
    %2796 = vset.pattern.permute.xlu0 0
    %2797 = vperm.xlu0 %2796, %v2759
    %v2798 = vpop.permute.xlu0 %2797
    %2799 = vset.pattern.permute.xlu0 0
    %2800 = vperm.xlu0 %2799, %v2760
    %v2801 = vpop.permute.xlu0 %2800
    %2802 = vset.pattern.permute.xlu0 0
    %2803 = vperm.xlu0 %2802, %v2761
    %v2804 = vpop.permute.xlu0 %2803
    %2805 = vset.pattern.permute.xlu0 0
    %2806 = vperm.xlu0 %2805, %v2762
    %v2807 = vpop.permute.xlu0 %2806
    %2808 = vset.pattern.permute.xlu0 0
    %2809 = vperm.xlu0 %2808, %v2763
    %v2810 = vpop.permute.xlu0 %2809
    %2811 = vset.pattern.permute.xlu0 0
    %2812 = vperm.xlu0 %2811, %v2764
    %v2813 = vpop.permute.xlu0 %2812
    %2814 = vset.pattern.permute.xlu0 0
    %2815 = vperm.xlu0 %2814, %v2765
    %v2816 = vpop.permute.xlu0 %2815
    %2817 = vset.pattern.permute.xlu0 0
    %2818 = vperm.xlu0 %2817, %v2766
    %v2819 = vpop.permute.xlu0 %2818
    %2820 = vset.pattern.permute.xlu0 0
    %2821 = vperm.xlu0 %2820, %v2767
    %v2822 = vpop.permute.xlu0 %2821
    %2823 = vset.pattern.permute.xlu0 0
    %2824 = vperm.xlu0 %2823, %v2768
    %v2825 = vpop.permute.xlu0 %2824
    %2826 = vset.pattern.permute.xlu0 0
    %2827 = vperm.xlu0 %2826, %v2769
    %v2828 = vpop.permute.xlu0 %2827
    %2829 = vset.pattern.permute.xlu0 0
    %2830 = vperm.xlu0 %2829, %v2770
    %v2831 = vpop.permute.xlu0 %2830
    %2832 = vset.pattern.permute.xlu0 0
    %2833 = vperm.xlu0 %2832, %v2771
    %v2834 = vpop.permute.xlu0 %2833
    %2835 = vset.pattern.permute.xlu0 0
    %2836 = vperm.xlu0 %2835, %v2772
    %v2837 = vpop.permute.xlu0 %2836
    %2838 = vset.pattern.permute.xlu0 0
    %2839 = vperm.xlu0 %2838, %v2773
    %v2840 = vpop.permute.xlu0 %2839
    %2841 = vset.pattern.permute.xlu0 0
    %2842 = vperm.xlu0 %2841, %v2774
    %v2843 = vpop.permute.xlu0 %2842
    %v2844 = vlaneseq
    %v2845 = vshrl.u32 %v2844, 7
    %v2846 = vsub.s32 %v1110, %v2845
    %v2847 = vrot.slane %v2798, %v2846
    %v2848 = vlaneseq
    %v2849 = vshrl.u32 %v2848, 7
    %v2850 = vsub.s32 %v1115, %v2849
    %v2851 = vrot.slane %v2801, %v2850
    %v2852 = vsel %vm1120, %v2851, %v2847
    %v2853 = vlaneseq
    %v2854 = vshrl.u32 %v2853, 7
    %v2855 = vsub.s32 %v1110, %v2854
    %v2856 = vrot.slane %v2804, %v2855
    %v2857 = vlaneseq
    %v2858 = vshrl.u32 %v2857, 7
    %v2859 = vsub.s32 %v1115, %v2858
    %v2860 = vrot.slane %v2807, %v2859
    %v2861 = vsel %vm1120, %v2860, %v2856
    %v2862 = vlaneseq
    %v2863 = vshrl.u32 %v2862, 7
    %v2864 = vsub.s32 %v1110, %v2863
    %v2865 = vrot.slane %v2810, %v2864
    %v2866 = vlaneseq
    %v2867 = vshrl.u32 %v2866, 7
    %v2868 = vsub.s32 %v1115, %v2867
    %v2869 = vrot.slane %v2813, %v2868
    %v2870 = vsel %vm1120, %v2869, %v2865
    %v2871 = vlaneseq
    %v2872 = vshrl.u32 %v2871, 7
    %v2873 = vsub.s32 %v1110, %v2872
    %v2874 = vrot.slane %v2816, %v2873
    %v2875 = vlaneseq
    %v2876 = vshrl.u32 %v2875, 7
    %v2877 = vsub.s32 %v1115, %v2876
    %v2878 = vrot.slane %v2819, %v2877
    %v2879 = vsel %vm1120, %v2878, %v2874
    %v2880 = vlaneseq
    %v2881 = vshrl.u32 %v2880, 7
    %v2882 = vsub.s32 %v1110, %v2881
    %v2883 = vrot.slane %v2822, %v2882
    %v2884 = vlaneseq
    %v2885 = vshrl.u32 %v2884, 7
    %v2886 = vsub.s32 %v1115, %v2885
    %v2887 = vrot.slane %v2825, %v2886
    %v2888 = vsel %vm1120, %v2887, %v2883
    %v2889 = vlaneseq
    %v2890 = vshrl.u32 %v2889, 7
    %v2891 = vsub.s32 %v1110, %v2890
    %v2892 = vrot.slane %v2828, %v2891
    %v2893 = vlaneseq
    %v2894 = vshrl.u32 %v2893, 7
    %v2895 = vsub.s32 %v1115, %v2894
    %v2896 = vrot.slane %v2831, %v2895
    %v2897 = vsel %vm1120, %v2896, %v2892
    %v2898 = vlaneseq
    %v2899 = vshrl.u32 %v2898, 7
    %v2900 = vsub.s32 %v1110, %v2899
    %v2901 = vrot.slane %v2834, %v2900
    %v2902 = vlaneseq
    %v2903 = vshrl.u32 %v2902, 7
    %v2904 = vsub.s32 %v1115, %v2903
    %v2905 = vrot.slane %v2837, %v2904
    %v2906 = vsel %vm1120, %v2905, %v2901
    %v2907 = vlaneseq
    %v2908 = vshrl.u32 %v2907, 7
    %v2909 = vsub.s32 %v1110, %v2908
    %v2910 = vrot.slane %v2840, %v2909
    %v2911 = vlaneseq
    %v2912 = vshrl.u32 %v2911, 7
    %v2913 = vsub.s32 %v1115, %v2912
    %v2914 = vrot.slane %v2843, %v2913
    %v2915 = vsel %vm1120, %v2914, %v2910
    %v2916 = vsel %vm590, %v2861, %v2852
    %v2917 = vsel %vm593, %v2870, %v2916
    %v2918 = vsel %vm596, %v2879, %v2917
    %v2919 = vsel %vm599, %v2888, %v2918
    %v2920 = vsel %vm602, %v2897, %v2919
    %v2921 = vsel %vm605, %v2906, %v2920
    %v2922 = vsel %vm608, %v2915, %v2921
    %v2924 = vsel %vm2779, %v2922, %v2347
    %vm2925 = vcmp.gt.s32.totalorder %v15, 5
    %v2927 = vcombine.high %v2924, %v2924
    %v2929 = vunpack.c.l.s4 1966171168
    %v2930 = vunpack.c.0.s8 %v2929
    %v2931 = vlaneseq
    %v2932 = vshrl.u32 %v2931, 7
    %v2933 = vsub.s32 %v2930, %v2932
    %v2934 = vrot.slane %v2924, %v2933
    %v2936 = vunpack.c.l.s4 1966171168
    %v2937 = vunpack.c.0.s8 %v2936
    %v2938 = vlaneseq
    %v2939 = vshrl.u32 %v2938, 7
    %v2940 = vsub.s32 %v2937, %v2939
    %v2941 = vrot.slane %v2927, %v2940
    %v2942 = vcombine.high %v2934, %v2934
    %v2943 = vcombine.high %v2941, %v2941
    %v2945 = vunpack.c.l.s4 1966171168
    %v2946 = vunpack.c.0.s8 %v2945
    %v2947 = vlaneseq
    %v2948 = vshrl.u32 %v2947, 7
    %v2949 = vsub.s32 %v2946, %v2948
    %v2950 = vrot.slane %v2934, %v2949
    %v2952 = vunpack.c.l.s4 1966171168
    %v2953 = vunpack.c.0.s8 %v2952
    %v2954 = vlaneseq
    %v2955 = vshrl.u32 %v2954, 7
    %v2956 = vsub.s32 %v2953, %v2955
    %v2957 = vrot.slane %v2941, %v2956
    %v2959 = vunpack.c.l.s4 1966171168
    %v2960 = vunpack.c.0.s8 %v2959
    %v2961 = vlaneseq
    %v2962 = vshrl.u32 %v2961, 7
    %v2963 = vsub.s32 %v2960, %v2962
    %v2964 = vrot.slane %v2942, %v2963
    %v2966 = vunpack.c.l.s4 1966171168
    %v2967 = vunpack.c.0.s8 %v2966
    %v2968 = vlaneseq
    %v2969 = vshrl.u32 %v2968, 7
    %v2970 = vsub.s32 %v2967, %v2969
    %v2971 = vrot.slane %v2943, %v2970
    %v2972 = vcombine.high %v2950, %v2950
    %v2973 = vcombine.high %v2957, %v2957
    %v2974 = vcombine.high %v2964, %v2964
    %v2975 = vcombine.high %v2971, %v2971
    %v2976 = vlaneseq
    %v2977 = vshrl.u32 %v2976, 7
    %v2978 = vsub.s32 0, %v2977
    %v2979 = vrot.slane %v2950, %v2978
    %v2980 = vlaneseq
    %v2981 = vshrl.u32 %v2980, 7
    %v2982 = vsub.s32 0, %v2981
    %v2983 = vrot.slane %v2964, %v2982
    %v2984 = vlaneseq
    %v2985 = vshrl.u32 %v2984, 7
    %v2986 = vsub.s32 0, %v2985
    %v2987 = vrot.slane %v2972, %v2986
    %v2988 = vlaneseq
    %v2989 = vshrl.u32 %v2988, 7
    %v2990 = vsub.s32 0, %v2989
    %v2991 = vrot.slane %v2974, %v2990
    %v2992 = vlaneseq
    %v2993 = vshrl.u32 %v2992, 7
    %v2994 = vsub.s32 0, %v2993
    %v2995 = vrot.slane %v2957, %v2994
    %v2996 = vlaneseq
    %v2997 = vshrl.u32 %v2996, 7
    %v2998 = vsub.s32 0, %v2997
    %v2999 = vrot.slane %v2971, %v2998
    %v3000 = vlaneseq
    %v3001 = vshrl.u32 %v3000, 7
    %v3002 = vsub.s32 0, %v3001
    %v3003 = vrot.slane %v2973, %v3002
    %v3004 = vlaneseq
    %v3005 = vshrl.u32 %v3004, 7
    %v3006 = vsub.s32 0, %v3005
    %v3007 = vrot.slane %v2975, %v3006
    %v3016 = vadd.f32 %v2979, %v22
    %v3017 = vadd.f32 %v2979, %v23
    %v3018 = vadd.f32 %v2983, %v22
    %v3019 = vadd.f32 %v2983, %v23
    %v3020 = vadd.f32 %v2987, %v22
    %v3021 = vadd.f32 %v2987, %v23
    %v3022 = vadd.f32 %v2991, %v22
    %v3023 = vadd.f32 %v2991, %v23
    %v3024 = vadd.f32 %v2995, %v22
    %v3025 = vadd.f32 %v2995, %v23
    %v3026 = vadd.f32 %v2999, %v22
    %v3027 = vadd.f32 %v2999, %v23
    %v3028 = vadd.f32 %v3003, %v22
    %v3029 = vadd.f32 %v3003, %v23
    %v3030 = vadd.f32 %v3007, %v22
    %v3031 = vadd.f32 %v3007, %v23
    %v3032 = vsel %vm719, %v3016, -inf
    %3033 = vmax.xlane.f32.xlu0 %v3032
    %v3034 = vpop.xlane.xlu0 %3033
    %v3035 = vsel %vm723, %v3017, -inf
    %3036 = vmax.xlane.f32.xlu0 %v3035
    %v3037 = vpop.xlane.xlu0 %3036
    %v3038 = vsel %vm719, %v3018, -inf
    %3039 = vmax.xlane.f32.xlu0 %v3038
    %v3040 = vpop.xlane.xlu0 %3039
    %v3041 = vsel %vm723, %v3019, -inf
    %3042 = vmax.xlane.f32.xlu0 %v3041
    %v3043 = vpop.xlane.xlu0 %3042
    %v3044 = vsel %vm719, %v3020, -inf
    %3045 = vmax.xlane.f32.xlu0 %v3044
    %v3046 = vpop.xlane.xlu0 %3045
    %v3047 = vsel %vm723, %v3021, -inf
    %3048 = vmax.xlane.f32.xlu0 %v3047
    %v3049 = vpop.xlane.xlu0 %3048
    %v3050 = vsel %vm719, %v3022, -inf
    %3051 = vmax.xlane.f32.xlu0 %v3050
    %v3052 = vpop.xlane.xlu0 %3051
    %v3053 = vsel %vm723, %v3023, -inf
    %3054 = vmax.xlane.f32.xlu0 %v3053
    %v3055 = vpop.xlane.xlu0 %3054
    %v3056 = vsel %vm719, %v3024, -inf
    %3057 = vmax.xlane.f32.xlu0 %v3056
    %v3058 = vpop.xlane.xlu0 %3057
    %v3059 = vsel %vm723, %v3025, -inf
    %3060 = vmax.xlane.f32.xlu0 %v3059
    %v3061 = vpop.xlane.xlu0 %3060
    %v3062 = vsel %vm719, %v3026, -inf
    %3063 = vmax.xlane.f32.xlu0 %v3062
    %v3064 = vpop.xlane.xlu0 %3063
    %v3065 = vsel %vm723, %v3027, -inf
    %3066 = vmax.xlane.f32.xlu0 %v3065
    %v3067 = vpop.xlane.xlu0 %3066
    %v3068 = vsel %vm719, %v3028, -inf
    %3069 = vmax.xlane.f32.xlu0 %v3068
    %v3070 = vpop.xlane.xlu0 %3069
    %v3071 = vsel %vm723, %v3029, -inf
    %3072 = vmax.xlane.f32.xlu0 %v3071
    %v3073 = vpop.xlane.xlu0 %3072
    %v3074 = vsel %vm719, %v3030, -inf
    %3075 = vmax.xlane.f32.xlu0 %v3074
    %v3076 = vpop.xlane.xlu0 %3075
    %v3077 = vsel %vm723, %v3031, -inf
    %3078 = vmax.xlane.f32.xlu0 %v3077
    %v3079 = vpop.xlane.xlu0 %3078
    %v3080 = vsub.f32 %v3016, %v3034
    %v3081 = vsub.f32 %v3017, %v3037
    %v3082 = vsub.f32 %v3018, %v3040
    %v3083 = vsub.f32 %v3019, %v3043
    %v3084 = vsub.f32 %v3020, %v3046
    %v3085 = vsub.f32 %v3021, %v3049
    %v3086 = vsub.f32 %v3022, %v3052
    %v3087 = vsub.f32 %v3023, %v3055
    %v3088 = vsub.f32 %v3024, %v3058
    %v3089 = vsub.f32 %v3025, %v3061
    %v3090 = vsub.f32 %v3026, %v3064
    %v3091 = vsub.f32 %v3027, %v3067
    %v3092 = vsub.f32 %v3028, %v3070
    %v3093 = vsub.f32 %v3029, %v3073
    %v3094 = vsub.f32 %v3030, %v3076
    %v3095 = vsub.f32 %v3031, %v3079
    %v3096 = vmul.f32 %v3080, 1.442695
    %v3097 = vpow.pop %v3096
    %v3098 = vmul.f32 %v3081, 1.442695
    %v3099 = vpow.pop %v3098
    %v3100 = vmul.f32 %v3082, 1.442695
    %v3101 = vpow.pop %v3100
    %v3102 = vmul.f32 %v3083, 1.442695
    %v3103 = vpow.pop %v3102
    %v3104 = vmul.f32 %v3084, 1.442695
    %v3105 = vpow.pop %v3104
    %v3106 = vmul.f32 %v3085, 1.442695
    %v3107 = vpow.pop %v3106
    %v3108 = vmul.f32 %v3086, 1.442695
    %v3109 = vpow.pop %v3108
    %v3110 = vmul.f32 %v3087, 1.442695
    %v3111 = vpow.pop %v3110
    %v3112 = vmul.f32 %v3088, 1.442695
    %v3113 = vpow.pop %v3112
    %v3114 = vmul.f32 %v3089, 1.442695
    %v3115 = vpow.pop %v3114
    %v3116 = vmul.f32 %v3090, 1.442695
    %v3117 = vpow.pop %v3116
    %v3118 = vmul.f32 %v3091, 1.442695
    %v3119 = vpow.pop %v3118
    %v3120 = vmul.f32 %v3092, 1.442695
    %v3121 = vpow.pop %v3120
    %v3122 = vmul.f32 %v3093, 1.442695
    %v3123 = vpow.pop %v3122
    %v3124 = vmul.f32 %v3094, 1.442695
    %v3125 = vpow.pop %v3124
    %v3126 = vmul.f32 %v3095, 1.442695
    %v3127 = vpow.pop %v3126
    %v3128 = vsel %vm719, %v3097, 0.0
    %3129 = vadd.xlane.f32.xlu0 %v3128
    %v3130 = vpop.xlane.xlu0 %3129
    %v3131 = vsel %vm723, %v3099, 0.0
    %3132 = vadd.xlane.f32.xlu0 %v3131
    %v3133 = vpop.xlane.xlu0 %3132
    %v3134 = vsel %vm719, %v3101, 0.0
    %3135 = vadd.xlane.f32.xlu0 %v3134
    %v3136 = vpop.xlane.xlu0 %3135
    %v3137 = vsel %vm723, %v3103, 0.0
    %3138 = vadd.xlane.f32.xlu0 %v3137
    %v3139 = vpop.xlane.xlu0 %3138
    %v3140 = vsel %vm719, %v3105, 0.0
    %3141 = vadd.xlane.f32.xlu0 %v3140
    %v3142 = vpop.xlane.xlu0 %3141
    %v3143 = vsel %vm723, %v3107, 0.0
    %3144 = vadd.xlane.f32.xlu0 %v3143
    %v3145 = vpop.xlane.xlu0 %3144
    %v3146 = vsel %vm719, %v3109, 0.0
    %3147 = vadd.xlane.f32.xlu0 %v3146
    %v3148 = vpop.xlane.xlu0 %3147
    %v3149 = vsel %vm723, %v3111, 0.0
    %3150 = vadd.xlane.f32.xlu0 %v3149
    %v3151 = vpop.xlane.xlu0 %3150
    %v3152 = vsel %vm719, %v3113, 0.0
    %3153 = vadd.xlane.f32.xlu0 %v3152
    %v3154 = vpop.xlane.xlu0 %3153
    %v3155 = vsel %vm723, %v3115, 0.0
    %3156 = vadd.xlane.f32.xlu0 %v3155
    %v3157 = vpop.xlane.xlu0 %3156
    %v3158 = vsel %vm719, %v3117, 0.0
    %3159 = vadd.xlane.f32.xlu0 %v3158
    %v3160 = vpop.xlane.xlu0 %3159
    %v3161 = vsel %vm723, %v3119, 0.0
    %3162 = vadd.xlane.f32.xlu0 %v3161
    %v3163 = vpop.xlane.xlu0 %3162
    %v3164 = vsel %vm719, %v3121, 0.0
    %3165 = vadd.xlane.f32.xlu0 %v3164
    %v3166 = vpop.xlane.xlu0 %3165
    %v3167 = vsel %vm723, %v3123, 0.0
    %3168 = vadd.xlane.f32.xlu0 %v3167
    %v3169 = vpop.xlane.xlu0 %3168
    %v3170 = vsel %vm719, %v3125, 0.0
    %3171 = vadd.xlane.f32.xlu0 %v3170
    %v3172 = vpop.xlane.xlu0 %3171
    %v3173 = vsel %vm723, %v3127, 0.0
    %3174 = vadd.xlane.f32.xlu0 %v3173
    %v3175 = vpop.xlane.xlu0 %3174
    %v3176 = vlog2.pop %v3130
    %v3177 = vmul.f32 %v3176, 0.6931472
    %v3178 = vlog2.pop %v3133
    %v3179 = vmul.f32 %v3178, 0.6931472
    %v3180 = vlog2.pop %v3136
    %v3181 = vmul.f32 %v3180, 0.6931472
    %v3182 = vlog2.pop %v3139
    %v3183 = vmul.f32 %v3182, 0.6931472
    %v3184 = vlog2.pop %v3142
    %v3185 = vmul.f32 %v3184, 0.6931472
    %v3186 = vlog2.pop %v3145
    %v3187 = vmul.f32 %v3186, 0.6931472
    %v3188 = vlog2.pop %v3148
    %v3189 = vmul.f32 %v3188, 0.6931472
    %v3190 = vlog2.pop %v3151
    %v3191 = vmul.f32 %v3190, 0.6931472
    %v3192 = vlog2.pop %v3154
    %v3193 = vmul.f32 %v3192, 0.6931472
    %v3194 = vlog2.pop %v3157
    %v3195 = vmul.f32 %v3194, 0.6931472
    %v3196 = vlog2.pop %v3160
    %v3197 = vmul.f32 %v3196, 0.6931472
    %v3198 = vlog2.pop %v3163
    %v3199 = vmul.f32 %v3198, 0.6931472
    %v3200 = vlog2.pop %v3166
    %v3201 = vmul.f32 %v3200, 0.6931472
    %v3202 = vlog2.pop %v3169
    %v3203 = vmul.f32 %v3202, 0.6931472
    %v3204 = vlog2.pop %v3172
    %v3205 = vmul.f32 %v3204, 0.6931472
    %v3206 = vlog2.pop %v3175
    %v3207 = vmul.f32 %v3206, 0.6931472
    %v3208 = vadd.f32 %v3034, %v3177
    %v3209 = vadd.f32 %v3037, %v3179
    %v3210 = vadd.f32 %v3040, %v3181
    %v3211 = vadd.f32 %v3043, %v3183
    %v3212 = vadd.f32 %v3046, %v3185
    %v3213 = vadd.f32 %v3049, %v3187
    %v3214 = vadd.f32 %v3052, %v3189
    %v3215 = vadd.f32 %v3055, %v3191
    %v3216 = vadd.f32 %v3058, %v3193
    %v3217 = vadd.f32 %v3061, %v3195
    %v3218 = vadd.f32 %v3064, %v3197
    %v3219 = vadd.f32 %v3067, %v3199
    %v3220 = vadd.f32 %v3070, %v3201
    %v3221 = vadd.f32 %v3073, %v3203
    %v3222 = vadd.f32 %v3076, %v3205
    %v3223 = vadd.f32 %v3079, %v3207
    %v3224 = vlaneseq
    %v3225 = vshrl.u32 %v3224, 7
    %v3226 = vsub.s32 5, %v3225
    %v3227 = vrot.slane %v513, %v3226
    %s3229 = sor.u32 256, 253
    %3230 = vbcast.lane.b32.xlu0 %v3227, %s3229
    %v3231 = vpop.permute.xlu0 %3230
    %s3233 = sor.u32 256, 5
    %3234 = vbcast.lane.b32.xlu0 %v3227, %s3233
    %v3235 = vpop.permute.xlu0 %3234
    %v3236 = vlaneseq
    %v3237 = vshrl.u32 %v3236, 7
    %v3238 = vsub.s32 5, %v3237
    %v3239 = vrot.slane %v514, %v3238
    %s3241 = sor.u32 256, 253
    %3242 = vbcast.lane.b32.xlu0 %v3239, %s3241
    %v3243 = vpop.permute.xlu0 %3242
    %s3245 = sor.u32 256, 5
    %3246 = vbcast.lane.b32.xlu0 %v3239, %s3245
    %v3247 = vpop.permute.xlu0 %3246
    %v3248 = vlaneseq
    %v3249 = vshrl.u32 %v3248, 7
    %v3250 = vsub.s32 5, %v3249
    %v3251 = vrot.slane %v515, %v3250
    %s3253 = sor.u32 256, 253
    %3254 = vbcast.lane.b32.xlu0 %v3251, %s3253
    %v3255 = vpop.permute.xlu0 %3254
    %s3257 = sor.u32 256, 5
    %3258 = vbcast.lane.b32.xlu0 %v3251, %s3257
    %v3259 = vpop.permute.xlu0 %3258
    %v3260 = vlaneseq
    %v3261 = vshrl.u32 %v3260, 7
    %v3262 = vsub.s32 5, %v3261
    %v3263 = vrot.slane %v516, %v3262
    %s3265 = sor.u32 256, 253
    %3266 = vbcast.lane.b32.xlu0 %v3263, %s3265
    %v3267 = vpop.permute.xlu0 %3266
    %s3269 = sor.u32 256, 5
    %3270 = vbcast.lane.b32.xlu0 %v3263, %s3269
    %v3271 = vpop.permute.xlu0 %3270
    %v3272 = vlaneseq
    %v3273 = vshrl.u32 %v3272, 7
    %v3274 = vsub.s32 5, %v3273
    %v3275 = vrot.slane %v517, %v3274
    %s3277 = sor.u32 256, 253
    %3278 = vbcast.lane.b32.xlu0 %v3275, %s3277
    %v3279 = vpop.permute.xlu0 %3278
    %s3281 = sor.u32 256, 5
    %3282 = vbcast.lane.b32.xlu0 %v3275, %s3281
    %v3283 = vpop.permute.xlu0 %3282
    %v3284 = vlaneseq
    %v3285 = vshrl.u32 %v3284, 7
    %v3286 = vsub.s32 5, %v3285
    %v3287 = vrot.slane %v518, %v3286
    %s3289 = sor.u32 256, 253
    %3290 = vbcast.lane.b32.xlu0 %v3287, %s3289
    %v3291 = vpop.permute.xlu0 %3290
    %s3293 = sor.u32 256, 5
    %3294 = vbcast.lane.b32.xlu0 %v3287, %s3293
    %v3295 = vpop.permute.xlu0 %3294
    %v3296 = vlaneseq
    %v3297 = vshrl.u32 %v3296, 7
    %v3298 = vsub.s32 5, %v3297
    %v3299 = vrot.slane %v519, %v3298
    %s3301 = sor.u32 256, 253
    %3302 = vbcast.lane.b32.xlu0 %v3299, %s3301
    %v3303 = vpop.permute.xlu0 %3302
    %s3305 = sor.u32 256, 5
    %3306 = vbcast.lane.b32.xlu0 %v3299, %s3305
    %v3307 = vpop.permute.xlu0 %3306
    %v3308 = vlaneseq
    %v3309 = vshrl.u32 %v3308, 7
    %v3310 = vsub.s32 5, %v3309
    %v3311 = vrot.slane %v520, %v3310
    %s3313 = sor.u32 256, 253
    %3314 = vbcast.lane.b32.xlu0 %v3311, %s3313
    %v3315 = vpop.permute.xlu0 %3314
    %s3317 = sor.u32 256, 5
    %3318 = vbcast.lane.b32.xlu0 %v3311, %s3317
    %v3319 = vpop.permute.xlu0 %3318
    %v3336 = vadd.f32 %v3208, %v3231
    %v3337 = vadd.f32 %v3209, %v3235
    %v3338 = vadd.f32 %v3210, %v3243
    %v3339 = vadd.f32 %v3211, %v3247
    %v3340 = vadd.f32 %v3212, %v3255
    %v3341 = vadd.f32 %v3213, %v3259
    %v3342 = vadd.f32 %v3214, %v3267
    %v3343 = vadd.f32 %v3215, %v3271
    %v3344 = vadd.f32 %v3216, %v3279
    %v3345 = vadd.f32 %v3217, %v3283
    %v3346 = vadd.f32 %v3218, %v3291
    %v3347 = vadd.f32 %v3219, %v3295
    %v3348 = vadd.f32 %v3220, %v3303
    %v3349 = vadd.f32 %v3221, %v3307
    %v3350 = vadd.f32 %v3222, %v3315
    %v3351 = vadd.f32 %v3223, %v3319
    %v3352 = vsel %vm2925, 1, 0
    %3353 = vset.pattern.permute.xlu0 28
    %3354 = vperm.xlu0 %3353, %v3352
    %v3355 = vpop.permute.xlu0 %3354
    %vm3356 = vcmp.eq.s32.totalorder %v3355, 1
    %3373 = vset.pattern.permute.xlu0 0
    %3374 = vperm.xlu0 %3373, %v3336
    %v3375 = vpop.permute.xlu0 %3374
    %3376 = vset.pattern.permute.xlu0 0
    %3377 = vperm.xlu0 %3376, %v3337
    %v3378 = vpop.permute.xlu0 %3377
    %3379 = vset.pattern.permute.xlu0 0
    %3380 = vperm.xlu0 %3379, %v3338
    %v3381 = vpop.permute.xlu0 %3380
    %3382 = vset.pattern.permute.xlu0 0
    %3383 = vperm.xlu0 %3382, %v3339
    %v3384 = vpop.permute.xlu0 %3383
    %3385 = vset.pattern.permute.xlu0 0
    %3386 = vperm.xlu0 %3385, %v3340
    %v3387 = vpop.permute.xlu0 %3386
    %3388 = vset.pattern.permute.xlu0 0
    %3389 = vperm.xlu0 %3388, %v3341
    %v3390 = vpop.permute.xlu0 %3389
    %3391 = vset.pattern.permute.xlu0 0
    %3392 = vperm.xlu0 %3391, %v3342
    %v3393 = vpop.permute.xlu0 %3392
    %3394 = vset.pattern.permute.xlu0 0
    %3395 = vperm.xlu0 %3394, %v3343
    %v3396 = vpop.permute.xlu0 %3395
    %3397 = vset.pattern.permute.xlu0 0
    %3398 = vperm.xlu0 %3397, %v3344
    %v3399 = vpop.permute.xlu0 %3398
    %3400 = vset.pattern.permute.xlu0 0
    %3401 = vperm.xlu0 %3400, %v3345
    %v3402 = vpop.permute.xlu0 %3401
    %3403 = vset.pattern.permute.xlu0 0
    %3404 = vperm.xlu0 %3403, %v3346
    %v3405 = vpop.permute.xlu0 %3404
    %3406 = vset.pattern.permute.xlu0 0
    %3407 = vperm.xlu0 %3406, %v3347
    %v3408 = vpop.permute.xlu0 %3407
    %3409 = vset.pattern.permute.xlu0 0
    %3410 = vperm.xlu0 %3409, %v3348
    %v3411 = vpop.permute.xlu0 %3410
    %3412 = vset.pattern.permute.xlu0 0
    %3413 = vperm.xlu0 %3412, %v3349
    %v3414 = vpop.permute.xlu0 %3413
    %3415 = vset.pattern.permute.xlu0 0
    %3416 = vperm.xlu0 %3415, %v3350
    %v3417 = vpop.permute.xlu0 %3416
    %3418 = vset.pattern.permute.xlu0 0
    %3419 = vperm.xlu0 %3418, %v3351
    %v3420 = vpop.permute.xlu0 %3419
    %v3421 = vlaneseq
    %v3422 = vshrl.u32 %v3421, 7
    %v3423 = vsub.s32 %v1110, %v3422
    %v3424 = vrot.slane %v3375, %v3423
    %v3425 = vlaneseq
    %v3426 = vshrl.u32 %v3425, 7
    %v3427 = vsub.s32 %v1115, %v3426
    %v3428 = vrot.slane %v3378, %v3427
    %v3429 = vsel %vm1120, %v3428, %v3424
    %v3430 = vlaneseq
    %v3431 = vshrl.u32 %v3430, 7
    %v3432 = vsub.s32 %v1110, %v3431
    %v3433 = vrot.slane %v3381, %v3432
    %v3434 = vlaneseq
    %v3435 = vshrl.u32 %v3434, 7
    %v3436 = vsub.s32 %v1115, %v3435
    %v3437 = vrot.slane %v3384, %v3436
    %v3438 = vsel %vm1120, %v3437, %v3433
    %v3439 = vlaneseq
    %v3440 = vshrl.u32 %v3439, 7
    %v3441 = vsub.s32 %v1110, %v3440
    %v3442 = vrot.slane %v3387, %v3441
    %v3443 = vlaneseq
    %v3444 = vshrl.u32 %v3443, 7
    %v3445 = vsub.s32 %v1115, %v3444
    %v3446 = vrot.slane %v3390, %v3445
    %v3447 = vsel %vm1120, %v3446, %v3442
    %v3448 = vlaneseq
    %v3449 = vshrl.u32 %v3448, 7
    %v3450 = vsub.s32 %v1110, %v3449
    %v3451 = vrot.slane %v3393, %v3450
    %v3452 = vlaneseq
    %v3453 = vshrl.u32 %v3452, 7
    %v3454 = vsub.s32 %v1115, %v3453
    %v3455 = vrot.slane %v3396, %v3454
    %v3456 = vsel %vm1120, %v3455, %v3451
    %v3457 = vlaneseq
    %v3458 = vshrl.u32 %v3457, 7
    %v3459 = vsub.s32 %v1110, %v3458
    %v3460 = vrot.slane %v3399, %v3459
    %v3461 = vlaneseq
    %v3462 = vshrl.u32 %v3461, 7
    %v3463 = vsub.s32 %v1115, %v3462
    %v3464 = vrot.slane %v3402, %v3463
    %v3465 = vsel %vm1120, %v3464, %v3460
    %v3466 = vlaneseq
    %v3467 = vshrl.u32 %v3466, 7
    %v3468 = vsub.s32 %v1110, %v3467
    %v3469 = vrot.slane %v3405, %v3468
    %v3470 = vlaneseq
    %v3471 = vshrl.u32 %v3470, 7
    %v3472 = vsub.s32 %v1115, %v3471
    %v3473 = vrot.slane %v3408, %v3472
    %v3474 = vsel %vm1120, %v3473, %v3469
    %v3475 = vlaneseq
    %v3476 = vshrl.u32 %v3475, 7
    %v3477 = vsub.s32 %v1110, %v3476
    %v3478 = vrot.slane %v3411, %v3477
    %v3479 = vlaneseq
    %v3480 = vshrl.u32 %v3479, 7
    %v3481 = vsub.s32 %v1115, %v3480
    %v3482 = vrot.slane %v3414, %v3481
    %v3483 = vsel %vm1120, %v3482, %v3478
    %v3484 = vlaneseq
    %v3485 = vshrl.u32 %v3484, 7
    %v3486 = vsub.s32 %v1110, %v3485
    %v3487 = vrot.slane %v3417, %v3486
    %v3488 = vlaneseq
    %v3489 = vshrl.u32 %v3488, 7
    %v3490 = vsub.s32 %v1115, %v3489
    %v3491 = vrot.slane %v3420, %v3490
    %v3492 = vsel %vm1120, %v3491, %v3487
    %v3493 = vsel %vm590, %v3438, %v3429
    %v3494 = vsel %vm593, %v3447, %v3493
    %v3495 = vsel %vm596, %v3456, %v3494
    %v3496 = vsel %vm599, %v3465, %v3495
    %v3497 = vsel %vm602, %v3474, %v3496
    %v3498 = vsel %vm605, %v3483, %v3497
    %v3499 = vsel %vm608, %v3492, %v3498
    %v3501 = vsel %vm3356, %v3499, %v2924
    %vm3502 = vcmp.gt.s32.totalorder %v15, 6
    %v3504 = vcombine.high %v3501, %v3501
    %v3506 = vunpack.c.l.s4 1966171168
    %v3507 = vunpack.c.0.s8 %v3506
    %v3508 = vlaneseq
    %v3509 = vshrl.u32 %v3508, 7
    %v3510 = vsub.s32 %v3507, %v3509
    %v3511 = vrot.slane %v3501, %v3510
    %v3513 = vunpack.c.l.s4 1966171168
    %v3514 = vunpack.c.0.s8 %v3513
    %v3515 = vlaneseq
    %v3516 = vshrl.u32 %v3515, 7
    %v3517 = vsub.s32 %v3514, %v3516
    %v3518 = vrot.slane %v3504, %v3517
    %v3519 = vcombine.high %v3511, %v3511
    %v3520 = vcombine.high %v3518, %v3518
    %v3522 = vunpack.c.l.s4 1966171168
    %v3523 = vunpack.c.0.s8 %v3522
    %v3524 = vlaneseq
    %v3525 = vshrl.u32 %v3524, 7
    %v3526 = vsub.s32 %v3523, %v3525
    %v3527 = vrot.slane %v3511, %v3526
    %v3529 = vunpack.c.l.s4 1966171168
    %v3530 = vunpack.c.0.s8 %v3529
    %v3531 = vlaneseq
    %v3532 = vshrl.u32 %v3531, 7
    %v3533 = vsub.s32 %v3530, %v3532
    %v3534 = vrot.slane %v3518, %v3533
    %v3536 = vunpack.c.l.s4 1966171168
    %v3537 = vunpack.c.0.s8 %v3536
    %v3538 = vlaneseq
    %v3539 = vshrl.u32 %v3538, 7
    %v3540 = vsub.s32 %v3537, %v3539
    %v3541 = vrot.slane %v3519, %v3540
    %v3543 = vunpack.c.l.s4 1966171168
    %v3544 = vunpack.c.0.s8 %v3543
    %v3545 = vlaneseq
    %v3546 = vshrl.u32 %v3545, 7
    %v3547 = vsub.s32 %v3544, %v3546
    %v3548 = vrot.slane %v3520, %v3547
    %v3549 = vcombine.high %v3527, %v3527
    %v3550 = vcombine.high %v3534, %v3534
    %v3551 = vcombine.high %v3541, %v3541
    %v3552 = vcombine.high %v3548, %v3548
    %v3553 = vlaneseq
    %v3554 = vshrl.u32 %v3553, 7
    %v3555 = vsub.s32 0, %v3554
    %v3556 = vrot.slane %v3527, %v3555
    %v3557 = vlaneseq
    %v3558 = vshrl.u32 %v3557, 7
    %v3559 = vsub.s32 0, %v3558
    %v3560 = vrot.slane %v3541, %v3559
    %v3561 = vlaneseq
    %v3562 = vshrl.u32 %v3561, 7
    %v3563 = vsub.s32 0, %v3562
    %v3564 = vrot.slane %v3549, %v3563
    %v3565 = vlaneseq
    %v3566 = vshrl.u32 %v3565, 7
    %v3567 = vsub.s32 0, %v3566
    %v3568 = vrot.slane %v3551, %v3567
    %v3569 = vlaneseq
    %v3570 = vshrl.u32 %v3569, 7
    %v3571 = vsub.s32 0, %v3570
    %v3572 = vrot.slane %v3534, %v3571
    %v3573 = vlaneseq
    %v3574 = vshrl.u32 %v3573, 7
    %v3575 = vsub.s32 0, %v3574
    %v3576 = vrot.slane %v3548, %v3575
    %v3577 = vlaneseq
    %v3578 = vshrl.u32 %v3577, 7
    %v3579 = vsub.s32 0, %v3578
    %v3580 = vrot.slane %v3550, %v3579
    %v3581 = vlaneseq
    %v3582 = vshrl.u32 %v3581, 7
    %v3583 = vsub.s32 0, %v3582
    %v3584 = vrot.slane %v3552, %v3583
    %v3593 = vadd.f32 %v3556, %v22
    %v3594 = vadd.f32 %v3556, %v23
    %v3595 = vadd.f32 %v3560, %v22
    %v3596 = vadd.f32 %v3560, %v23
    %v3597 = vadd.f32 %v3564, %v22
    %v3598 = vadd.f32 %v3564, %v23
    %v3599 = vadd.f32 %v3568, %v22
    %v3600 = vadd.f32 %v3568, %v23
    %v3601 = vadd.f32 %v3572, %v22
    %v3602 = vadd.f32 %v3572, %v23
    %v3603 = vadd.f32 %v3576, %v22
    %v3604 = vadd.f32 %v3576, %v23
    %v3605 = vadd.f32 %v3580, %v22
    %v3606 = vadd.f32 %v3580, %v23
    %v3607 = vadd.f32 %v3584, %v22
    %v3608 = vadd.f32 %v3584, %v23
    %v3609 = vsel %vm719, %v3593, -inf
    %3610 = vmax.xlane.f32.xlu0 %v3609
    %v3611 = vpop.xlane.xlu0 %3610
    %v3612 = vsel %vm723, %v3594, -inf
    %3613 = vmax.xlane.f32.xlu0 %v3612
    %v3614 = vpop.xlane.xlu0 %3613
    %v3615 = vsel %vm719, %v3595, -inf
    %3616 = vmax.xlane.f32.xlu0 %v3615
    %v3617 = vpop.xlane.xlu0 %3616
    %v3618 = vsel %vm723, %v3596, -inf
    %3619 = vmax.xlane.f32.xlu0 %v3618
    %v3620 = vpop.xlane.xlu0 %3619
    %v3621 = vsel %vm719, %v3597, -inf
    %3622 = vmax.xlane.f32.xlu0 %v3621
    %v3623 = vpop.xlane.xlu0 %3622
    %v3624 = vsel %vm723, %v3598, -inf
    %3625 = vmax.xlane.f32.xlu0 %v3624
    %v3626 = vpop.xlane.xlu0 %3625
    %v3627 = vsel %vm719, %v3599, -inf
    %3628 = vmax.xlane.f32.xlu0 %v3627
    %v3629 = vpop.xlane.xlu0 %3628
    %v3630 = vsel %vm723, %v3600, -inf
    %3631 = vmax.xlane.f32.xlu0 %v3630
    %v3632 = vpop.xlane.xlu0 %3631
    %v3633 = vsel %vm719, %v3601, -inf
    %3634 = vmax.xlane.f32.xlu0 %v3633
    %v3635 = vpop.xlane.xlu0 %3634
    %v3636 = vsel %vm723, %v3602, -inf
    %3637 = vmax.xlane.f32.xlu0 %v3636
    %v3638 = vpop.xlane.xlu0 %3637
    %v3639 = vsel %vm719, %v3603, -inf
    %3640 = vmax.xlane.f32.xlu0 %v3639
    %v3641 = vpop.xlane.xlu0 %3640
    %v3642 = vsel %vm723, %v3604, -inf
    %3643 = vmax.xlane.f32.xlu0 %v3642
    %v3644 = vpop.xlane.xlu0 %3643
    %v3645 = vsel %vm719, %v3605, -inf
    %3646 = vmax.xlane.f32.xlu0 %v3645
    %v3647 = vpop.xlane.xlu0 %3646
    %v3648 = vsel %vm723, %v3606, -inf
    %3649 = vmax.xlane.f32.xlu0 %v3648
    %v3650 = vpop.xlane.xlu0 %3649
    %v3651 = vsel %vm719, %v3607, -inf
    %3652 = vmax.xlane.f32.xlu0 %v3651
    %v3653 = vpop.xlane.xlu0 %3652
    %v3654 = vsel %vm723, %v3608, -inf
    %3655 = vmax.xlane.f32.xlu0 %v3654
    %v3656 = vpop.xlane.xlu0 %3655
    %v3657 = vsub.f32 %v3593, %v3611
    %v3658 = vsub.f32 %v3594, %v3614
    %v3659 = vsub.f32 %v3595, %v3617
    %v3660 = vsub.f32 %v3596, %v3620
    %v3661 = vsub.f32 %v3597, %v3623
    %v3662 = vsub.f32 %v3598, %v3626
    %v3663 = vsub.f32 %v3599, %v3629
    %v3664 = vsub.f32 %v3600, %v3632
    %v3665 = vsub.f32 %v3601, %v3635
    %v3666 = vsub.f32 %v3602, %v3638
    %v3667 = vsub.f32 %v3603, %v3641
    %v3668 = vsub.f32 %v3604, %v3644
    %v3669 = vsub.f32 %v3605, %v3647
    %v3670 = vsub.f32 %v3606, %v3650
    %v3671 = vsub.f32 %v3607, %v3653
    %v3672 = vsub.f32 %v3608, %v3656
    %v3673 = vmul.f32 %v3657, 1.442695
    %v3674 = vpow.pop %v3673
    %v3675 = vmul.f32 %v3658, 1.442695
    %v3676 = vpow.pop %v3675
    %v3677 = vmul.f32 %v3659, 1.442695
    %v3678 = vpow.pop %v3677
    %v3679 = vmul.f32 %v3660, 1.442695
    %v3680 = vpow.pop %v3679
    %v3681 = vmul.f32 %v3661, 1.442695
    %v3682 = vpow.pop %v3681
    %v3683 = vmul.f32 %v3662, 1.442695
    %v3684 = vpow.pop %v3683
    %v3685 = vmul.f32 %v3663, 1.442695
    %v3686 = vpow.pop %v3685
    %v3687 = vmul.f32 %v3664, 1.442695
    %v3688 = vpow.pop %v3687
    %v3689 = vmul.f32 %v3665, 1.442695
    %v3690 = vpow.pop %v3689
    %v3691 = vmul.f32 %v3666, 1.442695
    %v3692 = vpow.pop %v3691
    %v3693 = vmul.f32 %v3667, 1.442695
    %v3694 = vpow.pop %v3693
    %v3695 = vmul.f32 %v3668, 1.442695
    %v3696 = vpow.pop %v3695
    %v3697 = vmul.f32 %v3669, 1.442695
    %v3698 = vpow.pop %v3697
    %v3699 = vmul.f32 %v3670, 1.442695
    %v3700 = vpow.pop %v3699
    %v3701 = vmul.f32 %v3671, 1.442695
    %v3702 = vpow.pop %v3701
    %v3703 = vmul.f32 %v3672, 1.442695
    %v3704 = vpow.pop %v3703
    %v3705 = vsel %vm719, %v3674, 0.0
    %3706 = vadd.xlane.f32.xlu0 %v3705
    %v3707 = vpop.xlane.xlu0 %3706
    %v3708 = vsel %vm723, %v3676, 0.0
    %3709 = vadd.xlane.f32.xlu0 %v3708
    %v3710 = vpop.xlane.xlu0 %3709
    %v3711 = vsel %vm719, %v3678, 0.0
    %3712 = vadd.xlane.f32.xlu0 %v3711
    %v3713 = vpop.xlane.xlu0 %3712
    %v3714 = vsel %vm723, %v3680, 0.0
    %3715 = vadd.xlane.f32.xlu0 %v3714
    %v3716 = vpop.xlane.xlu0 %3715
    %v3717 = vsel %vm719, %v3682, 0.0
    %3718 = vadd.xlane.f32.xlu0 %v3717
    %v3719 = vpop.xlane.xlu0 %3718
    %v3720 = vsel %vm723, %v3684, 0.0
    %3721 = vadd.xlane.f32.xlu0 %v3720
    %v3722 = vpop.xlane.xlu0 %3721
    %v3723 = vsel %vm719, %v3686, 0.0
    %3724 = vadd.xlane.f32.xlu0 %v3723
    %v3725 = vpop.xlane.xlu0 %3724
    %v3726 = vsel %vm723, %v3688, 0.0
    %3727 = vadd.xlane.f32.xlu0 %v3726
    %v3728 = vpop.xlane.xlu0 %3727
    %v3729 = vsel %vm719, %v3690, 0.0
    %3730 = vadd.xlane.f32.xlu0 %v3729
    %v3731 = vpop.xlane.xlu0 %3730
    %v3732 = vsel %vm723, %v3692, 0.0
    %3733 = vadd.xlane.f32.xlu0 %v3732
    %v3734 = vpop.xlane.xlu0 %3733
    %v3735 = vsel %vm719, %v3694, 0.0
    %3736 = vadd.xlane.f32.xlu0 %v3735
    %v3737 = vpop.xlane.xlu0 %3736
    %v3738 = vsel %vm723, %v3696, 0.0
    %3739 = vadd.xlane.f32.xlu0 %v3738
    %v3740 = vpop.xlane.xlu0 %3739
    %v3741 = vsel %vm719, %v3698, 0.0
    %3742 = vadd.xlane.f32.xlu0 %v3741
    %v3743 = vpop.xlane.xlu0 %3742
    %v3744 = vsel %vm723, %v3700, 0.0
    %3745 = vadd.xlane.f32.xlu0 %v3744
    %v3746 = vpop.xlane.xlu0 %3745
    %v3747 = vsel %vm719, %v3702, 0.0
    %3748 = vadd.xlane.f32.xlu0 %v3747
    %v3749 = vpop.xlane.xlu0 %3748
    %v3750 = vsel %vm723, %v3704, 0.0
    %3751 = vadd.xlane.f32.xlu0 %v3750
    %v3752 = vpop.xlane.xlu0 %3751
    %v3753 = vlog2.pop %v3707
    %v3754 = vmul.f32 %v3753, 0.6931472
    %v3755 = vlog2.pop %v3710
    %v3756 = vmul.f32 %v3755, 0.6931472
    %v3757 = vlog2.pop %v3713
    %v3758 = vmul.f32 %v3757, 0.6931472
    %v3759 = vlog2.pop %v3716
    %v3760 = vmul.f32 %v3759, 0.6931472
    %v3761 = vlog2.pop %v3719
    %v3762 = vmul.f32 %v3761, 0.6931472
    %v3763 = vlog2.pop %v3722
    %v3764 = vmul.f32 %v3763, 0.6931472
    %v3765 = vlog2.pop %v3725
    %v3766 = vmul.f32 %v3765, 0.6931472
    %v3767 = vlog2.pop %v3728
    %v3768 = vmul.f32 %v3767, 0.6931472
    %v3769 = vlog2.pop %v3731
    %v3770 = vmul.f32 %v3769, 0.6931472
    %v3771 = vlog2.pop %v3734
    %v3772 = vmul.f32 %v3771, 0.6931472
    %v3773 = vlog2.pop %v3737
    %v3774 = vmul.f32 %v3773, 0.6931472
    %v3775 = vlog2.pop %v3740
    %v3776 = vmul.f32 %v3775, 0.6931472
    %v3777 = vlog2.pop %v3743
    %v3778 = vmul.f32 %v3777, 0.6931472
    %v3779 = vlog2.pop %v3746
    %v3780 = vmul.f32 %v3779, 0.6931472
    %v3781 = vlog2.pop %v3749
    %v3782 = vmul.f32 %v3781, 0.6931472
    %v3783 = vlog2.pop %v3752
    %v3784 = vmul.f32 %v3783, 0.6931472
    %v3785 = vadd.f32 %v3611, %v3754
    %v3786 = vadd.f32 %v3614, %v3756
    %v3787 = vadd.f32 %v3617, %v3758
    %v3788 = vadd.f32 %v3620, %v3760
    %v3789 = vadd.f32 %v3623, %v3762
    %v3790 = vadd.f32 %v3626, %v3764
    %v3791 = vadd.f32 %v3629, %v3766
    %v3792 = vadd.f32 %v3632, %v3768
    %v3793 = vadd.f32 %v3635, %v3770
    %v3794 = vadd.f32 %v3638, %v3772
    %v3795 = vadd.f32 %v3641, %v3774
    %v3796 = vadd.f32 %v3644, %v3776
    %v3797 = vadd.f32 %v3647, %v3778
    %v3798 = vadd.f32 %v3650, %v3780
    %v3799 = vadd.f32 %v3653, %v3782
    %v3800 = vadd.f32 %v3656, %v3784
    %v3801 = vlaneseq
    %v3802 = vshrl.u32 %v3801, 7
    %v3803 = vsub.s32 6, %v3802
    %v3804 = vrot.slane %v513, %v3803
    %s3806 = sor.u32 256, 253
    %3807 = vbcast.lane.b32.xlu0 %v3804, %s3806
    %v3808 = vpop.permute.xlu0 %3807
    %s3810 = sor.u32 256, 5
    %3811 = vbcast.lane.b32.xlu0 %v3804, %s3810
    %v3812 = vpop.permute.xlu0 %3811
    %v3813 = vlaneseq
    %v3814 = vshrl.u32 %v3813, 7
    %v3815 = vsub.s32 6, %v3814
    %v3816 = vrot.slane %v514, %v3815
    %s3818 = sor.u32 256, 253
    %3819 = vbcast.lane.b32.xlu0 %v3816, %s3818
    %v3820 = vpop.permute.xlu0 %3819
    %s3822 = sor.u32 256, 5
    %3823 = vbcast.lane.b32.xlu0 %v3816, %s3822
    %v3824 = vpop.permute.xlu0 %3823
    %v3825 = vlaneseq
    %v3826 = vshrl.u32 %v3825, 7
    %v3827 = vsub.s32 6, %v3826
    %v3828 = vrot.slane %v515, %v3827
    %s3830 = sor.u32 256, 253
    %3831 = vbcast.lane.b32.xlu0 %v3828, %s3830
    %v3832 = vpop.permute.xlu0 %3831
    %s3834 = sor.u32 256, 5
    %3835 = vbcast.lane.b32.xlu0 %v3828, %s3834
    %v3836 = vpop.permute.xlu0 %3835
    %v3837 = vlaneseq
    %v3838 = vshrl.u32 %v3837, 7
    %v3839 = vsub.s32 6, %v3838
    %v3840 = vrot.slane %v516, %v3839
    %s3842 = sor.u32 256, 253
    %3843 = vbcast.lane.b32.xlu0 %v3840, %s3842
    %v3844 = vpop.permute.xlu0 %3843
    %s3846 = sor.u32 256, 5
    %3847 = vbcast.lane.b32.xlu0 %v3840, %s3846
    %v3848 = vpop.permute.xlu0 %3847
    %v3849 = vlaneseq
    %v3850 = vshrl.u32 %v3849, 7
    %v3851 = vsub.s32 6, %v3850
    %v3852 = vrot.slane %v517, %v3851
    %s3854 = sor.u32 256, 253
    %3855 = vbcast.lane.b32.xlu0 %v3852, %s3854
    %v3856 = vpop.permute.xlu0 %3855
    %s3858 = sor.u32 256, 5
    %3859 = vbcast.lane.b32.xlu0 %v3852, %s3858
    %v3860 = vpop.permute.xlu0 %3859
    %v3861 = vlaneseq
    %v3862 = vshrl.u32 %v3861, 7
    %v3863 = vsub.s32 6, %v3862
    %v3864 = vrot.slane %v518, %v3863
    %s3866 = sor.u32 256, 253
    %3867 = vbcast.lane.b32.xlu0 %v3864, %s3866
    %v3868 = vpop.permute.xlu0 %3867
    %s3870 = sor.u32 256, 5
    %3871 = vbcast.lane.b32.xlu0 %v3864, %s3870
    %v3872 = vpop.permute.xlu0 %3871
    %v3873 = vlaneseq
    %v3874 = vshrl.u32 %v3873, 7
    %v3875 = vsub.s32 6, %v3874
    %v3876 = vrot.slane %v519, %v3875
    %s3878 = sor.u32 256, 253
    %3879 = vbcast.lane.b32.xlu0 %v3876, %s3878
    %v3880 = vpop.permute.xlu0 %3879
    %s3882 = sor.u32 256, 5
    %3883 = vbcast.lane.b32.xlu0 %v3876, %s3882
    %v3884 = vpop.permute.xlu0 %3883
    %v3885 = vlaneseq
    %v3886 = vshrl.u32 %v3885, 7
    %v3887 = vsub.s32 6, %v3886
    %v3888 = vrot.slane %v520, %v3887
    %s3890 = sor.u32 256, 253
    %3891 = vbcast.lane.b32.xlu0 %v3888, %s3890
    %v3892 = vpop.permute.xlu0 %3891
    %s3894 = sor.u32 256, 5
    %3895 = vbcast.lane.b32.xlu0 %v3888, %s3894
    %v3896 = vpop.permute.xlu0 %3895
    %v3913 = vadd.f32 %v3785, %v3808
    %v3914 = vadd.f32 %v3786, %v3812
    %v3915 = vadd.f32 %v3787, %v3820
    %v3916 = vadd.f32 %v3788, %v3824
    %v3917 = vadd.f32 %v3789, %v3832
    %v3918 = vadd.f32 %v3790, %v3836
    %v3919 = vadd.f32 %v3791, %v3844
    %v3920 = vadd.f32 %v3792, %v3848
    %v3921 = vadd.f32 %v3793, %v3856
    %v3922 = vadd.f32 %v3794, %v3860
    %v3923 = vadd.f32 %v3795, %v3868
    %v3924 = vadd.f32 %v3796, %v3872
    %v3925 = vadd.f32 %v3797, %v3880
    %v3926 = vadd.f32 %v3798, %v3884
    %v3927 = vadd.f32 %v3799, %v3892
    %v3928 = vadd.f32 %v3800, %v3896
    %v3929 = vsel %vm3502, 1, 0
    %3930 = vset.pattern.permute.xlu0 28
    %3931 = vperm.xlu0 %3930, %v3929
    %v3932 = vpop.permute.xlu0 %3931
    %vm3933 = vcmp.eq.s32.totalorder %v3932, 1
    %3950 = vset.pattern.permute.xlu0 0
    %3951 = vperm.xlu0 %3950, %v3913
    %v3952 = vpop.permute.xlu0 %3951
    %3953 = vset.pattern.permute.xlu0 0
    %3954 = vperm.xlu0 %3953, %v3914
    %v3955 = vpop.permute.xlu0 %3954
    %3956 = vset.pattern.permute.xlu0 0
    %3957 = vperm.xlu0 %3956, %v3915
    %v3958 = vpop.permute.xlu0 %3957
    %3959 = vset.pattern.permute.xlu0 0
    %3960 = vperm.xlu0 %3959, %v3916
    %v3961 = vpop.permute.xlu0 %3960
    %3962 = vset.pattern.permute.xlu0 0
    %3963 = vperm.xlu0 %3962, %v3917
    %v3964 = vpop.permute.xlu0 %3963
    %3965 = vset.pattern.permute.xlu0 0
    %3966 = vperm.xlu0 %3965, %v3918
    %v3967 = vpop.permute.xlu0 %3966
    %3968 = vset.pattern.permute.xlu0 0
    %3969 = vperm.xlu0 %3968, %v3919
    %v3970 = vpop.permute.xlu0 %3969
    %3971 = vset.pattern.permute.xlu0 0
    %3972 = vperm.xlu0 %3971, %v3920
    %v3973 = vpop.permute.xlu0 %3972
    %3974 = vset.pattern.permute.xlu0 0
    %3975 = vperm.xlu0 %3974, %v3921
    %v3976 = vpop.permute.xlu0 %3975
    %3977 = vset.pattern.permute.xlu0 0
    %3978 = vperm.xlu0 %3977, %v3922
    %v3979 = vpop.permute.xlu0 %3978
    %3980 = vset.pattern.permute.xlu0 0
    %3981 = vperm.xlu0 %3980, %v3923
    %v3982 = vpop.permute.xlu0 %3981
    %3983 = vset.pattern.permute.xlu0 0
    %3984 = vperm.xlu0 %3983, %v3924
    %v3985 = vpop.permute.xlu0 %3984
    %3986 = vset.pattern.permute.xlu0 0
    %3987 = vperm.xlu0 %3986, %v3925
    %v3988 = vpop.permute.xlu0 %3987
    %3989 = vset.pattern.permute.xlu0 0
    %3990 = vperm.xlu0 %3989, %v3926
    %v3991 = vpop.permute.xlu0 %3990
    %3992 = vset.pattern.permute.xlu0 0
    %3993 = vperm.xlu0 %3992, %v3927
    %v3994 = vpop.permute.xlu0 %3993
    %3995 = vset.pattern.permute.xlu0 0
    %3996 = vperm.xlu0 %3995, %v3928
    %v3997 = vpop.permute.xlu0 %3996
    %v3998 = vlaneseq
    %v3999 = vshrl.u32 %v3998, 7
    %v4000 = vsub.s32 %v1110, %v3999
    %v4001 = vrot.slane %v3952, %v4000
    %v4002 = vlaneseq
    %v4003 = vshrl.u32 %v4002, 7
    %v4004 = vsub.s32 %v1115, %v4003
    %v4005 = vrot.slane %v3955, %v4004
    %v4006 = vsel %vm1120, %v4005, %v4001
    %v4007 = vlaneseq
    %v4008 = vshrl.u32 %v4007, 7
    %v4009 = vsub.s32 %v1110, %v4008
    %v4010 = vrot.slane %v3958, %v4009
    %v4011 = vlaneseq
    %v4012 = vshrl.u32 %v4011, 7
    %v4013 = vsub.s32 %v1115, %v4012
    %v4014 = vrot.slane %v3961, %v4013
    %v4015 = vsel %vm1120, %v4014, %v4010
    %v4016 = vlaneseq
    %v4017 = vshrl.u32 %v4016, 7
    %v4018 = vsub.s32 %v1110, %v4017
    %v4019 = vrot.slane %v3964, %v4018
    %v4020 = vlaneseq
    %v4021 = vshrl.u32 %v4020, 7
    %v4022 = vsub.s32 %v1115, %v4021
    %v4023 = vrot.slane %v3967, %v4022
    %v4024 = vsel %vm1120, %v4023, %v4019
    %v4025 = vlaneseq
    %v4026 = vshrl.u32 %v4025, 7
    %v4027 = vsub.s32 %v1110, %v4026
    %v4028 = vrot.slane %v3970, %v4027
    %v4029 = vlaneseq
    %v4030 = vshrl.u32 %v4029, 7
    %v4031 = vsub.s32 %v1115, %v4030
    %v4032 = vrot.slane %v3973, %v4031
    %v4033 = vsel %vm1120, %v4032, %v4028
    %v4034 = vlaneseq
    %v4035 = vshrl.u32 %v4034, 7
    %v4036 = vsub.s32 %v1110, %v4035
    %v4037 = vrot.slane %v3976, %v4036
    %v4038 = vlaneseq
    %v4039 = vshrl.u32 %v4038, 7
    %v4040 = vsub.s32 %v1115, %v4039
    %v4041 = vrot.slane %v3979, %v4040
    %v4042 = vsel %vm1120, %v4041, %v4037
    %v4043 = vlaneseq
    %v4044 = vshrl.u32 %v4043, 7
    %v4045 = vsub.s32 %v1110, %v4044
    %v4046 = vrot.slane %v3982, %v4045
    %v4047 = vlaneseq
    %v4048 = vshrl.u32 %v4047, 7
    %v4049 = vsub.s32 %v1115, %v4048
    %v4050 = vrot.slane %v3985, %v4049
    %v4051 = vsel %vm1120, %v4050, %v4046
    %v4052 = vlaneseq
    %v4053 = vshrl.u32 %v4052, 7
    %v4054 = vsub.s32 %v1110, %v4053
    %v4055 = vrot.slane %v3988, %v4054
    %v4056 = vlaneseq
    %v4057 = vshrl.u32 %v4056, 7
    %v4058 = vsub.s32 %v1115, %v4057
    %v4059 = vrot.slane %v3991, %v4058
    %v4060 = vsel %vm1120, %v4059, %v4055
    %v4061 = vlaneseq
    %v4062 = vshrl.u32 %v4061, 7
    %v4063 = vsub.s32 %v1110, %v4062
    %v4064 = vrot.slane %v3994, %v4063
    %v4065 = vlaneseq
    %v4066 = vshrl.u32 %v4065, 7
    %v4067 = vsub.s32 %v1115, %v4066
    %v4068 = vrot.slane %v3997, %v4067
    %v4069 = vsel %vm1120, %v4068, %v4064
    %v4070 = vsel %vm590, %v4015, %v4006
    %v4071 = vsel %vm593, %v4024, %v4070
    %v4072 = vsel %vm596, %v4033, %v4071
    %v4073 = vsel %vm599, %v4042, %v4072
    %v4074 = vsel %vm602, %v4051, %v4073
    %v4075 = vsel %vm605, %v4060, %v4074
    %v4076 = vsel %vm608, %v4069, %v4075
    %v4078 = vsel %vm3933, %v4076, %v3501
    %vm4079 = vcmp.gt.s32.totalorder %v15, 7
    %v4081 = vcombine.high %v4078, %v4078
    %v4083 = vunpack.c.l.s4 1966171168
    %v4084 = vunpack.c.0.s8 %v4083
    %v4085 = vlaneseq
    %v4086 = vshrl.u32 %v4085, 7
    %v4087 = vsub.s32 %v4084, %v4086
    %v4088 = vrot.slane %v4078, %v4087
    %v4090 = vunpack.c.l.s4 1966171168
    %v4091 = vunpack.c.0.s8 %v4090
    %v4092 = vlaneseq
    %v4093 = vshrl.u32 %v4092, 7
    %v4094 = vsub.s32 %v4091, %v4093
    %v4095 = vrot.slane %v4081, %v4094
    %v4096 = vcombine.high %v4088, %v4088
    %v4097 = vcombine.high %v4095, %v4095
    %v4099 = vunpack.c.l.s4 1966171168
    %v4100 = vunpack.c.0.s8 %v4099
    %v4101 = vlaneseq
    %v4102 = vshrl.u32 %v4101, 7
    %v4103 = vsub.s32 %v4100, %v4102
    %v4104 = vrot.slane %v4088, %v4103
    %v4106 = vunpack.c.l.s4 1966171168
    %v4107 = vunpack.c.0.s8 %v4106
    %v4108 = vlaneseq
    %v4109 = vshrl.u32 %v4108, 7
    %v4110 = vsub.s32 %v4107, %v4109
    %v4111 = vrot.slane %v4095, %v4110
    %v4113 = vunpack.c.l.s4 1966171168
    %v4114 = vunpack.c.0.s8 %v4113
    %v4115 = vlaneseq
    %v4116 = vshrl.u32 %v4115, 7
    %v4117 = vsub.s32 %v4114, %v4116
    %v4118 = vrot.slane %v4096, %v4117
    %v4120 = vunpack.c.l.s4 1966171168
    %v4121 = vunpack.c.0.s8 %v4120
    %v4122 = vlaneseq
    %v4123 = vshrl.u32 %v4122, 7
    %v4124 = vsub.s32 %v4121, %v4123
    %v4125 = vrot.slane %v4097, %v4124
    %v4126 = vcombine.high %v4104, %v4104
    %v4127 = vcombine.high %v4111, %v4111
    %v4128 = vcombine.high %v4118, %v4118
    %v4129 = vcombine.high %v4125, %v4125
    %v4130 = vlaneseq
    %v4131 = vshrl.u32 %v4130, 7
    %v4132 = vsub.s32 0, %v4131
    %v4133 = vrot.slane %v4104, %v4132
    %v4134 = vlaneseq
    %v4135 = vshrl.u32 %v4134, 7
    %v4136 = vsub.s32 0, %v4135
    %v4137 = vrot.slane %v4118, %v4136
    %v4138 = vlaneseq
    %v4139 = vshrl.u32 %v4138, 7
    %v4140 = vsub.s32 0, %v4139
    %v4141 = vrot.slane %v4126, %v4140
    %v4142 = vlaneseq
    %v4143 = vshrl.u32 %v4142, 7
    %v4144 = vsub.s32 0, %v4143
    %v4145 = vrot.slane %v4128, %v4144
    %v4146 = vlaneseq
    %v4147 = vshrl.u32 %v4146, 7
    %v4148 = vsub.s32 0, %v4147
    %v4149 = vrot.slane %v4111, %v4148
    %v4150 = vlaneseq
    %v4151 = vshrl.u32 %v4150, 7
    %v4152 = vsub.s32 0, %v4151
    %v4153 = vrot.slane %v4125, %v4152
    %v4154 = vlaneseq
    %v4155 = vshrl.u32 %v4154, 7
    %v4156 = vsub.s32 0, %v4155
    %v4157 = vrot.slane %v4127, %v4156
    %v4158 = vlaneseq
    %v4159 = vshrl.u32 %v4158, 7
    %v4160 = vsub.s32 0, %v4159
    %v4161 = vrot.slane %v4129, %v4160
    %v4170 = vadd.f32 %v4133, %v22
    %v4171 = vadd.f32 %v4133, %v23
    %v4172 = vadd.f32 %v4137, %v22
    %v4173 = vadd.f32 %v4137, %v23
    %v4174 = vadd.f32 %v4141, %v22
    %v4175 = vadd.f32 %v4141, %v23
    %v4176 = vadd.f32 %v4145, %v22
    %v4177 = vadd.f32 %v4145, %v23
    %v4178 = vadd.f32 %v4149, %v22
    %v4179 = vadd.f32 %v4149, %v23
    %v4180 = vadd.f32 %v4153, %v22
    %v4181 = vadd.f32 %v4153, %v23
    %v4182 = vadd.f32 %v4157, %v22
    %v4183 = vadd.f32 %v4157, %v23
    %v4184 = vadd.f32 %v4161, %v22
    %v4185 = vadd.f32 %v4161, %v23
    %v4186 = vsel %vm719, %v4170, -inf
    %4187 = vmax.xlane.f32.xlu0 %v4186
    %v4188 = vpop.xlane.xlu0 %4187
    %v4189 = vsel %vm723, %v4171, -inf
    %4190 = vmax.xlane.f32.xlu0 %v4189
    %v4191 = vpop.xlane.xlu0 %4190
    %v4192 = vsel %vm719, %v4172, -inf
    %4193 = vmax.xlane.f32.xlu0 %v4192
    %v4194 = vpop.xlane.xlu0 %4193
    %v4195 = vsel %vm723, %v4173, -inf
    %4196 = vmax.xlane.f32.xlu0 %v4195
    %v4197 = vpop.xlane.xlu0 %4196
    %v4198 = vsel %vm719, %v4174, -inf
    %4199 = vmax.xlane.f32.xlu0 %v4198
    %v4200 = vpop.xlane.xlu0 %4199
    %v4201 = vsel %vm723, %v4175, -inf
    %4202 = vmax.xlane.f32.xlu0 %v4201
    %v4203 = vpop.xlane.xlu0 %4202
    %v4204 = vsel %vm719, %v4176, -inf
    %4205 = vmax.xlane.f32.xlu0 %v4204
    %v4206 = vpop.xlane.xlu0 %4205
    %v4207 = vsel %vm723, %v4177, -inf
    %4208 = vmax.xlane.f32.xlu0 %v4207
    %v4209 = vpop.xlane.xlu0 %4208
    %v4210 = vsel %vm719, %v4178, -inf
    %4211 = vmax.xlane.f32.xlu0 %v4210
    %v4212 = vpop.xlane.xlu0 %4211
    %v4213 = vsel %vm723, %v4179, -inf
    %4214 = vmax.xlane.f32.xlu0 %v4213
    %v4215 = vpop.xlane.xlu0 %4214
    %v4216 = vsel %vm719, %v4180, -inf
    %4217 = vmax.xlane.f32.xlu0 %v4216
    %v4218 = vpop.xlane.xlu0 %4217
    %v4219 = vsel %vm723, %v4181, -inf
    %4220 = vmax.xlane.f32.xlu0 %v4219
    %v4221 = vpop.xlane.xlu0 %4220
    %v4222 = vsel %vm719, %v4182, -inf
    %4223 = vmax.xlane.f32.xlu0 %v4222
    %v4224 = vpop.xlane.xlu0 %4223
    %v4225 = vsel %vm723, %v4183, -inf
    %4226 = vmax.xlane.f32.xlu0 %v4225
    %v4227 = vpop.xlane.xlu0 %4226
    %v4228 = vsel %vm719, %v4184, -inf
    %4229 = vmax.xlane.f32.xlu0 %v4228
    %v4230 = vpop.xlane.xlu0 %4229
    %v4231 = vsel %vm723, %v4185, -inf
    %4232 = vmax.xlane.f32.xlu0 %v4231
    %v4233 = vpop.xlane.xlu0 %4232
    %v4234 = vsub.f32 %v4170, %v4188
    %v4235 = vsub.f32 %v4171, %v4191
    %v4236 = vsub.f32 %v4172, %v4194
    %v4237 = vsub.f32 %v4173, %v4197
    %v4238 = vsub.f32 %v4174, %v4200
    %v4239 = vsub.f32 %v4175, %v4203
    %v4240 = vsub.f32 %v4176, %v4206
    %v4241 = vsub.f32 %v4177, %v4209
    %v4242 = vsub.f32 %v4178, %v4212
    %v4243 = vsub.f32 %v4179, %v4215
    %v4244 = vsub.f32 %v4180, %v4218
    %v4245 = vsub.f32 %v4181, %v4221
    %v4246 = vsub.f32 %v4182, %v4224
    %v4247 = vsub.f32 %v4183, %v4227
    %v4248 = vsub.f32 %v4184, %v4230
    %v4249 = vsub.f32 %v4185, %v4233
    %v4250 = vmul.f32 %v4234, 1.442695
    %v4251 = vpow.pop %v4250
    %v4252 = vmul.f32 %v4235, 1.442695
    %v4253 = vpow.pop %v4252
    %v4254 = vmul.f32 %v4236, 1.442695
    %v4255 = vpow.pop %v4254
    %v4256 = vmul.f32 %v4237, 1.442695
    %v4257 = vpow.pop %v4256
    %v4258 = vmul.f32 %v4238, 1.442695
    %v4259 = vpow.pop %v4258
    %v4260 = vmul.f32 %v4239, 1.442695
    %v4261 = vpow.pop %v4260
    %v4262 = vmul.f32 %v4240, 1.442695
    %v4263 = vpow.pop %v4262
    %v4264 = vmul.f32 %v4241, 1.442695
    %v4265 = vpow.pop %v4264
    %v4266 = vmul.f32 %v4242, 1.442695
    %v4267 = vpow.pop %v4266
    %v4268 = vmul.f32 %v4243, 1.442695
    %v4269 = vpow.pop %v4268
    %v4270 = vmul.f32 %v4244, 1.442695
    %v4271 = vpow.pop %v4270
    %v4272 = vmul.f32 %v4245, 1.442695
    %v4273 = vpow.pop %v4272
    %v4274 = vmul.f32 %v4246, 1.442695
    %v4275 = vpow.pop %v4274
    %v4276 = vmul.f32 %v4247, 1.442695
    %v4277 = vpow.pop %v4276
    %v4278 = vmul.f32 %v4248, 1.442695
    %v4279 = vpow.pop %v4278
    %v4280 = vmul.f32 %v4249, 1.442695
    %v4281 = vpow.pop %v4280
    %v4282 = vsel %vm719, %v4251, 0.0
    %4283 = vadd.xlane.f32.xlu0 %v4282
    %v4284 = vpop.xlane.xlu0 %4283
    %v4285 = vsel %vm723, %v4253, 0.0
    %4286 = vadd.xlane.f32.xlu0 %v4285
    %v4287 = vpop.xlane.xlu0 %4286
    %v4288 = vsel %vm719, %v4255, 0.0
    %4289 = vadd.xlane.f32.xlu0 %v4288
    %v4290 = vpop.xlane.xlu0 %4289
    %v4291 = vsel %vm723, %v4257, 0.0
    %4292 = vadd.xlane.f32.xlu0 %v4291
    %v4293 = vpop.xlane.xlu0 %4292
    %v4294 = vsel %vm719, %v4259, 0.0
    %4295 = vadd.xlane.f32.xlu0 %v4294
    %v4296 = vpop.xlane.xlu0 %4295
    %v4297 = vsel %vm723, %v4261, 0.0
    %4298 = vadd.xlane.f32.xlu0 %v4297
    %v4299 = vpop.xlane.xlu0 %4298
    %v4300 = vsel %vm719, %v4263, 0.0
    %4301 = vadd.xlane.f32.xlu0 %v4300
    %v4302 = vpop.xlane.xlu0 %4301
    %v4303 = vsel %vm723, %v4265, 0.0
    %4304 = vadd.xlane.f32.xlu0 %v4303
    %v4305 = vpop.xlane.xlu0 %4304
    %v4306 = vsel %vm719, %v4267, 0.0
    %4307 = vadd.xlane.f32.xlu0 %v4306
    %v4308 = vpop.xlane.xlu0 %4307
    %v4309 = vsel %vm723, %v4269, 0.0
    %4310 = vadd.xlane.f32.xlu0 %v4309
    %v4311 = vpop.xlane.xlu0 %4310
    %v4312 = vsel %vm719, %v4271, 0.0
    %4313 = vadd.xlane.f32.xlu0 %v4312
    %v4314 = vpop.xlane.xlu0 %4313
    %v4315 = vsel %vm723, %v4273, 0.0
    %4316 = vadd.xlane.f32.xlu0 %v4315
    %v4317 = vpop.xlane.xlu0 %4316
    %v4318 = vsel %vm719, %v4275, 0.0
    %4319 = vadd.xlane.f32.xlu0 %v4318
    %v4320 = vpop.xlane.xlu0 %4319
    %v4321 = vsel %vm723, %v4277, 0.0
    %4322 = vadd.xlane.f32.xlu0 %v4321
    %v4323 = vpop.xlane.xlu0 %4322
    %v4324 = vsel %vm719, %v4279, 0.0
    %4325 = vadd.xlane.f32.xlu0 %v4324
    %v4326 = vpop.xlane.xlu0 %4325
    %v4327 = vsel %vm723, %v4281, 0.0
    %4328 = vadd.xlane.f32.xlu0 %v4327
    %v4329 = vpop.xlane.xlu0 %4328
    %v4330 = vlog2.pop %v4284
    %v4331 = vmul.f32 %v4330, 0.6931472
    %v4332 = vlog2.pop %v4287
    %v4333 = vmul.f32 %v4332, 0.6931472
    %v4334 = vlog2.pop %v4290
    %v4335 = vmul.f32 %v4334, 0.6931472
    %v4336 = vlog2.pop %v4293
    %v4337 = vmul.f32 %v4336, 0.6931472
    %v4338 = vlog2.pop %v4296
    %v4339 = vmul.f32 %v4338, 0.6931472
    %v4340 = vlog2.pop %v4299
    %v4341 = vmul.f32 %v4340, 0.6931472
    %v4342 = vlog2.pop %v4302
    %v4343 = vmul.f32 %v4342, 0.6931472
    %v4344 = vlog2.pop %v4305
    %v4345 = vmul.f32 %v4344, 0.6931472
    %v4346 = vlog2.pop %v4308
    %v4347 = vmul.f32 %v4346, 0.6931472
    %v4348 = vlog2.pop %v4311
    %v4349 = vmul.f32 %v4348, 0.6931472
    %v4350 = vlog2.pop %v4314
    %v4351 = vmul.f32 %v4350, 0.6931472
    %v4352 = vlog2.pop %v4317
    %v4353 = vmul.f32 %v4352, 0.6931472
    %v4354 = vlog2.pop %v4320
    %v4355 = vmul.f32 %v4354, 0.6931472
    %v4356 = vlog2.pop %v4323
    %v4357 = vmul.f32 %v4356, 0.6931472
    %v4358 = vlog2.pop %v4326
    %v4359 = vmul.f32 %v4358, 0.6931472
    %v4360 = vlog2.pop %v4329
    %v4361 = vmul.f32 %v4360, 0.6931472
    %v4362 = vadd.f32 %v4188, %v4331
    %v4363 = vadd.f32 %v4191, %v4333
    %v4364 = vadd.f32 %v4194, %v4335
    %v4365 = vadd.f32 %v4197, %v4337
    %v4366 = vadd.f32 %v4200, %v4339
    %v4367 = vadd.f32 %v4203, %v4341
    %v4368 = vadd.f32 %v4206, %v4343
    %v4369 = vadd.f32 %v4209, %v4345
    %v4370 = vadd.f32 %v4212, %v4347
    %v4371 = vadd.f32 %v4215, %v4349
    %v4372 = vadd.f32 %v4218, %v4351
    %v4373 = vadd.f32 %v4221, %v4353
    %v4374 = vadd.f32 %v4224, %v4355
    %v4375 = vadd.f32 %v4227, %v4357
    %v4376 = vadd.f32 %v4230, %v4359
    %v4377 = vadd.f32 %v4233, %v4361
    %v4378 = vlaneseq
    %v4379 = vshrl.u32 %v4378, 7
    %v4380 = vsub.s32 7, %v4379
    %v4381 = vrot.slane %v513, %v4380
    %s4383 = sor.u32 256, 253
    %4384 = vbcast.lane.b32.xlu0 %v4381, %s4383
    %v4385 = vpop.permute.xlu0 %4384
    %s4387 = sor.u32 256, 5
    %4388 = vbcast.lane.b32.xlu0 %v4381, %s4387
    %v4389 = vpop.permute.xlu0 %4388
    %v4390 = vlaneseq
    %v4391 = vshrl.u32 %v4390, 7
    %v4392 = vsub.s32 7, %v4391
    %v4393 = vrot.slane %v514, %v4392
    %s4395 = sor.u32 256, 253
    %4396 = vbcast.lane.b32.xlu0 %v4393, %s4395
    %v4397 = vpop.permute.xlu0 %4396
    %s4399 = sor.u32 256, 5
    %4400 = vbcast.lane.b32.xlu0 %v4393, %s4399
    %v4401 = vpop.permute.xlu0 %4400
    %v4402 = vlaneseq
    %v4403 = vshrl.u32 %v4402, 7
    %v4404 = vsub.s32 7, %v4403
    %v4405 = vrot.slane %v515, %v4404
    %s4407 = sor.u32 256, 253
    %4408 = vbcast.lane.b32.xlu0 %v4405, %s4407
    %v4409 = vpop.permute.xlu0 %4408
    %s4411 = sor.u32 256, 5
    %4412 = vbcast.lane.b32.xlu0 %v4405, %s4411
    %v4413 = vpop.permute.xlu0 %4412
    %v4414 = vlaneseq
    %v4415 = vshrl.u32 %v4414, 7
    %v4416 = vsub.s32 7, %v4415
    %v4417 = vrot.slane %v516, %v4416
    %s4419 = sor.u32 256, 253
    %4420 = vbcast.lane.b32.xlu0 %v4417, %s4419
    %v4421 = vpop.permute.xlu0 %4420
    %s4423 = sor.u32 256, 5
    %4424 = vbcast.lane.b32.xlu0 %v4417, %s4423
    %v4425 = vpop.permute.xlu0 %4424
    %v4426 = vlaneseq
    %v4427 = vshrl.u32 %v4426, 7
    %v4428 = vsub.s32 7, %v4427
    %v4429 = vrot.slane %v517, %v4428
    %s4431 = sor.u32 256, 253
    %4432 = vbcast.lane.b32.xlu0 %v4429, %s4431
    %v4433 = vpop.permute.xlu0 %4432
    %s4435 = sor.u32 256, 5
    %4436 = vbcast.lane.b32.xlu0 %v4429, %s4435
    %v4437 = vpop.permute.xlu0 %4436
    %v4438 = vlaneseq
    %v4439 = vshrl.u32 %v4438, 7
    %v4440 = vsub.s32 7, %v4439
    %v4441 = vrot.slane %v518, %v4440
    %s4443 = sor.u32 256, 253
    %4444 = vbcast.lane.b32.xlu0 %v4441, %s4443
    %v4445 = vpop.permute.xlu0 %4444
    %s4447 = sor.u32 256, 5
    %4448 = vbcast.lane.b32.xlu0 %v4441, %s4447
    %v4449 = vpop.permute.xlu0 %4448
    %v4450 = vlaneseq
    %v4451 = vshrl.u32 %v4450, 7
    %v4452 = vsub.s32 7, %v4451
    %v4453 = vrot.slane %v519, %v4452
    %s4455 = sor.u32 256, 253
    %4456 = vbcast.lane.b32.xlu0 %v4453, %s4455
    %v4457 = vpop.permute.xlu0 %4456
    %s4459 = sor.u32 256, 5
    %4460 = vbcast.lane.b32.xlu0 %v4453, %s4459
    %v4461 = vpop.permute.xlu0 %4460
    %v4462 = vlaneseq
    %v4463 = vshrl.u32 %v4462, 7
    %v4464 = vsub.s32 7, %v4463
    %v4465 = vrot.slane %v520, %v4464
    %s4467 = sor.u32 256, 253
    %4468 = vbcast.lane.b32.xlu0 %v4465, %s4467
    %v4469 = vpop.permute.xlu0 %4468
    %s4471 = sor.u32 256, 5
    %4472 = vbcast.lane.b32.xlu0 %v4465, %s4471
    %v4473 = vpop.permute.xlu0 %4472
    %v4490 = vadd.f32 %v4362, %v4385
    %v4491 = vadd.f32 %v4363, %v4389
    %v4492 = vadd.f32 %v4364, %v4397
    %v4493 = vadd.f32 %v4365, %v4401
    %v4494 = vadd.f32 %v4366, %v4409
    %v4495 = vadd.f32 %v4367, %v4413
    %v4496 = vadd.f32 %v4368, %v4421
    %v4497 = vadd.f32 %v4369, %v4425
    %v4498 = vadd.f32 %v4370, %v4433
    %v4499 = vadd.f32 %v4371, %v4437
    %v4500 = vadd.f32 %v4372, %v4445
    %v4501 = vadd.f32 %v4373, %v4449
    %v4502 = vadd.f32 %v4374, %v4457
    %v4503 = vadd.f32 %v4375, %v4461
    %v4504 = vadd.f32 %v4376, %v4469
    %v4505 = vadd.f32 %v4377, %v4473
    %v4506 = vsel %vm4079, 1, 0
    %4507 = vset.pattern.permute.xlu0 28
    %4508 = vperm.xlu0 %4507, %v4506
    %v4509 = vpop.permute.xlu0 %4508
    %vm4510 = vcmp.eq.s32.totalorder %v4509, 1
    %4527 = vset.pattern.permute.xlu0 0
    %4528 = vperm.xlu0 %4527, %v4490
    %v4529 = vpop.permute.xlu0 %4528
    %4530 = vset.pattern.permute.xlu0 0
    %4531 = vperm.xlu0 %4530, %v4491
    %v4532 = vpop.permute.xlu0 %4531
    %4533 = vset.pattern.permute.xlu0 0
    %4534 = vperm.xlu0 %4533, %v4492
    %v4535 = vpop.permute.xlu0 %4534
    %4536 = vset.pattern.permute.xlu0 0
    %4537 = vperm.xlu0 %4536, %v4493
    %v4538 = vpop.permute.xlu0 %4537
    %4539 = vset.pattern.permute.xlu0 0
    %4540 = vperm.xlu0 %4539, %v4494
    %v4541 = vpop.permute.xlu0 %4540
    %4542 = vset.pattern.permute.xlu0 0
    %4543 = vperm.xlu0 %4542, %v4495
    %v4544 = vpop.permute.xlu0 %4543
    %4545 = vset.pattern.permute.xlu0 0
    %4546 = vperm.xlu0 %4545, %v4496
    %v4547 = vpop.permute.xlu0 %4546
    %4548 = vset.pattern.permute.xlu0 0
    %4549 = vperm.xlu0 %4548, %v4497
    %v4550 = vpop.permute.xlu0 %4549
    %4551 = vset.pattern.permute.xlu0 0
    %4552 = vperm.xlu0 %4551, %v4498
    %v4553 = vpop.permute.xlu0 %4552
    %4554 = vset.pattern.permute.xlu0 0
    %4555 = vperm.xlu0 %4554, %v4499
    %v4556 = vpop.permute.xlu0 %4555
    %4557 = vset.pattern.permute.xlu0 0
    %4558 = vperm.xlu0 %4557, %v4500
    %v4559 = vpop.permute.xlu0 %4558
    %4560 = vset.pattern.permute.xlu0 0
    %4561 = vperm.xlu0 %4560, %v4501
    %v4562 = vpop.permute.xlu0 %4561
    %4563 = vset.pattern.permute.xlu0 0
    %4564 = vperm.xlu0 %4563, %v4502
    %v4565 = vpop.permute.xlu0 %4564
    %4566 = vset.pattern.permute.xlu0 0
    %4567 = vperm.xlu0 %4566, %v4503
    %v4568 = vpop.permute.xlu0 %4567
    %4569 = vset.pattern.permute.xlu0 0
    %4570 = vperm.xlu0 %4569, %v4504
    %v4571 = vpop.permute.xlu0 %4570
    %4572 = vset.pattern.permute.xlu0 0
    %4573 = vperm.xlu0 %4572, %v4505
    %v4574 = vpop.permute.xlu0 %4573
    %v4575 = vlaneseq
    %v4576 = vshrl.u32 %v4575, 7
    %v4577 = vsub.s32 %v1110, %v4576
    %v4578 = vrot.slane %v4529, %v4577
    %v4579 = vlaneseq
    %v4580 = vshrl.u32 %v4579, 7
    %v4581 = vsub.s32 %v1115, %v4580
    %v4582 = vrot.slane %v4532, %v4581
    %v4583 = vsel %vm1120, %v4582, %v4578
    %v4584 = vlaneseq
    %v4585 = vshrl.u32 %v4584, 7
    %v4586 = vsub.s32 %v1110, %v4585
    %v4587 = vrot.slane %v4535, %v4586
    %v4588 = vlaneseq
    %v4589 = vshrl.u32 %v4588, 7
    %v4590 = vsub.s32 %v1115, %v4589
    %v4591 = vrot.slane %v4538, %v4590
    %v4592 = vsel %vm1120, %v4591, %v4587
    %v4593 = vlaneseq
    %v4594 = vshrl.u32 %v4593, 7
    %v4595 = vsub.s32 %v1110, %v4594
    %v4596 = vrot.slane %v4541, %v4595
    %v4597 = vlaneseq
    %v4598 = vshrl.u32 %v4597, 7
    %v4599 = vsub.s32 %v1115, %v4598
    %v4600 = vrot.slane %v4544, %v4599
    %v4601 = vsel %vm1120, %v4600, %v4596
    %v4602 = vlaneseq
    %v4603 = vshrl.u32 %v4602, 7
    %v4604 = vsub.s32 %v1110, %v4603
    %v4605 = vrot.slane %v4547, %v4604
    %v4606 = vlaneseq
    %v4607 = vshrl.u32 %v4606, 7
    %v4608 = vsub.s32 %v1115, %v4607
    %v4609 = vrot.slane %v4550, %v4608
    %v4610 = vsel %vm1120, %v4609, %v4605
    %v4611 = vlaneseq
    %v4612 = vshrl.u32 %v4611, 7
    %v4613 = vsub.s32 %v1110, %v4612
    %v4614 = vrot.slane %v4553, %v4613
    %v4615 = vlaneseq
    %v4616 = vshrl.u32 %v4615, 7
    %v4617 = vsub.s32 %v1115, %v4616
    %v4618 = vrot.slane %v4556, %v4617
    %v4619 = vsel %vm1120, %v4618, %v4614
    %v4620 = vlaneseq
    %v4621 = vshrl.u32 %v4620, 7
    %v4622 = vsub.s32 %v1110, %v4621
    %v4623 = vrot.slane %v4559, %v4622
    %v4624 = vlaneseq
    %v4625 = vshrl.u32 %v4624, 7
    %v4626 = vsub.s32 %v1115, %v4625
    %v4627 = vrot.slane %v4562, %v4626
    %v4628 = vsel %vm1120, %v4627, %v4623
    %v4629 = vlaneseq
    %v4630 = vshrl.u32 %v4629, 7
    %v4631 = vsub.s32 %v1110, %v4630
    %v4632 = vrot.slane %v4565, %v4631
    %v4633 = vlaneseq
    %v4634 = vshrl.u32 %v4633, 7
    %v4635 = vsub.s32 %v1115, %v4634
    %v4636 = vrot.slane %v4568, %v4635
    %v4637 = vsel %vm1120, %v4636, %v4632
    %v4638 = vlaneseq
    %v4639 = vshrl.u32 %v4638, 7
    %v4640 = vsub.s32 %v1110, %v4639
    %v4641 = vrot.slane %v4571, %v4640
    %v4642 = vlaneseq
    %v4643 = vshrl.u32 %v4642, 7
    %v4644 = vsub.s32 %v1115, %v4643
    %v4645 = vrot.slane %v4574, %v4644
    %v4646 = vsel %vm1120, %v4645, %v4641
    %v4647 = vsel %vm590, %v4592, %v4583
    %v4648 = vsel %vm593, %v4601, %v4647
    %v4649 = vsel %vm596, %v4610, %v4648
    %v4650 = vsel %vm599, %v4619, %v4649
    %v4651 = vsel %vm602, %v4628, %v4650
    %v4652 = vsel %vm605, %v4637, %v4651
    %v4653 = vsel %vm608, %v4646, %v4652
    %v4655 = vsel %vm4510, %v4653, %v4078
    %v4656 = vlaneseq
    %v4657 = vshrl.u32 %v4656, 7
    %v4658 = vsub.s32 4, %v4657
    %v4659 = vrot.slane %v23, %v4658
    %v4660 = vadd.f32 %v4655, %v4659
    %vm4661 = vcmask 80896
    %v4662 = vsel %vm4661, %v4660, -inf
    %4663 = vmax.xlane.f32.xlu0 %v4662
    %v4664 = vpop.xlane.xlu0 %4663
    %v4665 = vsub.f32 %v4660, %v4664
    %v4666 = vmul.f32 %v4665, 1.442695
    %v4667 = vpow.pop %v4666
    %v4668 = vsel %vm4661, %v4667, 0.0
    %4669 = vadd.xlane.f32.xlu0 %v4668
    %v4670 = vpop.xlane.xlu0 %4669
    %v4671 = vlog2.pop %v4670
    %v4672 = vmul.f32 %v4671, 0.6931472
    %v4673 = vadd.f32 %v4664, %v4672
    %4674 = vset.pattern.permute.xlu0 28
    %4675 = vperm.xlu0 %4674, %v15
    %v4676 = vpop.permute.xlu0 %4675
    %vm4677 = vcmp.lt.s32.totalorder %v154, %v4676
    %v4678 = vsel %vm4677, 1, 0
    %v4679 = vcvt.s32.f32 %v4678
    %v4680 = vsub.s32 %v15, 1
    %4681 = vset.pattern.permute.xlu0 28
    %4682 = vperm.xlu0 %4681, %v4680
    %v4683 = vpop.permute.xlu0 %4682
    %vm4684 = vcmp.eq.s32.totalorder %v154, %v4683
    %v4685 = vsel %vm4684, 1, 0
    %v4686 = vcvt.s32.f32 %v4685
    %v4687 = vmul.f32 %v513, %v569
    %v4688 = vmul.f32 %v514, %v570
    %v4689 = vmul.f32 %v515, %v571
    %v4690 = vmul.f32 %v516, %v572
    %v4691 = vmul.f32 %v517, %v573
    %v4692 = vmul.f32 %v518, %v574
    %v4693 = vmul.f32 %v519, %v575
    %v4694 = vmul.f32 %v520, %v576
    %v4695 = vsel %vm4661, %v4687, 0.0
    %4696 = vadd.xlane.f32.xlu0 %v4695
    %v4697 = vpop.xlane.xlu0 %4696
    %v4698 = vsel %vm4661, %v4688, 0.0
    %4699 = vadd.xlane.f32.xlu0 %v4698
    %v4700 = vpop.xlane.xlu0 %4699
    %v4701 = vsel %vm4661, %v4689, 0.0
    %4702 = vadd.xlane.f32.xlu0 %v4701
    %v4703 = vpop.xlane.xlu0 %4702
    %v4704 = vsel %vm4661, %v4690, 0.0
    %4705 = vadd.xlane.f32.xlu0 %v4704
    %v4706 = vpop.xlane.xlu0 %4705
    %v4707 = vsel %vm4661, %v4691, 0.0
    %4708 = vadd.xlane.f32.xlu0 %v4707
    %v4709 = vpop.xlane.xlu0 %4708
    %v4710 = vsel %vm4661, %v4692, 0.0
    %4711 = vadd.xlane.f32.xlu0 %v4710
    %v4712 = vpop.xlane.xlu0 %4711
    %v4713 = vsel %vm4661, %v4693, 0.0
    %4714 = vadd.xlane.f32.xlu0 %v4713
    %v4715 = vpop.xlane.xlu0 %4714
    %v4716 = vsel %vm4661, %v4694, 0.0
    %4717 = vadd.xlane.f32.xlu0 %v4716
    %v4718 = vpop.xlane.xlu0 %4717
    %vm4721 = vcmask 1046528
    %v4722 = vrot.slane %v21, 1
    %v4723 = vrot.slane %v22, 1
    %v4724 = vsel %vm4721, %v4722, %v4723
    %v4727 = vsel %vm4661, %v569, 0
    %v4730 = vsel %vm4661, %v570, 0
    %v4733 = vsel %vm4661, %v571, 0
    %v4736 = vsel %vm4661, %v572, 0
    %v4739 = vsel %vm4661, %v573, 0
    %v4742 = vsel %vm4661, %v574, 0
    %v4745 = vsel %vm4661, %v575, 0
    %v4748 = vsel %vm4661, %v576, 0
    %v4750 = vsel %vm400, %v4723, 0
    %4752 = vmatprep.subr.mxu0 0.0
    %4753 = vmatpush1.msra.mxu0 %v4724
    %4754 = vmatprep.subr.mxu0 0.0
    %4755 = vmatpush1.msra.mxu0 %v4750
    %4756 = vmatprep.subr.mxu0 0.0
    %4757 = vmatpush1.msra.mxu0 0.0
    %4758 = vmatprep.subr.mxu0 0.0
    %4759 = vmatpush1.msra.mxu0 0.0
    %4760 = vmatprep.subr.mxu0 0.0
    %4761 = vmatpush1.msra.mxu0 0.0
    %4762 = vmatprep.subr.mxu0 0.0
    %4763 = vmatpush1.msra.mxu0 0.0
    %4764 = vmatprep.subr.mxu0 0.0
    %4765 = vmatpush1.msra.mxu0 0.0
    %4766 = vmatprep.subr.mxu0 0.0
    %4767 = vmatpush1.msra.mxu0 0.0
    %4768 = vmatprep.subr.mxu0 0.0
    %4769 = vmatpush1.msra.mxu0 0.0
    %4770 = vmatprep.subr.mxu0 0.0
    %4771 = vmatpush1.msra.mxu0 0.0
    %4772 = vmatprep.subr.mxu0 0.0
    %4773 = vmatpush1.msra.mxu0 0.0
    %4774 = vmatprep.subr.mxu0 0.0
    %4775 = vmatpush1.msra.mxu0 0.0
    %4776 = vmatprep.subr.mxu0 0.0
    %4777 = vmatpush1.msra.mxu0 0.0
    %4778 = vmatprep.subr.mxu0 0.0
    %4779 = vmatpush1.msra.mxu0 0.0
    %4780 = vmatprep.subr.mxu0 0.0
    %4781 = vmatpush1.msra.mxu0 0.0
    %4782 = vmatprep.subr.mxu0 0.0
    %4783 = vmatpush1.msra.mxu0 0.0
    %4784 = vmatprep.subr.mxu0 0.0
    %4785 = vmatpush1.msra.mxu0 0.0
    %4786 = vmatprep.subr.mxu0 0.0
    %4787 = vmatpush1.msra.mxu0 0.0
    %4788 = vmatprep.subr.mxu0 0.0
    %4789 = vmatpush1.msra.mxu0 0.0
    %4790 = vmatprep.subr.mxu0 0.0
    %4791 = vmatpush1.msra.mxu0 0.0
    %4792 = vmatprep.subr.mxu0 0.0
    %4793 = vmatpush1.msra.mxu0 0.0
    %4794 = vmatprep.subr.mxu0 0.0
    %4795 = vmatpush1.msra.mxu0 0.0
    %4796 = vmatprep.subr.mxu0 0.0
    %4797 = vmatpush1.msra.mxu0 0.0
    %4798 = vmatprep.subr.mxu0 0.0
    %4799 = vmatpush1.msra.mxu0 0.0
    %4800 = vmatprep.subr.mxu0 0.0
    %4801 = vmatpush1.msra.mxu0 0.0
    %4802 = vmatprep.subr.mxu0 0.0
    %4803 = vmatpush1.msra.mxu0 0.0
    %4804 = vmatprep.subr.mxu0 0.0
    %4805 = vmatpush1.msra.mxu0 0.0
    %4806 = vmatprep.subr.mxu0 0.0
    %4807 = vmatpush1.msra.mxu0 0.0
    %4808 = vmatprep.subr.mxu0 0.0
    %4809 = vmatpush1.msra.mxu0 0.0
    %4810 = vmatprep.subr.mxu0 0.0
    %4811 = vmatpush1.msra.mxu0 0.0
    %4812 = vmatprep.subr.mxu0 0.0
    %4813 = vmatpush1.msra.mxu0 0.0
    %4814 = vmatprep.subr.mxu0 0.0
    %4815 = vmatpush1.msra.mxu0 0.0
    %4816 = vmatprep.mubr.f32.mxu0 0.0
    %4817 = vmatmul.mubr.f32.gmra.mrb[0].mxu0 %v4727
    %v4818 = vpop.f32.mrb[0].mxu0
    %v4819 = vadd.f32 0.0, %v4818
    %v4820 = vpop.f32.mrb[0].mxu0
    %4821 = vmatprep.mubr.f32.mxu0 0.0
    %4822 = vmatmul.mubr.f32.gmra.mrb[0].mxu0 %v4730
    %v4823 = vpop.f32.mrb[0].mxu0
    %v4824 = vadd.f32 0.0, %v4823
    %v4825 = vpop.f32.mrb[0].mxu0
    %4826 = vmatprep.mubr.f32.mxu0 0.0
    %4827 = vmatmul.mubr.f32.gmra.mrb[0].mxu0 %v4733
    %v4828 = vpop.f32.mrb[0].mxu0
    %v4829 = vadd.f32 0.0, %v4828
    %v4830 = vpop.f32.mrb[0].mxu0
    %4831 = vmatprep.mubr.f32.mxu0 0.0
    %4832 = vmatmul.mubr.f32.gmra.mrb[0].mxu0 %v4736
    %v4833 = vpop.f32.mrb[0].mxu0
    %v4834 = vadd.f32 0.0, %v4833
    %v4835 = vpop.f32.mrb[0].mxu0
    %4836 = vmatprep.mubr.f32.mxu0 0.0
    %4837 = vmatmul.mubr.f32.gmra.mrb[0].mxu0 %v4739
    %v4838 = vpop.f32.mrb[0].mxu0
    %v4839 = vadd.f32 0.0, %v4838
    %v4840 = vpop.f32.mrb[0].mxu0
    %4841 = vmatprep.mubr.f32.mxu0 0.0
    %4842 = vmatmul.mubr.f32.gmra.mrb[0].mxu0 %v4742
    %v4843 = vpop.f32.mrb[0].mxu0
    %v4844 = vadd.f32 0.0, %v4843
    %v4845 = vpop.f32.mrb[0].mxu0
    %4846 = vmatprep.mubr.f32.mxu0 0.0
    %4847 = vmatmul.mubr.f32.gmra.mrb[0].mxu0 %v4745
    %v4848 = vpop.f32.mrb[0].mxu0
    %v4849 = vadd.f32 0.0, %v4848
    %v4850 = vpop.f32.mrb[0].mxu0
    %4851 = vmatprep.mubr.f32.mxu0 0.0
    %4852 = vmatmul.mubr.f32.gmra.mrb[0].mxu0 %v4748
    %v4853 = vpop.f32.mrb[0].mxu0
    %v4854 = vadd.f32 0.0, %v4853
    %v4855 = vpop.f32.mrb[0].mxu0
    %4856 = vdwg.mxu0
    %v4857 = vrot.slane %v569, 1
    %v4858 = vrot.slane %v570, 1
    %v4859 = vrot.slane %v571, 1
    %v4860 = vrot.slane %v572, 1
    %v4861 = vrot.slane %v573, 1
    %v4862 = vrot.slane %v574, 1
    %v4863 = vrot.slane %v575, 1
    %v4864 = vrot.slane %v576, 1
    %v4873 = vmul.f32 %v4819, %v4857
    %v4874 = vmul.f32 %v4824, %v4858
    %v4875 = vmul.f32 %v4829, %v4859
    %v4876 = vmul.f32 %v4834, %v4860
    %v4877 = vmul.f32 %v4839, %v4861
    %v4878 = vmul.f32 %v4844, %v4862
    %v4879 = vmul.f32 %v4849, %v4863
    %v4880 = vmul.f32 %v4854, %v4864
    %vm4881 = vcmask 79872
    %v4882 = vsel %vm4881, %v4873, 0.0
    %4883 = vadd.xlane.f32.xlu0 %v4882
    %v4884 = vpop.xlane.xlu0 %4883
    %v4885 = vsel %vm4881, %v4874, 0.0
    %4886 = vadd.xlane.f32.xlu0 %v4885
    %v4887 = vpop.xlane.xlu0 %4886
    %v4888 = vsel %vm4881, %v4875, 0.0
    %4889 = vadd.xlane.f32.xlu0 %v4888
    %v4890 = vpop.xlane.xlu0 %4889
    %v4891 = vsel %vm4881, %v4876, 0.0
    %4892 = vadd.xlane.f32.xlu0 %v4891
    %v4893 = vpop.xlane.xlu0 %4892
    %v4894 = vsel %vm4881, %v4877, 0.0
    %4895 = vadd.xlane.f32.xlu0 %v4894
    %v4896 = vpop.xlane.xlu0 %4895
    %v4897 = vsel %vm4881, %v4878, 0.0
    %4898 = vadd.xlane.f32.xlu0 %v4897
    %v4899 = vpop.xlane.xlu0 %4898
    %v4900 = vsel %vm4881, %v4879, 0.0
    %4901 = vadd.xlane.f32.xlu0 %v4900
    %v4902 = vpop.xlane.xlu0 %4901
    %v4903 = vsel %vm4881, %v4880, 0.0
    %4904 = vadd.xlane.f32.xlu0 %v4903
    %v4905 = vpop.xlane.xlu0 %4904
    %v4914 = vrot.slane %v4697, 1
    %v4915 = vrot.slane %v4700, 1
    %v4916 = vrot.slane %v4703, 1
    %v4917 = vrot.slane %v4706, 1
    %v4918 = vrot.slane %v4709, 1
    %v4919 = vrot.slane %v4712, 1
    %v4920 = vrot.slane %v4715, 1
    %v4921 = vrot.slane %v4718, 1
    %v4930 = vadd.f32 %v4884, %v4914
    %v4931 = vadd.f32 %v4887, %v4915
    %v4932 = vadd.f32 %v4890, %v4916
    %v4933 = vadd.f32 %v4893, %v4917
    %v4934 = vadd.f32 %v4896, %v4918
    %v4935 = vadd.f32 %v4899, %v4919
    %v4936 = vadd.f32 %v4902, %v4920
    %v4937 = vadd.f32 %v4905, %v4921
    %4946 = vset.pattern.permute.xlu0 0
    %4947 = vperm.xlu0 %4946, %v4930
    %v4948 = vpop.permute.xlu0 %4947
    %4949 = vset.pattern.permute.xlu0 0
    %4950 = vperm.xlu0 %4949, %v4931
    %v4951 = vpop.permute.xlu0 %4950
    %4952 = vset.pattern.permute.xlu0 0
    %4953 = vperm.xlu0 %4952, %v4932
    %v4954 = vpop.permute.xlu0 %4953
    %4955 = vset.pattern.permute.xlu0 0
    %4956 = vperm.xlu0 %4955, %v4933
    %v4957 = vpop.permute.xlu0 %4956
    %4958 = vset.pattern.permute.xlu0 0
    %4959 = vperm.xlu0 %4958, %v4934
    %v4960 = vpop.permute.xlu0 %4959
    %4961 = vset.pattern.permute.xlu0 0
    %4962 = vperm.xlu0 %4961, %v4935
    %v4963 = vpop.permute.xlu0 %4962
    %4964 = vset.pattern.permute.xlu0 0
    %4965 = vperm.xlu0 %4964, %v4936
    %v4966 = vpop.permute.xlu0 %4965
    %4967 = vset.pattern.permute.xlu0 0
    %4968 = vperm.xlu0 %4967, %v4937
    %v4969 = vpop.permute.xlu0 %4968
    %v4970 = vadd.s32 %v154, 4294967295
    %v4971 = vlaneseq
    %v4972 = vshrl.u32 %v4971, 7
    %v4973 = vsub.s32 %v4970, %v4972
    %v4974 = vrot.slane %v4948, %v4973
    %v4975 = vlaneseq
    %v4976 = vshrl.u32 %v4975, 7
    %v4977 = vsub.s32 %v4970, %v4976
    %v4978 = vrot.slane %v4951, %v4977
    %v4979 = vlaneseq
    %v4980 = vshrl.u32 %v4979, 7
    %v4981 = vsub.s32 %v4970, %v4980
    %v4982 = vrot.slane %v4954, %v4981
    %v4983 = vlaneseq
    %v4984 = vshrl.u32 %v4983, 7
    %v4985 = vsub.s32 %v4970, %v4984
    %v4986 = vrot.slane %v4957, %v4985
    %v4987 = vlaneseq
    %v4988 = vshrl.u32 %v4987, 7
    %v4989 = vsub.s32 %v4970, %v4988
    %v4990 = vrot.slane %v4960, %v4989
    %v4991 = vlaneseq
    %v4992 = vshrl.u32 %v4991, 7
    %v4993 = vsub.s32 %v4970, %v4992
    %v4994 = vrot.slane %v4963, %v4993
    %v4995 = vlaneseq
    %v4996 = vshrl.u32 %v4995, 7
    %v4997 = vsub.s32 %v4970, %v4996
    %v4998 = vrot.slane %v4966, %v4997
    %v4999 = vlaneseq
    %v5000 = vshrl.u32 %v4999, 7
    %v5001 = vsub.s32 %v4970, %v5000
    %v5002 = vrot.slane %v4969, %v5001
    %v5003 = vsel %vm590, %v4978, %v4974
    %v5004 = vsel %vm593, %v4982, %v5003
    %v5005 = vsel %vm596, %v4986, %v5004
    %v5006 = vsel %vm599, %v4990, %v5005
    %v5007 = vsel %vm602, %v4994, %v5006
    %v5008 = vsel %vm605, %v4998, %v5007
    %v5009 = vsel %vm608, %v5002, %v5008
    %v5011 = vmul.f32 %v4679, %v5009
    %5013 = vrot.lane.b32.xlu0 %v5011, 127
    %v5014 = vpop.permute.xlu0 %5013
    %vm5016 = vcmask 56320
    %v5017 = vsel %vm5016, %v5014, 0.0
    %5018 = vadd.xlane.f32.xlu0 %v5017
    %v5019 = vpop.xlane.xlu0 %5018
    %v5020 = vrot.slane %v611, 1
    %v5021 = vrot.slane %v611, 2
    %v5022 = vrot.slane %v611, 3
    %v5023 = vrot.slane %v611, 4
    %v5024 = vrot.slane %v611, 5
    %v5025 = vrot.slane %v611, 6
    %v5026 = vrot.slane %v611, 7
    %v5035 = vmul.f32 %v569, %v611
    %v5036 = vmul.f32 %v570, %v5020
    %v5037 = vmul.f32 %v571, %v5021
    %v5038 = vmul.f32 %v572, %v5022
    %v5039 = vmul.f32 %v573, %v5023
    %v5040 = vmul.f32 %v574, %v5024
    %v5041 = vmul.f32 %v575, %v5025
    %v5042 = vmul.f32 %v576, %v5026
    %v5051 = vrot.slane %v5036, 7
    %v5052 = vsel %vm590, %v5051, %v5035
    %v5053 = vrot.slane %v5037, 6
    %v5054 = vsel %vm593, %v5053, %v5052
    %v5055 = vrot.slane %v5038, 5
    %v5056 = vsel %vm596, %v5055, %v5054
    %v5057 = vrot.slane %v5039, 4
    %v5058 = vsel %vm599, %v5057, %v5056
    %v5059 = vrot.slane %v5040, 3
    %v5060 = vsel %vm602, %v5059, %v5058
    %v5061 = vrot.slane %v5041, 2
    %v5062 = vsel %vm605, %v5061, %v5060
    %v5063 = vrot.slane %v5042, 1
    %v5064 = vsel %vm608, %v5063, %v5062
    %v5066 = vsel %vm4661, %v5064, 0.0
    %5067 = vadd.xlane.f32.xlu0 %v5066
    %v5068 = vpop.xlane.xlu0 %5067
    %v5069 = vmul.f32 %v569, %v4659
    %v5070 = vmul.f32 %v570, %v4659
    %v5071 = vmul.f32 %v571, %v4659
    %v5072 = vmul.f32 %v572, %v4659
    %v5073 = vmul.f32 %v573, %v4659
    %v5074 = vmul.f32 %v574, %v4659
    %v5075 = vmul.f32 %v575, %v4659
    %v5076 = vmul.f32 %v576, %v4659
    %v5077 = vsel %vm4661, %v5069, 0.0
    %5078 = vadd.xlane.f32.xlu0 %v5077
    %v5079 = vpop.xlane.xlu0 %5078
    %v5080 = vsel %vm4661, %v5070, 0.0
    %5081 = vadd.xlane.f32.xlu0 %v5080
    %v5082 = vpop.xlane.xlu0 %5081
    %v5083 = vsel %vm4661, %v5071, 0.0
    %5084 = vadd.xlane.f32.xlu0 %v5083
    %v5085 = vpop.xlane.xlu0 %5084
    %v5086 = vsel %vm4661, %v5072, 0.0
    %5087 = vadd.xlane.f32.xlu0 %v5086
    %v5088 = vpop.xlane.xlu0 %5087
    %v5089 = vsel %vm4661, %v5073, 0.0
    %5090 = vadd.xlane.f32.xlu0 %v5089
    %v5091 = vpop.xlane.xlu0 %5090
    %v5092 = vsel %vm4661, %v5074, 0.0
    %5093 = vadd.xlane.f32.xlu0 %v5092
    %v5094 = vpop.xlane.xlu0 %5093
    %v5095 = vsel %vm4661, %v5075, 0.0
    %5096 = vadd.xlane.f32.xlu0 %v5095
    %v5097 = vpop.xlane.xlu0 %5096
    %v5098 = vsel %vm4661, %v5076, 0.0
    %5099 = vadd.xlane.f32.xlu0 %v5098
    %v5100 = vpop.xlane.xlu0 %5099
    %v5102 = vlaneseq
    %v5103 = vshrl.u32 %v5102, 7
    %v5104 = vsub.s32 0, %v5103
    %v5105 = vrot.slane %v4686, %v5104
    %5107 = vbcast.lane.b32.xlu0 %v5105, 256
    %v5108 = vpop.permute.xlu0 %5107
    %v5109 = vlaneseq
    %v5110 = vshrl.u32 %v5109, 7
    %v5111 = vsub.s32 1, %v5110
    %v5112 = vrot.slane %v4686, %v5111
    %5114 = vbcast.lane.b32.xlu0 %v5112, 256
    %v5115 = vpop.permute.xlu0 %5114
    %v5116 = vlaneseq
    %v5117 = vshrl.u32 %v5116, 7
    %v5118 = vsub.s32 2, %v5117
    %v5119 = vrot.slane %v4686, %v5118
    %5121 = vbcast.lane.b32.xlu0 %v5119, 256
    %v5122 = vpop.permute.xlu0 %5121
    %v5123 = vlaneseq
    %v5124 = vshrl.u32 %v5123, 7
    %v5125 = vsub.s32 3, %v5124
    %v5126 = vrot.slane %v4686, %v5125
    %5128 = vbcast.lane.b32.xlu0 %v5126, 256
    %v5129 = vpop.permute.xlu0 %5128
    %v5130 = vlaneseq
    %v5131 = vshrl.u32 %v5130, 7
    %v5132 = vsub.s32 4, %v5131
    %v5133 = vrot.slane %v4686, %v5132
    %5135 = vbcast.lane.b32.xlu0 %v5133, 256
    %v5136 = vpop.permute.xlu0 %5135
    %v5137 = vlaneseq
    %v5138 = vshrl.u32 %v5137, 7
    %v5139 = vsub.s32 5, %v5138
    %v5140 = vrot.slane %v4686, %v5139
    %5142 = vbcast.lane.b32.xlu0 %v5140, 256
    %v5143 = vpop.permute.xlu0 %5142
    %v5144 = vlaneseq
    %v5145 = vshrl.u32 %v5144, 7
    %v5146 = vsub.s32 6, %v5145
    %v5147 = vrot.slane %v4686, %v5146
    %5149 = vbcast.lane.b32.xlu0 %v5147, 256
    %v5150 = vpop.permute.xlu0 %5149
    %v5151 = vlaneseq
    %v5152 = vshrl.u32 %v5151, 7
    %v5153 = vsub.s32 7, %v5152
    %v5154 = vrot.slane %v4686, %v5153
    %5156 = vbcast.lane.b32.xlu0 %v5154, 256
    %v5157 = vpop.permute.xlu0 %5156
    %v5166 = vmul.f32 %v5079, %v5108
    %v5167 = vmul.f32 %v5082, %v5115
    %v5168 = vmul.f32 %v5085, %v5122
    %v5169 = vmul.f32 %v5088, %v5129
    %v5170 = vmul.f32 %v5091, %v5136
    %v5171 = vmul.f32 %v5094, %v5143
    %v5172 = vmul.f32 %v5097, %v5150
    %v5173 = vmul.f32 %v5100, %v5157
    %5182 = vset.pattern.permute.xlu0 0
    %5183 = vperm.xlu0 %5182, %v5166
    %v5184 = vpop.permute.xlu0 %5183
    %5185 = vset.pattern.permute.xlu0 0
    %5186 = vperm.xlu0 %5185, %v5167
    %v5187 = vpop.permute.xlu0 %5186
    %5188 = vset.pattern.permute.xlu0 0
    %5189 = vperm.xlu0 %5188, %v5168
    %v5190 = vpop.permute.xlu0 %5189
    %5191 = vset.pattern.permute.xlu0 0
    %5192 = vperm.xlu0 %5191, %v5169
    %v5193 = vpop.permute.xlu0 %5192
    %5194 = vset.pattern.permute.xlu0 0
    %5195 = vperm.xlu0 %5194, %v5170
    %v5196 = vpop.permute.xlu0 %5195
    %5197 = vset.pattern.permute.xlu0 0
    %5198 = vperm.xlu0 %5197, %v5171
    %v5199 = vpop.permute.xlu0 %5198
    %5200 = vset.pattern.permute.xlu0 0
    %5201 = vperm.xlu0 %5200, %v5172
    %v5202 = vpop.permute.xlu0 %5201
    %5203 = vset.pattern.permute.xlu0 0
    %5204 = vperm.xlu0 %5203, %v5173
    %v5205 = vpop.permute.xlu0 %5204
    %v5206 = vlaneseq
    %v5207 = vshrl.u32 %v5206, 7
    %v5208 = vsub.s32 %v154, %v5207
    %v5209 = vrot.slane %v5184, %v5208
    %v5210 = vlaneseq
    %v5211 = vshrl.u32 %v5210, 7
    %v5212 = vsub.s32 %v154, %v5211
    %v5213 = vrot.slane %v5187, %v5212
    %v5214 = vlaneseq
    %v5215 = vshrl.u32 %v5214, 7
    %v5216 = vsub.s32 %v154, %v5215
    %v5217 = vrot.slane %v5190, %v5216
    %v5218 = vlaneseq
    %v5219 = vshrl.u32 %v5218, 7
    %v5220 = vsub.s32 %v154, %v5219
    %v5221 = vrot.slane %v5193, %v5220
    %v5222 = vlaneseq
    %v5223 = vshrl.u32 %v5222, 7
    %v5224 = vsub.s32 %v154, %v5223
    %v5225 = vrot.slane %v5196, %v5224
    %v5226 = vlaneseq
    %v5227 = vshrl.u32 %v5226, 7
    %v5228 = vsub.s32 %v154, %v5227
    %v5229 = vrot.slane %v5199, %v5228
    %v5230 = vlaneseq
    %v5231 = vshrl.u32 %v5230, 7
    %v5232 = vsub.s32 %v154, %v5231
    %v5233 = vrot.slane %v5202, %v5232
    %v5234 = vlaneseq
    %v5235 = vshrl.u32 %v5234, 7
    %v5236 = vsub.s32 %v154, %v5235
    %v5237 = vrot.slane %v5205, %v5236
    %v5238 = vsel %vm590, %v5213, %v5209
    %v5239 = vsel %vm593, %v5217, %v5238
    %v5240 = vsel %vm596, %v5221, %v5239
    %v5241 = vsel %vm599, %v5225, %v5240
    %v5242 = vsel %vm602, %v5229, %v5241
    %v5243 = vsel %vm605, %v5233, %v5242
    %v5244 = vsel %vm608, %v5237, %v5243
    %vm5246 = vcmask 64512
    %v5247 = vsel %vm5246, %v5244, 0.0
    %5248 = vadd.xlane.f32.xlu0 %v5247
    %v5249 = vpop.xlane.xlu0 %5248
    %v5250 = vadd.f32 %v5068, %v5019
    %v5251 = vadd.f32 %v5250, %v5249
    %v5252 = vsub.f32 %v4673, %v5251
    %v5253 = vmul.f32 %v5252, %v16
    %vm5254 = vcmask 244968
    %v5255 = vsel %vm5254, %v5253, 0.0
    %v5256 = vrot.slane %v5255, 4
    %v5257 = vadd.f32 %v5255, %v5256
    %v5258 = vrot.slane %v5257, 2
    %v5259 = vadd.f32 %v5257, %v5258
    %v5260 = vrot.slane %v5259, 1
    %v5261 = vadd.f32 %v5259, %v5260
    %5263 = vrot.lane.b32.xlu0 %v5261, 99
    %v5264 = vpop.permute.xlu0 %5263
    %vm5266 = vcmask 0
    %5267 = vst.msk [vmem:[#allocation2] sm:$0x1] %vm5266, %v5264
    // Predicated region
    $region14: #{transformers_crf_forward.1} parent=1 // pred_check
      _
    $region15: #{transformers_crf_forward.1} parent=1 // pred_check_branch
      %5269 = sbr.rel (0) target = $region17
    $region16: #{transformers_crf_forward.1} parent=1 // pred_region
      %s5271 = ssub.s32 16, 16
      %5272 = vsyncadd [#allocation3], %s5271
      %s5274 = sshll.u32 [#allocation2], 4
      %s5275 = int_to_ptr.vmem [resolvable:$true] %s5274
      %5277 = dma.vmem_to_hbm [thread:$0]  %s5275, 16, %s3, [#allocation3]
    $region17: #{transformers_crf_forward.1} parent=1 // pred_fallthru
      _
    // Predicated region
    $region18: #{transformers_crf_forward.1} parent=1 // pred_check
      _
    $region19: #{transformers_crf_forward.1} parent=1 // pred_check_branch
      %5279 = sbr.rel (0) target = $region21
    $region20: #{transformers_crf_forward.1} parent=1 // pred_region
      %5280 = dma.done [#allocation3], 16
    $region21: #{transformers_crf_forward.1} parent=1 // pred_fallthru
      _
    %5281 = vsyncpa [#allocation3], 1

</llo_original>
